<compile_context>
chip_gen: v7x
topology: tpu7x:2x2x1
jax: 0.10.0
libtpu: 0.0.40
codegen_flags: <defaults>
</compile_context>

<pallas_src>
import functools

import jax
import jax.numpy as jnp
from jax import lax
from jax.experimental import pallas as pl
from jax.experimental.pallas import tpu as pltpu

LANE = 128


def ddr_kernel(K, P, DIL, TD, D_true,
               x_hbm, w_in_ref, w_w_ref, b_w_ref, w_h_ref, b_h_ref,
               w_d_ref, b_d_ref, w_out_ref, o_ref, x_blk, dma_sem):
    n = pl.program_id(0)
    j = pl.program_id(1)
    TDH, H, W, _ = x_blk.shape          # TDH = TD + 2P
    CP = w_in_ref.shape[1]

    # ---- manual DMA of the haloed input window ------------------------------
    # x_hbm is the D-padded input (N, D + 2P, H, W, Cin); window j covers padded
    # rows [j*TD, j*TD + TD + 2P)  ==  true rows [j*TD - P, j*TD + TD + P).
    d0 = pl.multiple_of(j * TD, TD)
    cpy = pltpu.make_async_copy(
        x_hbm.at[n, pl.ds(d0, TDH), :, :, :], x_blk, dma_sem)
    cpy.start()
    cpy.wait()

    x = x_blk[...]                                      # (TDH, H, W, CIP) f32

    def mm(a, w2):
        """(..., Ci) x (Ci, Co) flattened bf16 MXU matmul with f32 accumulation."""
        sh = a.shape
        out = jnp.dot(a.reshape(-1, sh[-1]), w2,
                      preferred_element_type=jnp.float32)
        return out.reshape(sh[:-1] + (w2.shape[-1],))

    def tap_cat(a, axis, length):
        """Concatenate the K tap views of `a` along the channel (lane) axis.

        `a` is already zero-padded by P on both sides of `axis` (or carries the
        2P halo rows for axis 0); the t-th view starts at element t*DIL."""
        parts = []
        for t in range(K):
            idx = [slice(None)] * a.ndim
            idx[axis] = slice(t * DIL, t * DIL + length)
            parts.append(a[tuple(idx)])
        return jnp.concatenate(parts, axis=-1)          # (..., K*CP)

    # ---- conv_in (1x1x1, no bias) + relu ------------------------------------
    y0 = jnp.maximum(mm(x.astype(jnp.bfloat16), w_in_ref[...]), 0.0
                     ).astype(jnp.bfloat16)             # (TDH, H, W, CP)

    # ---- conv1x1x3 along W: fused K-tap (K*CP-deep) contraction + bias + relu
    zw = jnp.zeros((TDH, H, P, CP), jnp.bfloat16)
    y0p = jnp.concatenate([zw, y0, zw], axis=2)         # (TDH, H, W+2P, CP)
    y1 = jnp.maximum(mm(tap_cat(y0p, 2, W), w_w_ref[...]) + b_w_ref[...], 0.0
                     ).astype(jnp.bfloat16)             # (TDH, H, W, CP)

    # ---- conv1x3x1 along H: fused taps + bias + y1 residual + relu ----------
    zh = jnp.zeros((TDH, P, W, CP), jnp.bfloat16)
    y1p = jnp.concatenate([zh, y1, zh], axis=1)         # (TDH, H+2P, W, CP)
    y2 = jnp.maximum(mm(tap_cat(y1p, 1, H), w_h_ref[...]) + b_h_ref[...]
                     + y1.astype(jnp.float32), 0.0
                     ).astype(jnp.bfloat16)             # (TDH, H, W, CP)

    # Halo rows outside the true volume must act like the D-conv's zero padding
    # of y2 (our recomputed halo rows are nonzero because of the conv biases).
    di = lax.broadcasted_iota(jnp.int32, (TDH, 1, 1, 1), 0)
    g = di + (j * TD - P)                               # global (unpadded) D index
    y2 = jnp.where((g >= 0) & (g < D_true), y2, jnp.zeros_like(y2))

    # ---- conv3x1x1 along D: fused taps over the halo rows (output rows only) -
    y1c = y1[P:P + TD].astype(jnp.float32)
    y2c = y2[P:P + TD].astype(jnp.float32)
    y3 = jnp.maximum(mm(tap_cat(y2, 0, TD), w_d_ref[...]) + b_d_ref[...]
                     + y2c + y1c, 0.0).astype(jnp.bfloat16)   # (TD, H, W, CP)

    # ---- conv_out (1x1x1, no bias) + residual (exact f32 x) + relu ----------
    o_ref[0] = jnp.maximum(mm(y3, w_out_ref[...]) + x[P:P + TD], 0.0)


def _pad_to(a, shape):
    pads = [(0, t - s) for s, t in zip(a.shape, shape)]
    return a if all(p == (0, 0) for p in pads) else jnp.pad(a, pads)


def _round_up(v, m):
    return ((v + m - 1) // m) * m


def _tile_vmem_bytes(TD, P, H, W, cip, cp_, cop):
    """Rough per-grid-step activation working set in bytes (with slack)."""
    TDH = TD + 2 * P
    row = H * W
    b = 0
    b += TDH * row * cip * 4              # x window scratch (f32)
    b += 4 * TDH * row * cp_ * 2          # y0/y1/y2 + one padded staging (bf16)
    b += TDH * row * 3 * cp_ * 2          # K-tap channel-concat staging (bf16)
    b += TDH * row * cp_ * 4              # one f32 stage temporary
    b += TD * row * 3 * cp_ * 2           # D-conv concat (bf16)
    b += 3 * TD * row * cop * 4           # output block (double-buffered) + f32 temp
    return b


def bottleneck_ddr3d_pallas(x_ndhwc, w_in, w_w, b_w, w_h, b_h, w_d, b_d, w_out,
                            kernel=3, dilation=1, d_tile=None):
    """x_ndhwc: (N,D,H,W,c_in) f32; w_in:(c_in,c); w_*:(K,c,c); b_*:(1,c); w_out:(c,c_out)."""
    N, D, H, W, c_in = x_ndhwc.shape
    c = w_in.shape[1]
    c_out = w_out.shape[1]
    K = kernel
    P = (K // 2) * dilation
    if c_in != c_out:
        raise ValueError("residual path requires c_in == c_out")

    cip, cp_, cop = _round_up(c_in, LANE), _round_up(c, LANE), _round_up(c_out, LANE)

    # Physical VMEM capacity of the current generation (fallback: v7x 64 MiB).
    try:
        cap = int(getattr(pltpu.get_tpu_info(), "vmem_capacity_bytes", 64 << 20))
    except Exception:
        cap = 64 << 20

    # Weights/biases (bf16 weights, f32 biases), x2 for pipeline buffers.
    wbytes = 2 * (2 * (cip * cp_ + 3 * K * cp_ * cp_ + cp_ * cop) + 3 * 4 * cp_)

    # D tile: largest divisor of D whose working set fits ~45% of physical VMEM.
    if d_tile is None:
        budget = int(0.45 * cap) - wbytes
        d_tile = 1
        for t in sorted([t for t in range(1, D + 1) if D % t == 0], reverse=True):
            if _tile_vmem_bytes(t, P, H, W, cip, cp_, cop) <= budget:
                d_tile = t
                break
    if D % d_tile != 0:
        raise ValueError("d_tile must divide D")
    TD = d_tile
    nD = D // TD

    est = _tile_vmem_bytes(TD, P, H, W, cip, cp_, cop) + wbytes
    vmem_limit = int(min(max(2 * est, 32 << 20), int(0.9 * cap)))

    # ---- operand packing ----------------------------------------------------
    # x: zero-pad channels to the lane width and D by the conv halo; keep f32.
    xp = jnp.pad(x_ndhwc.astype(jnp.float32),
                 [(0, 0), (P, P), (0, 0), (0, 0), (0, cip - c_in)])

    # Weights: zero-pad channels, cast to bf16, fuse the K taps along the
    # contraction axis -> (K*cp, cp) so each separable conv is ONE deep matmul.
    def fuse(wk):                                       # (K, c, c) -> (K*cp, cp) bf16
        return _pad_to(wk, (K, cp_, cp_)).astype(jnp.bfloat16).reshape(K * cp_, cp_)

    w_in_p = _pad_to(w_in, (cip, cp_)).astype(jnp.bfloat16)
    w_out_p = _pad_to(w_out, (cp_, cop)).astype(jnp.bfloat16)
    w_w_f, w_h_f, w_d_f = fuse(w_w), fuse(w_h), fuse(w_d)
    b_w_p = _pad_to(b_w, (1, cp_)).astype(jnp.float32)
    b_h_p = _pad_to(b_h, (1, cp_)).astype(jnp.float32)
    b_d_p = _pad_to(b_d, (1, cp_)).astype(jnp.float32)

    kfn = functools.partial(ddr_kernel, K, P, dilation, TD, D)

    def full(shape):
        return pl.BlockSpec(shape, lambda n, j, _nd=len(shape): (0,) * _nd)

    out_p = pl.pallas_call(
        kfn,
        out_shape=jax.ShapeDtypeStruct((N, D, H, W, cop), jnp.float32),
        grid=(N, nD),
        in_specs=[
            pl.BlockSpec(memory_space=pl.ANY),          # x: haloed window via manual DMA
            full(w_in_p.shape), full(w_w_f.shape), full(b_w_p.shape),
            full(w_h_f.shape), full(b_h_p.shape),
            full(w_d_f.shape), full(b_d_p.shape),
            full(w_out_p.shape),
        ],
        out_specs=pl.BlockSpec((1, TD, H, W, cop), lambda n, j: (n, j, 0, 0, 0)),
        scratch_shapes=[pltpu.VMEM((TD + 2 * P, H, W, cip), jnp.float32),
                        pltpu.SemaphoreType.DMA],
        compiler_params=pltpu.CompilerParams(
            dimension_semantics=("parallel", "parallel"),
            vmem_limit_bytes=vmem_limit),
    )(xp, w_in_p, w_w_f, b_w_p, w_h_f, b_h_p, w_d_f, b_d_p, w_out_p)

    return out_p[..., :c_out]


# ---------------- reference (plain JAX, PyTorch NCDHW semantics) -------------
def _conv3d(inp, w, pad):
    return jax.lax.conv_general_dilated(
        inp, w, window_strides=(1, 1, 1), padding=pad,
        dimension_numbers=("NCDHW", "OIDHW", "NCDHW"))


def ref_forward(x, w_in_t, w_w_t, b_w, w_h_t, b_h, w_d_t, b_d, w_out_t, p=1):
    nb = lambda b: b[None, :, None, None, None]
    y0 = jax.nn.relu(_conv3d(x, w_in_t, [(0, 0)] * 3))
    y1 = jax.nn.relu(_conv3d(y0, w_w_t, [(0, 0), (0, 0), (p, p)]) + nb(b_w))
    y2 = jax.nn.relu(_conv3d(y1, w_h_t, [(0, 0), (p, p), (0, 0)]) + nb(b_h) + y1)
    y3 = jax.nn.relu(_conv3d(y2, w_d_t, [(p, p), (0, 0), (0, 0)]) + nb(b_d) + y2 + y1)
    y = _conv3d(y3, w_out_t, [(0, 0)] * 3)
    return jax.nn.relu(y + x)   # residual=True


if __name__ == "__main__":
    N, c_in, c, c_out = 2, 16, 8, 16   # residual requires c_out == c_in
    D = H = W = 8
    K, DIL = 3, 1
    scale = 0.1

    keys = jax.random.split(jax.random.PRNGKey(0), 9)
    # PyTorch-layout (OIDHW) weights, deterministically initialized.
    w_in_t = jax.random.normal(keys[0], (c, c_in, 1, 1, 1), jnp.float32) * scale
    w_w_t = jax.random.normal(keys[1], (c, c, 1, 1, K), jnp.float32) * scale
    b_w = jax.random.normal(keys[2], (c,), jnp.float32) * scale
    w_h_t = jax.random.normal(keys[3], (c, c, 1, K, 1), jnp.float32) * scale
    b_h = jax.random.normal(keys[4], (c,), jnp.float32) * scale
    w_d_t = jax.random.normal(keys[5], (c, c, K, 1, 1), jnp.float32) * scale
    b_d = jax.random.normal(keys[6], (c,), jnp.float32) * scale
    w_out_t = jax.random.normal(keys[7], (c_out, c, 1, 1, 1), jnp.float32) * scale
    x = jax.random.normal(keys[8], (N, c_in, D, H, W), jnp.float32)

    # Repack weights for the channels-last kernel: w[t, in, out] = torch_w[out, in, ..., t]
    w_in_m = jnp.transpose(w_in_t[:, :, 0, 0, 0])                 # (c_in, c)
    w_w_m = jnp.transpose(w_w_t[:, :, 0, 0, :], (2, 1, 0))        # (K, c, c)
    w_h_m = jnp.transpose(w_h_t[:, :, 0, :, 0], (2, 1, 0))        # (K, c, c)
    w_d_m = jnp.transpose(w_d_t[:, :, :, 0, 0], (2, 1, 0))        # (K, c, c)
    w_out_m = jnp.transpose(w_out_t[:, :, 0, 0, 0])               # (c, c_out)
    b_w_m, b_h_m, b_d_m = b_w.reshape(1, c), b_h.reshape(1, c), b_d.reshape(1, c)

    # Pallas kernel (channels-last; d_tile=4 exercises halo recompute + 2x2 grid).
    x_ndhwc = jnp.transpose(x, (0, 2, 3, 4, 1))
    out_ndhwc = bottleneck_ddr3d_pallas(
        x_ndhwc, w_in_m, w_w_m, b_w_m, w_h_m, b_h_m, w_d_m, b_d_m, w_out_m,
        kernel=K, dilation=DIL, d_tile=4)
    out = jnp.transpose(out_ndhwc, (0, 4, 1, 2, 3))               # back to NCDHW
    jax.block_until_ready(out)

    # Reference (NCDHW, exact PyTorch forward semantics, f32).
    ref = ref_forward(x, w_in_t, w_w_t, b_w, w_h_t, b_h, w_d_t, b_d, w_out_t,
                      p=(K // 2) * DIL)
    jax.block_until_ready(ref)

    assert out.shape == (N, c_out, D, H, W)
    max_err = float(jnp.max(jnp.abs(out - ref)))
    assert max_err < 2e-2, f"max abs err {max_err}"   # bf16 matmuls, f32 accumulation
    print("KERNEL_OK")
</pallas_src>

<mosaic_0001>
module attributes {stable_mosaic.version = 11 : i64} {
  func.func @ddr_kernel(%arg0: i32, %arg1: i32, %arg2: memref<2x10x8x8x128xf32, #tpu.memory_space<any>>, %arg3: memref<128x128xbf16, #tpu.memory_space<vmem>>, %arg4: memref<384x128xbf16, #tpu.memory_space<vmem>>, %arg5: memref<1x128xf32, #tpu.memory_space<vmem>>, %arg6: memref<384x128xbf16, #tpu.memory_space<vmem>>, %arg7: memref<1x128xf32, #tpu.memory_space<vmem>>, %arg8: memref<384x128xbf16, #tpu.memory_space<vmem>>, %arg9: memref<1x128xf32, #tpu.memory_space<vmem>>, %arg10: memref<128x128xbf16, #tpu.memory_space<vmem>>, %arg11: memref<1x4x8x8x128xf32, #tpu.memory_space<vmem>>, %arg12: memref<6x8x8x128xf32, #tpu.memory_space<vmem>>, %arg13: memref<!tpu.dma_semaphore, #tpu.memory_space<semaphore_mem>>) attributes {dimension_semantics = [#tpu.dimension_semantics<parallel>, #tpu.dimension_semantics<parallel>], iteration_bounds = array<i64: 2, 2>, scalar_prefetch = 0 : i64, scratch_operands = 2 : i64, tpu.core_type = #tpu.core_type<tc>, window_params = [{}, {pipeline_mode = #tpu.pipeline_mode<synchronous>, transform_indices = @transform_1, window_bounds = array<i64: 128, 128>}, {pipeline_mode = #tpu.pipeline_mode<synchronous>, transform_indices = @transform_2, window_bounds = array<i64: 384, 128>}, {pipeline_mode = #tpu.pipeline_mode<synchronous>, transform_indices = @transform_3, window_bounds = array<i64: 1, 128>}, {pipeline_mode = #tpu.pipeline_mode<synchronous>, transform_indices = @transform_4, window_bounds = array<i64: 384, 128>}, {pipeline_mode = #tpu.pipeline_mode<synchronous>, transform_indices = @transform_5, window_bounds = array<i64: 1, 128>}, {pipeline_mode = #tpu.pipeline_mode<synchronous>, transform_indices = @transform_6, window_bounds = array<i64: 384, 128>}, {pipeline_mode = #tpu.pipeline_mode<synchronous>, transform_indices = @transform_7, window_bounds = array<i64: 1, 128>}, {pipeline_mode = #tpu.pipeline_mode<synchronous>, transform_indices = @transform_8, window_bounds = array<i64: 128, 128>}, {transform_indices = @transform_9, window_bounds = array<i64: 1, 4, 8, 8, 128>}]} {
    %c4_i32 = arith.constant 4 : i32
    %0 = arith.muli %arg1, %c4_i32 : i32
    %1 = tpu.assume_multiple %0, 4 : i32
    %c0_i32 = arith.constant 0 : i32
    %c0_i32_0 = arith.constant 0 : i32
    %c0_i32_1 = arith.constant 0 : i32
    %2 = tpu.memref_slice %arg2[%arg0, %1, %c0_i32, %c0_i32_0, %c0_i32_1] : memref<2x10x8x8x128xf32, #tpu.memory_space<any>> -> memref<1x6x8x8x128xf32, #tpu.memory_space<any>>
    %3 = tpu.memref_squeeze %2 : memref<1x6x8x8x128xf32, #tpu.memory_space<any>> -> memref<6x8x8x128xf32, #tpu.memory_space<any>>
    tpu.enqueue_dma source(%3 : memref<6x8x8x128xf32, #tpu.memory_space<any>>) target(%arg12 : memref<6x8x8x128xf32, #tpu.memory_space<vmem>>) target_semaphore(%arg13 : memref<!tpu.dma_semaphore, #tpu.memory_space<semaphore_mem>>)
    %c0_i32_2 = arith.constant 0 : i32
    %c0_i32_3 = arith.constant 0 : i32
    %c0_i32_4 = arith.constant 0 : i32
    %4 = tpu.memref_slice %arg2[%arg0, %1, %c0_i32_2, %c0_i32_3, %c0_i32_4] : memref<2x10x8x8x128xf32, #tpu.memory_space<any>> -> memref<1x6x8x8x128xf32, #tpu.memory_space<any>>
    %5 = tpu.memref_squeeze %4 : memref<1x6x8x8x128xf32, #tpu.memory_space<any>> -> memref<6x8x8x128xf32, #tpu.memory_space<any>>
    tpu.wait_dma2 semaphore(%arg13 : memref<!tpu.dma_semaphore, #tpu.memory_space<semaphore_mem>>) src(%5 : memref<6x8x8x128xf32, #tpu.memory_space<any>>) dst(%arg12 : memref<6x8x8x128xf32, #tpu.memory_space<vmem>>)
    %c0 = arith.constant 0 : index
    %c0_5 = arith.constant 0 : index
    %c0_6 = arith.constant 0 : index
    %c0_7 = arith.constant 0 : index
    %6 = vector.load %arg12[%c0, %c0_5, %c0_6, %c0_7] : memref<6x8x8x128xf32, #tpu.memory_space<vmem>>, vector<6x8x8x128xf32>
    %7 = arith.truncf %6 : vector<6x8x8x128xf32> to vector<6x8x8x128xbf16>
    %c0_8 = arith.constant 0 : index
    %c0_9 = arith.constant 0 : index
    %8 = vector.load %arg3[%c0_8, %c0_9] : memref<128x128xbf16, #tpu.memory_space<vmem>>, vector<128x128xbf16>
    %9 = vector.shape_cast %7 : vector<6x8x8x128xbf16> to vector<384x128xbf16>
    %cst = arith.constant dense<0.000000e+00> : vector<384x128xf32>
    %10 = tpu.matmul %9, %8, %cst {dimension_numbers = #tpu.dot_dimension_numbers<[1], [0], [0], [1], [0, 0, 1, 1], [], []>} : vector<384x128xbf16>, vector<128x128xbf16>, vector<384x128xf32> -> vector<384x128xf32>
    %11 = vector.shape_cast %10 : vector<384x128xf32> to vector<6x8x8x128xf32>
    %cst_10 = arith.constant 0.000000e+00 : f32
    %12 = vector.broadcast %cst_10 : f32 to vector<6x8x8x128xf32>
    %13 = arith.maximumf %11, %12 : vector<6x8x8x128xf32>
    %14 = arith.truncf %13 : vector<6x8x8x128xf32> to vector<6x8x8x128xbf16>
    %cst_11 = arith.constant 0.000000e+00 : bf16
    %15 = vector.broadcast %cst_11 : bf16 to vector<6x8x1x128xbf16>
    %16 = tpu.concatenate %15, %14, %15 in 2 : vector<6x8x1x128xbf16>, vector<6x8x8x128xbf16>, vector<6x8x1x128xbf16> -> vector<6x8x10x128xbf16>
    %17 = vector.extract_strided_slice %16 {offsets = [0, 0, 0, 0], sizes = [6, 8, 8, 128], strides = [1, 1, 1, 1]} : vector<6x8x10x128xbf16> to vector<6x8x8x128xbf16>
    %18 = vector.extract_strided_slice %16 {offsets = [0, 0, 1, 0], sizes = [6, 8, 8, 128], strides = [1, 1, 1, 1]} : vector<6x8x10x128xbf16> to vector<6x8x8x128xbf16>
    %19 = vector.extract_strided_slice %16 {offsets = [0, 0, 2, 0], sizes = [6, 8, 8, 128], strides = [1, 1, 1, 1]} : vector<6x8x10x128xbf16> to vector<6x8x8x128xbf16>
    %20 = tpu.concatenate %17, %18, %19 in 3 : vector<6x8x8x128xbf16>, vector<6x8x8x128xbf16>, vector<6x8x8x128xbf16> -> vector<6x8x8x384xbf16>
    %c0_12 = arith.constant 0 : index
    %c0_13 = arith.constant 0 : index
    %21 = vector.load %arg4[%c0_12, %c0_13] : memref<384x128xbf16, #tpu.memory_space<vmem>>, vector<384x128xbf16>
    %22 = vector.shape_cast %20 : vector<6x8x8x384xbf16> to vector<384x384xbf16>
    %cst_14 = arith.constant dense<0.000000e+00> : vector<384x128xf32>
    %23 = tpu.matmul %22, %21, %cst_14 {dimension_numbers = #tpu.dot_dimension_numbers<[1], [0], [0], [1], [0, 0, 1, 1], [], []>} : vector<384x384xbf16>, vector<384x128xbf16>, vector<384x128xf32> -> vector<384x128xf32>
    %24 = vector.shape_cast %23 : vector<384x128xf32> to vector<6x8x8x128xf32>
    %c0_15 = arith.constant 0 : index
    %c0_16 = arith.constant 0 : index
    %25 = vector.load %arg5[%c0_15, %c0_16] : memref<1x128xf32, #tpu.memory_space<vmem>>, vector<1x128xf32>
    %26 = vector.shape_cast %25 : vector<1x128xf32> to vector<1x1x1x128xf32>
    %27 = vector.broadcast %26 : vector<1x1x1x128xf32> to vector<6x8x8x128xf32>
    %28 = arith.addf %24, %27 : vector<6x8x8x128xf32>
    %cst_17 = arith.constant 0.000000e+00 : f32
    %29 = vector.broadcast %cst_17 : f32 to vector<6x8x8x128xf32>
    %30 = arith.maximumf %28, %29 : vector<6x8x8x128xf32>
    %31 = arith.truncf %30 : vector<6x8x8x128xf32> to vector<6x8x8x128xbf16>
    %cst_18 = arith.constant 0.000000e+00 : bf16
    %32 = vector.broadcast %cst_18 : bf16 to vector<6x1x8x128xbf16>
    %33 = tpu.concatenate %32, %31, %32 in 1 : vector<6x1x8x128xbf16>, vector<6x8x8x128xbf16>, vector<6x1x8x128xbf16> -> vector<6x10x8x128xbf16>
    %34 = vector.extract_strided_slice %33 {offsets = [0, 0, 0, 0], sizes = [6, 8, 8, 128], strides = [1, 1, 1, 1]} : vector<6x10x8x128xbf16> to vector<6x8x8x128xbf16>
    %35 = vector.extract_strided_slice %33 {offsets = [0, 1, 0, 0], sizes = [6, 8, 8, 128], strides = [1, 1, 1, 1]} : vector<6x10x8x128xbf16> to vector<6x8x8x128xbf16>
    %36 = vector.extract_strided_slice %33 {offsets = [0, 2, 0, 0], sizes = [6, 8, 8, 128], strides = [1, 1, 1, 1]} : vector<6x10x8x128xbf16> to vector<6x8x8x128xbf16>
    %37 = tpu.concatenate %34, %35, %36 in 3 : vector<6x8x8x128xbf16>, vector<6x8x8x128xbf16>, vector<6x8x8x128xbf16> -> vector<6x8x8x384xbf16>
    %c0_19 = arith.constant 0 : index
    %c0_20 = arith.constant 0 : index
    %38 = vector.load %arg6[%c0_19, %c0_20] : memref<384x128xbf16, #tpu.memory_space<vmem>>, vector<384x128xbf16>
    %39 = vector.shape_cast %37 : vector<6x8x8x384xbf16> to vector<384x384xbf16>
    %cst_21 = arith.constant dense<0.000000e+00> : vector<384x128xf32>
    %40 = tpu.matmul %39, %38, %cst_21 {dimension_numbers = #tpu.dot_dimension_numbers<[1], [0], [0], [1], [0, 0, 1, 1], [], []>} : vector<384x384xbf16>, vector<384x128xbf16>, vector<384x128xf32> -> vector<384x128xf32>
    %41 = vector.shape_cast %40 : vector<384x128xf32> to vector<6x8x8x128xf32>
    %c0_22 = arith.constant 0 : index
    %c0_23 = arith.constant 0 : index
    %42 = vector.load %arg7[%c0_22, %c0_23] : memref<1x128xf32, #tpu.memory_space<vmem>>, vector<1x128xf32>
    %43 = vector.shape_cast %42 : vector<1x128xf32> to vector<1x1x1x128xf32>
    %44 = vector.broadcast %43 : vector<1x1x1x128xf32> to vector<6x8x8x128xf32>
    %45 = arith.addf %41, %44 : vector<6x8x8x128xf32>
    %46 = arith.extf %31 : vector<6x8x8x128xbf16> to vector<6x8x8x128xf32>
    %47 = arith.addf %45, %46 : vector<6x8x8x128xf32>
    %cst_24 = arith.constant 0.000000e+00 : f32
    %48 = vector.broadcast %cst_24 : f32 to vector<6x8x8x128xf32>
    %49 = arith.maximumf %47, %48 : vector<6x8x8x128xf32>
    %50 = arith.truncf %49 : vector<6x8x8x128xf32> to vector<6x8x8x128xbf16>
    %51 = tpu.iota {dimensions = array<i32: 0>} : vector<6x1x1x1xi32>
    %c4_i32_25 = arith.constant 4 : i32
    %52 = arith.muli %arg1, %c4_i32_25 : i32
    %c1_i32 = arith.constant 1 : i32
    %53 = arith.subi %52, %c1_i32 : i32
    %54 = vector.broadcast %53 : i32 to vector<6x1x1x1xi32>
    %55 = arith.addi %51, %54 : vector<6x1x1x1xi32>
    %c0_i32_26 = arith.constant 0 : i32
    %56 = vector.broadcast %c0_i32_26 : i32 to vector<6x1x1x1xi32>
    %57 = arith.cmpi sge, %55, %56 : vector<6x1x1x1xi32>
    %c8_i32 = arith.constant 8 : i32
    %58 = vector.broadcast %c8_i32 : i32 to vector<6x1x1x1xi32>
    %59 = arith.cmpi slt, %55, %58 : vector<6x1x1x1xi32>
    %60 = arith.andi %57, %59 : vector<6x1x1x1xi1>
    %cst_27 = arith.constant 0.000000e+00 : bf16
    %61 = vector.broadcast %cst_27 : bf16 to vector<6x8x8x128xbf16>
    %62 = vector.shape_cast %60 : vector<6x1x1x1xi1> to vector<6x1x1x1xi1>
    %63 = vector.broadcast %62 : vector<6x1x1x1xi1> to vector<6x8x8x128xi1>
    %64 = arith.select %63, %50, %61 : vector<6x8x8x128xi1>, vector<6x8x8x128xbf16>
    %65 = vector.extract_strided_slice %31 {offsets = [1, 0, 0, 0], sizes = [4, 8, 8, 128], strides = [1, 1, 1, 1]} : vector<6x8x8x128xbf16> to vector<4x8x8x128xbf16>
    %66 = arith.extf %65 : vector<4x8x8x128xbf16> to vector<4x8x8x128xf32>
    %67 = vector.extract_strided_slice %64 {offsets = [1, 0, 0, 0], sizes = [4, 8, 8, 128], strides = [1, 1, 1, 1]} : vector<6x8x8x128xbf16> to vector<4x8x8x128xbf16>
    %68 = arith.extf %67 : vector<4x8x8x128xbf16> to vector<4x8x8x128xf32>
    %69 = vector.extract_strided_slice %64 {offsets = [0, 0, 0, 0], sizes = [4, 8, 8, 128], strides = [1, 1, 1, 1]} : vector<6x8x8x128xbf16> to vector<4x8x8x128xbf16>
    %70 = vector.extract_strided_slice %64 {offsets = [1, 0, 0, 0], sizes = [4, 8, 8, 128], strides = [1, 1, 1, 1]} : vector<6x8x8x128xbf16> to vector<4x8x8x128xbf16>
    %71 = vector.extract_strided_slice %64 {offsets = [2, 0, 0, 0], sizes = [4, 8, 8, 128], strides = [1, 1, 1, 1]} : vector<6x8x8x128xbf16> to vector<4x8x8x128xbf16>
    %72 = tpu.concatenate %69, %70, %71 in 3 : vector<4x8x8x128xbf16>, vector<4x8x8x128xbf16>, vector<4x8x8x128xbf16> -> vector<4x8x8x384xbf16>
    %c0_28 = arith.constant 0 : index
    %c0_29 = arith.constant 0 : index
    %73 = vector.load %arg8[%c0_28, %c0_29] : memref<384x128xbf16, #tpu.memory_space<vmem>>, vector<384x128xbf16>
    %74 = vector.shape_cast %72 : vector<4x8x8x384xbf16> to vector<256x384xbf16>
    %cst_30 = arith.constant dense<0.000000e+00> : vector<256x128xf32>
    %75 = tpu.matmul %74, %73, %cst_30 {dimension_numbers = #tpu.dot_dimension_numbers<[1], [0], [0], [1], [0, 0, 1, 1], [], []>} : vector<256x384xbf16>, vector<384x128xbf16>, vector<256x128xf32> -> vector<256x128xf32>
    %76 = vector.shape_cast %75 : vector<256x128xf32> to vector<4x8x8x128xf32>
    %c0_31 = arith.constant 0 : index
    %c0_32 = arith.constant 0 : index
    %77 = vector.load %arg9[%c0_31, %c0_32] : memref<1x128xf32, #tpu.memory_space<vmem>>, vector<1x128xf32>
    %78 = vector.shape_cast %77 : vector<1x128xf32> to vector<1x1x1x128xf32>
    %79 = vector.broadcast %78 : vector<1x1x1x128xf32> to vector<4x8x8x128xf32>
    %80 = arith.addf %76, %79 : vector<4x8x8x128xf32>
    %81 = arith.addf %80, %68 : vector<4x8x8x128xf32>
    %82 = arith.addf %81, %66 : vector<4x8x8x128xf32>
    %cst_33 = arith.constant 0.000000e+00 : f32
    %83 = vector.broadcast %cst_33 : f32 to vector<4x8x8x128xf32>
    %84 = arith.maximumf %82, %83 : vector<4x8x8x128xf32>
    %85 = arith.truncf %84 : vector<4x8x8x128xf32> to vector<4x8x8x128xbf16>
    %c0_34 = arith.constant 0 : index
    %c0_35 = arith.constant 0 : index
    %86 = vector.load %arg10[%c0_34, %c0_35] : memref<128x128xbf16, #tpu.memory_space<vmem>>, vector<128x128xbf16>
    %87 = vector.shape_cast %85 : vector<4x8x8x128xbf16> to vector<256x128xbf16>
    %cst_36 = arith.constant dense<0.000000e+00> : vector<256x128xf32>
    %88 = tpu.matmul %87, %86, %cst_36 {dimension_numbers = #tpu.dot_dimension_numbers<[1], [0], [0], [1], [0, 0, 1, 1], [], []>} : vector<256x128xbf16>, vector<128x128xbf16>, vector<256x128xf32> -> vector<256x128xf32>
    %89 = vector.shape_cast %88 : vector<256x128xf32> to vector<4x8x8x128xf32>
    %90 = vector.extract_strided_slice %6 {offsets = [1, 0, 0, 0], sizes = [4, 8, 8, 128], strides = [1, 1, 1, 1]} : vector<6x8x8x128xf32> to vector<4x8x8x128xf32>
    %91 = arith.addf %89, %90 : vector<4x8x8x128xf32>
    %cst_37 = arith.constant 0.000000e+00 : f32
    %92 = vector.broadcast %cst_37 : f32 to vector<4x8x8x128xf32>
    %93 = arith.maximumf %91, %92 : vector<4x8x8x128xf32>
    %c0_38 = arith.constant 0 : index
    %c0_39 = arith.constant 0 : index
    %c0_40 = arith.constant 0 : index
    %c0_41 = arith.constant 0 : index
    %c0_42 = arith.constant 0 : index
    %94 = vector.load %arg11[%c0_38, %c0_39, %c0_40, %c0_41, %c0_42] : memref<1x4x8x8x128xf32, #tpu.memory_space<vmem>>, vector<1x4x8x8x128xf32>
    %95 = vector.shape_cast %94 : vector<1x4x8x8x128xf32> to vector<4x8x8x128xf32>
    %96 = vector.shape_cast %93 : vector<4x8x8x128xf32> to vector<1x4x8x8x128xf32>
    tpu.vector_store %arg11[%c0_38, %c0_39, %c0_40, %c0_41, %c0_42], %96 {strides = array<i32>} : memref<1x4x8x8x128xf32, #tpu.memory_space<vmem>>, vector<1x4x8x8x128xf32>,
    return
  }
  func.func @transform_1(%arg0: i32, %arg1: i32) -> (i32, i32) {
    %c0_i32 = arith.constant 0 : i32
    %c0_i32_0 = arith.constant 0 : i32
    %c0_i32_1 = arith.constant 0 : i32
    return %c0_i32, %c0_i32_0 : i32, i32
  }
  func.func @transform_2(%arg0: i32, %arg1: i32) -> (i32, i32) {
    %c0_i32 = arith.constant 0 : i32
    %c0_i32_0 = arith.constant 0 : i32
    %c0_i32_1 = arith.constant 0 : i32
    return %c0_i32, %c0_i32_0 : i32, i32
  }
  func.func @transform_3(%arg0: i32, %arg1: i32) -> (i32, i32) {
    %c0_i32 = arith.constant 0 : i32
    %c0_i32_0 = arith.constant 0 : i32
    %c0_i32_1 = arith.constant 0 : i32
    return %c0_i32, %c0_i32_0 : i32, i32
  }
  func.func @transform_4(%arg0: i32, %arg1: i32) -> (i32, i32) {
    %c0_i32 = arith.constant 0 : i32
    %c0_i32_0 = arith.constant 0 : i32
    %c0_i32_1 = arith.constant 0 : i32
    return %c0_i32, %c0_i32_0 : i32, i32
  }
  func.func @transform_5(%arg0: i32, %arg1: i32) -> (i32, i32) {
    %c0_i32 = arith.constant 0 : i32
    %c0_i32_0 = arith.constant 0 : i32
    %c0_i32_1 = arith.constant 0 : i32
    return %c0_i32, %c0_i32_0 : i32, i32
  }
  func.func @transform_6(%arg0: i32, %arg1: i32) -> (i32, i32) {
    %c0_i32 = arith.constant 0 : i32
    %c0_i32_0 = arith.constant 0 : i32
    %c0_i32_1 = arith.constant 0 : i32
    return %c0_i32, %c0_i32_0 : i32, i32
  }
  func.func @transform_7(%arg0: i32, %arg1: i32) -> (i32, i32) {
    %c0_i32 = arith.constant 0 : i32
    %c0_i32_0 = arith.constant 0 : i32
    %c0_i32_1 = arith.constant 0 : i32
    return %c0_i32, %c0_i32_0 : i32, i32
  }
  func.func @transform_8(%arg0: i32, %arg1: i32) -> (i32, i32) {
    %c0_i32 = arith.constant 0 : i32
    %c0_i32_0 = arith.constant 0 : i32
    %c0_i32_1 = arith.constant 0 : i32
    return %c0_i32, %c0_i32_0 : i32, i32
  }
  func.func @transform_9(%arg0: i32, %arg1: i32) -> (i32, i32, i32, i32, i32) {
    %c0_i32 = arith.constant 0 : i32
    %c0_i32_0 = arith.constant 0 : i32
    %c0_i32_1 = arith.constant 0 : i32
    %c0_i32_2 = arith.constant 0 : i32
    return %arg0, %arg1, %c0_i32, %c0_i32_0, %c0_i32_1 : i32, i32, i32, i32, i32
  }
}

</mosaic_0001>

<llo_original>
// kernel: tpu_custom_call.1
$region0: #{tpu_custom_call.1}
  #allocation0 [shape = 'u32[]', space=smem, size = 0x4, offset = 0x4, fixed_abs, tag = 'smem constant byte address 0x4 - core index']
  #allocation1 [shape = 'u32[144,128]{1,0:T(1,128)}', space=vmem, size = 0x12000, scoped, tag = 'internal scratch']
  #allocation2 [shape = 'f32[6,8,8,128]{3,2,1,0:T(8,128)}', space=vmem, size = 0x30000, scoped, tag = 'scratch operand']
  #allocation3 [shape = 's32[1]{0}', space=sflag, size = 0x4, scoped, tag = 'scratch operand']
  #allocation14 [shape = 's32[]', space=sflag, size = 0x4, offset = 0, fixed_abs, tag = 'sflag constant byte address 0x0 - dummy sync flag']
  #allocation15 [shape = 's32[]', space=sflag, size = 0x4, offset = 0, fixed_abs, tag = 'sflag constant byte address 0x0 - dummy sync flag']
  #allocation16 [shape = 'u32[]', space=smem, size = 0x4, offset = 0x44, fixed_abs, tag = 'smem constant byte address 0x44 - assertion arg 0']
  #allocation17 [shape = 'u32[]', space=smem, size = 0x4, offset = 0x48, fixed_abs, tag = 'smem constant byte address 0x48 - assertion arg 1']
  %s0 = inlined_call_operand.hbm [shape: f32[2,10,8,8,128], index: 0, kind: input, shape index: {}]
  %s1 = inlined_call_operand.hbm [shape: bf16[128,128], index: 1, kind: input, shape index: {}]
  %s2 = inlined_call_operand.hbm [shape: bf16[384,128], index: 2, kind: input, shape index: {}]
  %s3 = inlined_call_operand.vmem [shape: f32[1,128], index: 3, kind: input, shape index: {}]
  %s4 = inlined_call_operand.hbm [shape: bf16[384,128], index: 4, kind: input, shape index: {}]
  %s5 = inlined_call_operand.vmem [shape: f32[1,128], index: 5, kind: input, shape index: {}]
  %s6 = inlined_call_operand.hbm [shape: bf16[384,128], index: 6, kind: input, shape index: {}]
  %s7 = inlined_call_operand.vmem [shape: f32[1,128], index: 7, kind: input, shape index: {}]
  %s8 = inlined_call_operand.hbm [shape: bf16[128,128], index: 8, kind: input, shape index: {}]
  %s9 = inlined_call_operand.hbm [shape: f32[2,8,8,8,128], index: 9, kind: output, shape index: {}]
  %s10 = sld [smem:[#allocation0]]
  $region89: #{tpu_custom_call.1} parent=0
    _
  %s12 = ssub.s32 1, %s10
  %s13 = scalar_select 0, %s12, %s10
  $region1: #{tpu_custom_call.1} parent=0
    #allocation4 [shape = 'u8[32768]{0}', space=vmem, size = 0x8000, scoped, tag = 'input window, operand 1, single buffered']
    #allocation5 [shape = 's32[2]{0}', space=sflag, size = 0x8, scoped, tag = 'scoped memory for tpu_custom_call.1']
    #allocation6 [shape = 's32[2]{0}', space=sflag, size = 0x8, scoped, tag = 'scoped memory for tpu_custom_call.1']
    #allocation7 [shape = 'u8[98304]{0}', space=vmem, size = 0x18000, scoped, tag = 'input window, operand 2, single buffered']
    #allocation8 [shape = 's32[1]{0}', space=sflag, size = 0x4, scoped, tag = 'scoped memory for tpu_custom_call.1']
    #allocation9 [shape = 'u8[98304]{0}', space=vmem, size = 0x18000, scoped, tag = 'input window, operand 4, single buffered']
    #allocation10 [shape = 'u8[98304]{0}', space=vmem, size = 0x18000, scoped, tag = 'input window, operand 6, single buffered']
    #allocation11 [shape = 's32[1]{0}', space=sflag, size = 0x4, scoped, tag = 'scoped memory for tpu_custom_call.1']
    #allocation12 [shape = 'u8[32768]{0}', space=vmem, size = 0x8000, scoped, tag = 'input window, operand 8, single buffered']
    #allocation13 [shape = 'u8[262144]{0}', space=vmem, size = 0x40000, scoped, tag = 'output window, operand 0']
    %14 = vsyncpa [#allocation5], 0
    %15 = vsyncpa [#allocation8], 0
    %16 = vsyncpa [#allocation11], 0
    %17 = vsyncpa [#allocation6], 0
    %s18 = scalar_lea.sflag [#allocation6], 1
    %19 = vsyncpa %s18, 0
    loop: start=0, step=1, limit=6
    $region2: #{tpu_custom_call.1} parent=1 // loop_pre_header
      _
    $region3: #{tpu_custom_call.1} parent=1 // loop_header
      %s21 = sphi 0, %s25
      %p22 = scmp.ge.s32.totalorder %s21, 6
      %s28 = sphi 0, %s40
      %s29 = sphi 0, %s36
      %s30 = sphi 0, %s28
      %s31 = sphi 0, %s29
      %s32 = sphi 0, %s30
      %s33 = sphi 0, %s31
      %s41 = sphi 0, %s41
      %s43 = sphi 0, %s41
      %s44 = sphi 0, %s43
      %s58 = sphi 0, %s44
      %s62 = sphi 0, %s62
      %s64 = sphi 0, %s62
      %s65 = sphi 0, %s64
      %s79 = sphi 0, %s65
      %s83 = sphi 0, %s83
      %s85 = sphi 0, %s83
      %s86 = sphi 0, %s85
      %s100 = sphi 0, %s86
      %s104 = sphi 0, %s104
      %s106 = sphi 0, %s104
      %s107 = sphi 0, %s106
      %s121 = sphi 0, %s107
      %s125 = sphi 0, %s125
      %s127 = sphi 0, %s125
      %s128 = sphi 0, %s127
      %s142 = sphi 0, %s128
      %s146 = sphi 0, %s146
      %s148 = sphi 0, %s146
      %s149 = sphi 0, %s148
      %s163 = sphi 0, %s149
      %s167 = sphi 0, %s167
      %s169 = sphi 0, %s167
      %s170 = sphi 0, %s169
      %s184 = sphi 0, %s170
      %s188 = sphi 0, %s188
      %s190 = sphi 0, %s188
      %s191 = sphi 0, %s190
      %s205 = sphi 0, %s191
      %s213 = sphi 0, %s215
      %s216 = sphi 0, %s213
      %s217 = sphi 0, %s216
      %s233 = sphi 0, %s217
    $region4: #{tpu_custom_call.1} parent=1 // loop_header_branch
      %24 = sbr.rel (%p22) target = $region8
    $region5: #{tpu_custom_call.1} parent=1 // loop_body
      %s26 = ssub.s32 %s21, 1
      %s27 = ssub.s32 %s21, 2
      %s34 = sadd.s32 1, %s29
      %p35 = scmp.ge.s32.totalorder %s34, 2
      %s36 = scalar_select %p35, 0, %s34
      %s37 = sadd.s32 1, %s28
      %s38 = scalar_select %p35, %s37, %s28
      %p39 = scmp.ge.s32.totalorder %s38, 2
      %s40 = scalar_select %p39, 0, %s38
      %s42 = sadd.s32 %s41, 1
      %p45 = scmp.eq.s32.totalorder %s21, 3
      %p46 = scmp.ne.s32.totalorder %s41, %s43
      %p47 = scmp.eq.s32.totalorder %s21, 0
      %p48 = por %p46, %p47
      %p49 = scmp.ne.s32.totalorder %s41, %s43
      %p50 = scmp.eq.s32.totalorder %s26, 3
      %p51 = por %p49, %p50
      %p52 = scmp.ne.s32.totalorder %s43, %s44
      %p53 = scmp.eq.s32.totalorder %s26, 0
      %p54 = por %p52, %p53
      %p55 = scmp.ne.s32.totalorder %s43, %s44
      %p56 = scmp.eq.s32.totalorder %s27, 3
      %p57 = por %p55, %p56
      %p59 = scmp.ne.s32.totalorder %s44, %s58
      %p60 = scmp.eq.s32.totalorder %s27, 0
      %p61 = por %p59, %p60
      %s63 = sadd.s32 %s62, 1
      %p66 = scmp.eq.s32.totalorder %s21, 3
      %p67 = scmp.ne.s32.totalorder %s62, %s64
      %p68 = scmp.eq.s32.totalorder %s21, 0
      %p69 = por %p67, %p68
      %p70 = scmp.ne.s32.totalorder %s62, %s64
      %p71 = scmp.eq.s32.totalorder %s26, 3
      %p72 = por %p70, %p71
      %p73 = scmp.ne.s32.totalorder %s64, %s65
      %p74 = scmp.eq.s32.totalorder %s26, 0
      %p75 = por %p73, %p74
      %p76 = scmp.ne.s32.totalorder %s64, %s65
      %p77 = scmp.eq.s32.totalorder %s27, 3
      %p78 = por %p76, %p77
      %p80 = scmp.ne.s32.totalorder %s65, %s79
      %p81 = scmp.eq.s32.totalorder %s27, 0
      %p82 = por %p80, %p81
      %s84 = sadd.s32 %s83, 1
      %p87 = scmp.eq.s32.totalorder %s21, 3
      %p88 = scmp.ne.s32.totalorder %s83, %s85
      %p89 = scmp.eq.s32.totalorder %s21, 0
      %p90 = por %p88, %p89
      %p91 = scmp.ne.s32.totalorder %s83, %s85
      %p92 = scmp.eq.s32.totalorder %s26, 3
      %p93 = por %p91, %p92
      %p94 = scmp.ne.s32.totalorder %s85, %s86
      %p95 = scmp.eq.s32.totalorder %s26, 0
      %p96 = por %p94, %p95
      %p97 = scmp.ne.s32.totalorder %s85, %s86
      %p98 = scmp.eq.s32.totalorder %s27, 3
      %p99 = por %p97, %p98
      %p101 = scmp.ne.s32.totalorder %s86, %s100
      %p102 = scmp.eq.s32.totalorder %s27, 0
      %p103 = por %p101, %p102
      %s105 = sadd.s32 %s104, 1
      %p108 = scmp.eq.s32.totalorder %s21, 3
      %p109 = scmp.ne.s32.totalorder %s104, %s106
      %p110 = scmp.eq.s32.totalorder %s21, 0
      %p111 = por %p109, %p110
      %p112 = scmp.ne.s32.totalorder %s104, %s106
      %p113 = scmp.eq.s32.totalorder %s26, 3
      %p114 = por %p112, %p113
      %p115 = scmp.ne.s32.totalorder %s106, %s107
      %p116 = scmp.eq.s32.totalorder %s26, 0
      %p117 = por %p115, %p116
      %p118 = scmp.ne.s32.totalorder %s106, %s107
      %p119 = scmp.eq.s32.totalorder %s27, 3
      %p120 = por %p118, %p119
      %p122 = scmp.ne.s32.totalorder %s107, %s121
      %p123 = scmp.eq.s32.totalorder %s27, 0
      %p124 = por %p122, %p123
      %s126 = sadd.s32 %s125, 1
      %p129 = scmp.eq.s32.totalorder %s21, 3
      %p130 = scmp.ne.s32.totalorder %s125, %s127
      %p131 = scmp.eq.s32.totalorder %s21, 0
      %p132 = por %p130, %p131
      %p133 = scmp.ne.s32.totalorder %s125, %s127
      %p134 = scmp.eq.s32.totalorder %s26, 3
      %p135 = por %p133, %p134
      %p136 = scmp.ne.s32.totalorder %s127, %s128
      %p137 = scmp.eq.s32.totalorder %s26, 0
      %p138 = por %p136, %p137
      %p139 = scmp.ne.s32.totalorder %s127, %s128
      %p140 = scmp.eq.s32.totalorder %s27, 3
      %p141 = por %p139, %p140
      %p143 = scmp.ne.s32.totalorder %s128, %s142
      %p144 = scmp.eq.s32.totalorder %s27, 0
      %p145 = por %p143, %p144
      %s147 = sadd.s32 %s146, 1
      %p150 = scmp.eq.s32.totalorder %s21, 3
      %p151 = scmp.ne.s32.totalorder %s146, %s148
      %p152 = scmp.eq.s32.totalorder %s21, 0
      %p153 = por %p151, %p152
      %p154 = scmp.ne.s32.totalorder %s146, %s148
      %p155 = scmp.eq.s32.totalorder %s26, 3
      %p156 = por %p154, %p155
      %p157 = scmp.ne.s32.totalorder %s148, %s149
      %p158 = scmp.eq.s32.totalorder %s26, 0
      %p159 = por %p157, %p158
      %p160 = scmp.ne.s32.totalorder %s148, %s149
      %p161 = scmp.eq.s32.totalorder %s27, 3
      %p162 = por %p160, %p161
      %p164 = scmp.ne.s32.totalorder %s149, %s163
      %p165 = scmp.eq.s32.totalorder %s27, 0
      %p166 = por %p164, %p165
      %s168 = sadd.s32 %s167, 1
      %p171 = scmp.eq.s32.totalorder %s21, 3
      %p172 = scmp.ne.s32.totalorder %s167, %s169
      %p173 = scmp.eq.s32.totalorder %s21, 0
      %p174 = por %p172, %p173
      %p175 = scmp.ne.s32.totalorder %s167, %s169
      %p176 = scmp.eq.s32.totalorder %s26, 3
      %p177 = por %p175, %p176
      %p178 = scmp.ne.s32.totalorder %s169, %s170
      %p179 = scmp.eq.s32.totalorder %s26, 0
      %p180 = por %p178, %p179
      %p181 = scmp.ne.s32.totalorder %s169, %s170
      %p182 = scmp.eq.s32.totalorder %s27, 3
      %p183 = por %p181, %p182
      %p185 = scmp.ne.s32.totalorder %s170, %s184
      %p186 = scmp.eq.s32.totalorder %s27, 0
      %p187 = por %p185, %p186
      %s189 = sadd.s32 %s188, 1
      %p192 = scmp.eq.s32.totalorder %s21, 3
      %p193 = scmp.ne.s32.totalorder %s188, %s190
      %p194 = scmp.eq.s32.totalorder %s21, 0
      %p195 = por %p193, %p194
      %p196 = scmp.ne.s32.totalorder %s188, %s190
      %p197 = scmp.eq.s32.totalorder %s26, 3
      %p198 = por %p196, %p197
      %p199 = scmp.ne.s32.totalorder %s190, %s191
      %p200 = scmp.eq.s32.totalorder %s26, 0
      %p201 = por %p199, %p200
      %p202 = scmp.ne.s32.totalorder %s190, %s191
      %p203 = scmp.eq.s32.totalorder %s27, 3
      %p204 = por %p202, %p203
      %p206 = scmp.ne.s32.totalorder %s191, %s205
      %p207 = scmp.eq.s32.totalorder %s27, 0
      %p208 = por %p206, %p207
      %s209 = ssub.s32 %s28, %s40
      %s210 = ssub.s32 %s29, %s36
      %s211 = sor.u32 %s209, %s210
      %p212 = scmp.eq.s32.totalorder %s211, 0
      %s214 = sadd.s32 %s213, 1
      %s215 = scalar_select %p212, %s213, %s214
      %p218 = pneg %p212
      %p219 = scmp.eq.s32.totalorder %s21, 3
      %p220 = por %p218, %p219
      %p221 = scmp.ne.s32.totalorder %s213, %s216
      %p222 = scmp.eq.s32.totalorder %s21, 0
      %p223 = por %p221, %p222
      %p224 = scmp.ne.s32.totalorder %s213, %s216
      %p225 = scmp.eq.s32.totalorder %s26, 3
      %p226 = por %p224, %p225
      %p227 = scmp.ne.s32.totalorder %s216, %s217
      %p228 = scmp.eq.s32.totalorder %s26, 0
      %p229 = por %p227, %p228
      %p230 = scmp.ne.s32.totalorder %s216, %s217
      %p231 = scmp.eq.s32.totalorder %s27, 3
      %p232 = por %p230, %p231
      %p234 = scmp.ne.s32.totalorder %s217, %s233
      %p235 = scmp.eq.s32.totalorder %s27, 0
      %p236 = por %p234, %p235
      %p237 = scmp.le.s32.totalorder 1, %s21
      %p238 = scmp.lt.s32.totalorder %s21, 5
      %p239 = pnand %p237, %p238
      %p240 = pneg %p239
      // Predicated region
      $region9: #{tpu_custom_call.1} parent=5 // pred_check
        _
      $region10: #{tpu_custom_call.1} parent=5 // pred_check_branch
        %242 = sbr.rel (%p239) target = $region12
      $region11: #{tpu_custom_call.1} parent=5 // pred_region
        %s243 = ssub.s32 %s21, 1
        // Predicated region
        $region13: #{tpu_custom_call.1} parent=11 // pred_check
          %p244 = pneg %p54
        $region14: #{tpu_custom_call.1} parent=11 // pred_check_branch
          %246 = sbr.rel (%p244) target = $region16
        $region15: #{tpu_custom_call.1} parent=11 // pred_region
          %s248 = ssub.s32 1024, 1024
          %249 = vsyncadd [#allocation5], %s248
          %s250 = sshll.u32 [#allocation4], 4
          %s251 = int_to_ptr.vmem [resolvable:$true] %s250
          %256 = dma.hbm_to_vmem [thread:$0]  %s1, 1024, %s251, [#allocation5], 64, 64, 4
        $region16: #{tpu_custom_call.1} parent=11 // pred_fallthru
          _
        // Predicated region
        $region17: #{tpu_custom_call.1} parent=11 // pred_check
          %p257 = pneg %p75
        $region18: #{tpu_custom_call.1} parent=11 // pred_check_branch
          %259 = sbr.rel (%p257) target = $region20
        $region19: #{tpu_custom_call.1} parent=11 // pred_region
          %s261 = ssub.s32 3072, 3072
          %262 = vsyncadd [#allocation8], %s261
          %s263 = sshll.u32 [#allocation7], 4
          %s264 = int_to_ptr.vmem [resolvable:$true] %s263
          %269 = dma.hbm_to_vmem [thread:$0]  %s2, 3072, %s264, [#allocation8], 64, 64, 4
        $region20: #{tpu_custom_call.1} parent=11 // pred_fallthru
          _
        // Predicated region
        $region21: #{tpu_custom_call.1} parent=11 // pred_check
          %p270 = pneg %p96
        $region22: #{tpu_custom_call.1} parent=11 // pred_check_branch
          %272 = sbr.rel (%p270) target = $region24
        $region23: #{tpu_custom_call.1} parent=11 // pred_region
          _
        $region24: #{tpu_custom_call.1} parent=11 // pred_fallthru
          _
        // Predicated region
        $region25: #{tpu_custom_call.1} parent=11 // pred_check
          %p273 = pneg %p117
        $region26: #{tpu_custom_call.1} parent=11 // pred_check_branch
          %275 = sbr.rel (%p273) target = $region28
        $region27: #{tpu_custom_call.1} parent=11 // pred_region
          %s277 = ssub.s32 3072, 3072
          %278 = vsyncadd [#allocation8], %s277
          %s279 = sshll.u32 [#allocation9], 4
          %s280 = int_to_ptr.vmem [resolvable:$true] %s279
          %285 = dma.hbm_to_vmem [thread:$0]  %s4, 3072, %s280, [#allocation8], 64, 64, 4
        $region28: #{tpu_custom_call.1} parent=11 // pred_fallthru
          _
        // Predicated region
        $region29: #{tpu_custom_call.1} parent=11 // pred_check
          %p286 = pneg %p138
        $region30: #{tpu_custom_call.1} parent=11 // pred_check_branch
          %288 = sbr.rel (%p286) target = $region32
        $region31: #{tpu_custom_call.1} parent=11 // pred_region
          _
        $region32: #{tpu_custom_call.1} parent=11 // pred_fallthru
          _
        // Predicated region
        $region33: #{tpu_custom_call.1} parent=11 // pred_check
          %p289 = pneg %p159
        $region34: #{tpu_custom_call.1} parent=11 // pred_check_branch
          %291 = sbr.rel (%p289) target = $region36
        $region35: #{tpu_custom_call.1} parent=11 // pred_region
          %s293 = ssub.s32 3072, 3072
          %294 = vsyncadd [#allocation11], %s293
          %s295 = sshll.u32 [#allocation10], 4
          %s296 = int_to_ptr.vmem [resolvable:$true] %s295
          %301 = dma.hbm_to_vmem [thread:$0]  %s6, 3072, %s296, [#allocation11], 64, 64, 4
        $region36: #{tpu_custom_call.1} parent=11 // pred_fallthru
          _
        // Predicated region
        $region37: #{tpu_custom_call.1} parent=11 // pred_check
          %p302 = pneg %p180
        $region38: #{tpu_custom_call.1} parent=11 // pred_check_branch
          %304 = sbr.rel (%p302) target = $region40
        $region39: #{tpu_custom_call.1} parent=11 // pred_region
          _
        $region40: #{tpu_custom_call.1} parent=11 // pred_fallthru
          _
        // Predicated region
        $region41: #{tpu_custom_call.1} parent=11 // pred_check
          %p305 = pneg %p201
        $region42: #{tpu_custom_call.1} parent=11 // pred_check_branch
          %307 = sbr.rel (%p305) target = $region44
        $region43: #{tpu_custom_call.1} parent=11 // pred_region
          %s309 = ssub.s32 1024, 1024
          %310 = vsyncadd [#allocation11], %s309
          %s311 = sshll.u32 [#allocation12], 4
          %s312 = int_to_ptr.vmem [resolvable:$true] %s311
          %317 = dma.hbm_to_vmem [thread:$0]  %s8, 1024, %s312, [#allocation11], 64, 64, 4
        $region44: #{tpu_custom_call.1} parent=11 // pred_fallthru
          _
      $region12: #{tpu_custom_call.1} parent=5 // pred_fallthru
        _
      %p318 = scmp.lt.s32.totalorder %s21, 4
      // Predicated region
      $region45: #{tpu_custom_call.1} parent=5 // pred_check
        %p319 = pneg %p318
      $region46: #{tpu_custom_call.1} parent=5 // pred_check_branch
        %321 = sbr.rel (%p319) target = $region48
      $region47: #{tpu_custom_call.1} parent=5 // pred_region
        _
      $region48: #{tpu_custom_call.1} parent=5 // pred_fallthru
        _
      %p322 = scmp.le.s32.totalorder 1, %s21
      %p323 = scmp.lt.s32.totalorder %s21, 5
      %p324 = pnand %p322, %p323
      %p325 = pneg %p324
      // Predicated region
      $region49: #{tpu_custom_call.1} parent=5 // pred_check
        _
      $region50: #{tpu_custom_call.1} parent=5 // pred_check_branch
        %327 = sbr.rel (%p324) target = $region52
      $region51: #{tpu_custom_call.1} parent=5 // pred_region
        %s328 = ssub.s32 %s21, 1
        // Predicated region
        $region53: #{tpu_custom_call.1} parent=51 // pred_check
          %p329 = pneg %p54
        $region54: #{tpu_custom_call.1} parent=51 // pred_check_branch
          %331 = sbr.rel (%p329) target = $region56
        $region55: #{tpu_custom_call.1} parent=51 // pred_region
          %332 = dma.done [#allocation5], 1024
        $region56: #{tpu_custom_call.1} parent=51 // pred_fallthru
          _
        // Predicated region
        $region57: #{tpu_custom_call.1} parent=51 // pred_check
          %p333 = pneg %p75
        $region58: #{tpu_custom_call.1} parent=51 // pred_check_branch
          %335 = sbr.rel (%p333) target = $region60
        $region59: #{tpu_custom_call.1} parent=51 // pred_region
          %336 = dma.done [#allocation8], 3072
        $region60: #{tpu_custom_call.1} parent=51 // pred_fallthru
          _
        // Predicated region
        $region61: #{tpu_custom_call.1} parent=51 // pred_check
          %p337 = pneg %p117
        $region62: #{tpu_custom_call.1} parent=51 // pred_check_branch
          %339 = sbr.rel (%p337) target = $region64
        $region63: #{tpu_custom_call.1} parent=51 // pred_region
          %340 = dma.done [#allocation8], 3072
        $region64: #{tpu_custom_call.1} parent=51 // pred_fallthru
          _
        // Predicated region
        $region65: #{tpu_custom_call.1} parent=51 // pred_check
          %p341 = pneg %p159
        $region66: #{tpu_custom_call.1} parent=51 // pred_check_branch
          %343 = sbr.rel (%p341) target = $region68
        $region67: #{tpu_custom_call.1} parent=51 // pred_region
          %344 = dma.done [#allocation11], 3072
        $region68: #{tpu_custom_call.1} parent=51 // pred_fallthru
          _
        // Predicated region
        $region69: #{tpu_custom_call.1} parent=51 // pred_check
          %p345 = pneg %p201
        $region70: #{tpu_custom_call.1} parent=51 // pred_check_branch
          %347 = sbr.rel (%p345) target = $region72
        $region71: #{tpu_custom_call.1} parent=51 // pred_region
          %348 = dma.done [#allocation11], 1024
        $region72: #{tpu_custom_call.1} parent=51 // pred_fallthru
          _
        %p349 = pneg %p54
        %p350 = pneg %p51
        %p351 = pneg %p75
        %p352 = pneg %p72
        %p353 = pneg %p96
        %p354 = pneg %p93
        %p355 = pneg %p117
        %p356 = pneg %p114
        %p357 = pneg %p138
        %p358 = pneg %p135
        %p359 = pneg %p159
        %p360 = pneg %p156
        %p361 = pneg %p180
        %p362 = pneg %p177
        %p363 = pneg %p201
        %p364 = pneg %p198
        %p365 = pneg %p229
        %p366 = pneg %p226
        %s367 = sand.u32 %s216, 1
        %s368 = scalar_lea.sflag [#allocation6], %s367
        %s369 = sand.u32 %s216, 1
        %s370 = smul.addr %s369, 256
        %s371 = scalar_lea.vmem [#allocation13], %s370
        %s372 = smul.u32 4, %s31
        %s374 = smul.u32 %s31, 4
        %s375 = smul.u32 %s374, 64
        %s376 = smul.u32 %s30, 640
        %s377 = sadd.s32 %s375, %s376
        %s378 = smul.addr %s377, 16
        %s379 = scalar_lea.hbm %s0, %s378
        // Predicated region
        $region73: #{tpu_custom_call.1} parent=51 // pred_check
          _
        $region74: #{tpu_custom_call.1} parent=51 // pred_check_branch
          %381 = sbr.rel target = $region76
        $region75: #{tpu_custom_call.1} parent=51 // pred_region
          %382 = sst [smem:[#allocation16]] [#allocation15]
          %383 = sst [smem:[#allocation17]] [#allocation14]
        $region76: #{tpu_custom_call.1} parent=51 // pred_fallthru
          _
        %385 = shalt.err (0)
        %s387 = sshll.u32 [#allocation2], 4
        %s388 = int_to_ptr.vmem [resolvable:$true] %s387
        %390 = dma.hbm_to_vmem [thread:$0]  %s379, 6144, %s388, [#allocation3]
        %s391 = smul.u32 6, 8
        %s392 = smul.u32 %s391, 8
        %s393 = smul.u32 %s392, 1
        %s394 = sshll.u32 %s393, 4
        %395 = dma.done [#allocation3], %s394
        %v396 = vld [vmem:[#allocation2] sm:$0xff]
        %v397 = vld [vmem:[#allocation2 + $0x8] sm:$0xff]
        %v398 = vld [vmem:[#allocation2 + $0x10] sm:$0xff]
        %v399 = vld [vmem:[#allocation2 + $0x18] sm:$0xff]
        %v400 = vld [vmem:[#allocation2 + $0x20] sm:$0xff]
        %v401 = vld [vmem:[#allocation2 + $0x28] sm:$0xff]
        %v402 = vld [vmem:[#allocation2 + $0x30] sm:$0xff]
        %v403 = vld [vmem:[#allocation2 + $0x38] sm:$0xff]
        %v404 = vld [vmem:[#allocation2 + $0x40] sm:$0xff]
        %v405 = vld [vmem:[#allocation2 + $0x48] sm:$0xff]
        %v406 = vld [vmem:[#allocation2 + $0x50] sm:$0xff]
        %v407 = vld [vmem:[#allocation2 + $0x58] sm:$0xff]
        %v408 = vld [vmem:[#allocation2 + $0x60] sm:$0xff]
        %v409 = vld [vmem:[#allocation2 + $0x68] sm:$0xff]
        %v410 = vld [vmem:[#allocation2 + $0x70] sm:$0xff]
        %v411 = vld [vmem:[#allocation2 + $0x78] sm:$0xff]
        %v412 = vld [vmem:[#allocation2 + $0x80] sm:$0xff]
        %v413 = vld [vmem:[#allocation2 + $0x88] sm:$0xff]
        %v414 = vld [vmem:[#allocation2 + $0x90] sm:$0xff]
        %v415 = vld [vmem:[#allocation2 + $0x98] sm:$0xff]
        %v416 = vld [vmem:[#allocation2 + $0xa0] sm:$0xff]
        %v417 = vld [vmem:[#allocation2 + $0xa8] sm:$0xff]
        %v418 = vld [vmem:[#allocation2 + $0xb0] sm:$0xff]
        %v419 = vld [vmem:[#allocation2 + $0xb8] sm:$0xff]
        %v420 = vld [vmem:[#allocation2 + $0xc0] sm:$0xff]
        %v421 = vld [vmem:[#allocation2 + $0xc8] sm:$0xff]
        %v422 = vld [vmem:[#allocation2 + $0xd0] sm:$0xff]
        %v423 = vld [vmem:[#allocation2 + $0xd8] sm:$0xff]
        %v424 = vld [vmem:[#allocation2 + $0xe0] sm:$0xff]
        %v425 = vld [vmem:[#allocation2 + $0xe8] sm:$0xff]
        %v426 = vld [vmem:[#allocation2 + $0xf0] sm:$0xff]
        %v427 = vld [vmem:[#allocation2 + $0xf8] sm:$0xff]
        %v428 = vld [vmem:[#allocation2 + $0x100] sm:$0xff]
        %v429 = vld [vmem:[#allocation2 + $0x108] sm:$0xff]
        %v430 = vld [vmem:[#allocation2 + $0x110] sm:$0xff]
        %v431 = vld [vmem:[#allocation2 + $0x118] sm:$0xff]
        %v432 = vld [vmem:[#allocation2 + $0x120] sm:$0xff]
        %v433 = vld [vmem:[#allocation2 + $0x128] sm:$0xff]
        %v434 = vld [vmem:[#allocation2 + $0x130] sm:$0xff]
        %v435 = vld [vmem:[#allocation2 + $0x138] sm:$0xff]
        %v436 = vld [vmem:[#allocation2 + $0x140] sm:$0xff]
        %v437 = vld [vmem:[#allocation2 + $0x148] sm:$0xff]
        %v438 = vld [vmem:[#allocation2 + $0x150] sm:$0xff]
        %v439 = vld [vmem:[#allocation2 + $0x158] sm:$0xff]
        %v440 = vld [vmem:[#allocation2 + $0x160] sm:$0xff]
        %v441 = vld [vmem:[#allocation2 + $0x168] sm:$0xff]
        %v442 = vld [vmem:[#allocation2 + $0x170] sm:$0xff]
        %v443 = vld [vmem:[#allocation2 + $0x178] sm:$0xff]
        %v444 = vpack.c.bf16 %v396, %v396
        %v445 = vpack.c.bf16 %v397, %v397
        %v446 = vpack.c.bf16 %v398, %v398
        %v447 = vpack.c.bf16 %v399, %v399
        %v448 = vpack.c.bf16 %v400, %v400
        %v449 = vpack.c.bf16 %v401, %v401
        %v450 = vpack.c.bf16 %v402, %v402
        %v451 = vpack.c.bf16 %v403, %v403
        %v452 = vpack.c.bf16 %v404, %v404
        %v453 = vpack.c.bf16 %v405, %v405
        %v454 = vpack.c.bf16 %v406, %v406
        %v455 = vpack.c.bf16 %v407, %v407
        %v456 = vpack.c.bf16 %v408, %v408
        %v457 = vpack.c.bf16 %v409, %v409
        %v458 = vpack.c.bf16 %v410, %v410
        %v459 = vpack.c.bf16 %v411, %v411
        %v460 = vpack.c.bf16 %v412, %v412
        %v461 = vpack.c.bf16 %v413, %v413
        %v462 = vpack.c.bf16 %v414, %v414
        %v463 = vpack.c.bf16 %v415, %v415
        %v464 = vpack.c.bf16 %v416, %v416
        %v465 = vpack.c.bf16 %v417, %v417
        %v466 = vpack.c.bf16 %v418, %v418
        %v467 = vpack.c.bf16 %v419, %v419
        %v468 = vpack.c.bf16 %v420, %v420
        %v469 = vpack.c.bf16 %v421, %v421
        %v470 = vpack.c.bf16 %v422, %v422
        %v471 = vpack.c.bf16 %v423, %v423
        %v472 = vpack.c.bf16 %v424, %v424
        %v473 = vpack.c.bf16 %v425, %v425
        %v474 = vpack.c.bf16 %v426, %v426
        %v475 = vpack.c.bf16 %v427, %v427
        %v476 = vpack.c.bf16 %v428, %v428
        %v477 = vpack.c.bf16 %v429, %v429
        %v478 = vpack.c.bf16 %v430, %v430
        %v479 = vpack.c.bf16 %v431, %v431
        %v480 = vpack.c.bf16 %v432, %v432
        %v481 = vpack.c.bf16 %v433, %v433
        %v482 = vpack.c.bf16 %v434, %v434
        %v483 = vpack.c.bf16 %v435, %v435
        %v484 = vpack.c.bf16 %v436, %v436
        %v485 = vpack.c.bf16 %v437, %v437
        %v486 = vpack.c.bf16 %v438, %v438
        %v487 = vpack.c.bf16 %v439, %v439
        %v488 = vpack.c.bf16 %v440, %v440
        %v489 = vpack.c.bf16 %v441, %v441
        %v490 = vpack.c.bf16 %v442, %v442
        %v491 = vpack.c.bf16 %v443, %v443
        %v492 = vld [vmem:[#allocation4] sm:$0xf]
        %v493 = vld [vmem:[#allocation4 + $0x4] sm:$0xf]
        %v494 = vld [vmem:[#allocation4 + $0x8] sm:$0xf]
        %v495 = vld [vmem:[#allocation4 + $0xc] sm:$0xf]
        %v496 = vld [vmem:[#allocation4 + $0x10] sm:$0xf]
        %v497 = vld [vmem:[#allocation4 + $0x14] sm:$0xf]
        %v498 = vld [vmem:[#allocation4 + $0x18] sm:$0xf]
        %v499 = vld [vmem:[#allocation4 + $0x1c] sm:$0xf]
        %v500 = vld [vmem:[#allocation4 + $0x20] sm:$0xf]
        %v501 = vld [vmem:[#allocation4 + $0x24] sm:$0xf]
        %v502 = vld [vmem:[#allocation4 + $0x28] sm:$0xf]
        %v503 = vld [vmem:[#allocation4 + $0x2c] sm:$0xf]
        %v504 = vld [vmem:[#allocation4 + $0x30] sm:$0xf]
        %v505 = vld [vmem:[#allocation4 + $0x34] sm:$0xf]
        %v506 = vld [vmem:[#allocation4 + $0x38] sm:$0xf]
        %v507 = vld [vmem:[#allocation4 + $0x3c] sm:$0xf]
        %v556 = vunpack.c.l.b16 %v444
        %v557 = vunpack.c.l.b16 %v445
        %v558 = vunpack.c.l.b16 %v446
        %v559 = vunpack.c.l.b16 %v447
        %v560 = vunpack.c.l.b16 %v448
        %v561 = vunpack.c.l.b16 %v449
        %v562 = vunpack.c.l.b16 %v450
        %v563 = vunpack.c.l.b16 %v451
        %v564 = vunpack.c.l.b16 %v452
        %v565 = vunpack.c.l.b16 %v453
        %v566 = vunpack.c.l.b16 %v454
        %v567 = vunpack.c.l.b16 %v455
        %v568 = vunpack.c.l.b16 %v456
        %v569 = vunpack.c.l.b16 %v457
        %v570 = vunpack.c.l.b16 %v458
        %v571 = vunpack.c.l.b16 %v459
        %v572 = vunpack.c.l.b16 %v460
        %v573 = vunpack.c.l.b16 %v461
        %v574 = vunpack.c.l.b16 %v462
        %v575 = vunpack.c.l.b16 %v463
        %v576 = vunpack.c.l.b16 %v464
        %v577 = vunpack.c.l.b16 %v465
        %v578 = vunpack.c.l.b16 %v466
        %v579 = vunpack.c.l.b16 %v467
        %v580 = vunpack.c.l.b16 %v468
        %v581 = vunpack.c.l.b16 %v469
        %v582 = vunpack.c.l.b16 %v470
        %v583 = vunpack.c.l.b16 %v471
        %v584 = vunpack.c.l.b16 %v472
        %v585 = vunpack.c.l.b16 %v473
        %v586 = vunpack.c.l.b16 %v474
        %v587 = vunpack.c.l.b16 %v475
        %v588 = vunpack.c.l.b16 %v476
        %v589 = vunpack.c.l.b16 %v477
        %v590 = vunpack.c.l.b16 %v478
        %v591 = vunpack.c.l.b16 %v479
        %v592 = vunpack.c.l.b16 %v480
        %v593 = vunpack.c.l.b16 %v481
        %v594 = vunpack.c.l.b16 %v482
        %v595 = vunpack.c.l.b16 %v483
        %v596 = vunpack.c.l.b16 %v484
        %v597 = vunpack.c.l.b16 %v485
        %v598 = vunpack.c.l.b16 %v486
        %v599 = vunpack.c.l.b16 %v487
        %v600 = vunpack.c.l.b16 %v488
        %v601 = vunpack.c.l.b16 %v489
        %v602 = vunpack.c.l.b16 %v490
        %v603 = vunpack.c.l.b16 %v491
        %v604 = vpack.c.b16 %v557, %v556
        %v605 = vpack.c.b16 %v559, %v558
        %v606 = vpack.c.b16 %v561, %v560
        %v607 = vpack.c.b16 %v563, %v562
        %v608 = vpack.c.b16 %v565, %v564
        %v609 = vpack.c.b16 %v567, %v566
        %v610 = vpack.c.b16 %v569, %v568
        %v611 = vpack.c.b16 %v571, %v570
        %v612 = vpack.c.b16 %v573, %v572
        %v613 = vpack.c.b16 %v575, %v574
        %v614 = vpack.c.b16 %v577, %v576
        %v615 = vpack.c.b16 %v579, %v578
        %v616 = vpack.c.b16 %v581, %v580
        %v617 = vpack.c.b16 %v583, %v582
        %v618 = vpack.c.b16 %v585, %v584
        %v619 = vpack.c.b16 %v587, %v586
        %v620 = vpack.c.b16 %v589, %v588
        %v621 = vpack.c.b16 %v591, %v590
        %v622 = vpack.c.b16 %v593, %v592
        %v623 = vpack.c.b16 %v595, %v594
        %v624 = vpack.c.b16 %v597, %v596
        %v625 = vpack.c.b16 %v599, %v598
        %v626 = vpack.c.b16 %v601, %v600
        %v627 = vpack.c.b16 %v603, %v602
        %v668 = vunpack.c.l.b16 %v492
        %v669 = vunpack.c.l.b16 %v493
        %v670 = vunpack.c.l.b16 %v494
        %v671 = vunpack.c.l.b16 %v495
        %v672 = vunpack.c.l.b16 %v496
        %v673 = vunpack.c.l.b16 %v497
        %v674 = vunpack.c.l.b16 %v498
        %v675 = vunpack.c.l.b16 %v499
        %v676 = vunpack.c.l.b16 %v500
        %v677 = vunpack.c.l.b16 %v501
        %v678 = vunpack.c.l.b16 %v502
        %v679 = vunpack.c.l.b16 %v503
        %v680 = vunpack.c.l.b16 %v504
        %v681 = vunpack.c.l.b16 %v505
        %v682 = vunpack.c.l.b16 %v506
        %v683 = vunpack.c.l.b16 %v507
        %v684 = vpack.c.b16 %v669, %v668
        %v685 = vpack.c.b16 %v671, %v670
        %v686 = vpack.c.b16 %v673, %v672
        %v687 = vpack.c.b16 %v675, %v674
        %v688 = vpack.c.b16 %v677, %v676
        %v689 = vpack.c.b16 %v679, %v678
        %v690 = vpack.c.b16 %v681, %v680
        %v691 = vpack.c.b16 %v683, %v682
        %700 = vmatprep.subr.bf16.mxu0 0
        %701 = vmatpush1.bf16.msra.mxu0 %v684
        %702 = vmatprep.subr.bf16.mxu0 0
        %703 = vmatpush1.bf16.msra.mxu0 %v685
        %704 = vmatprep.subr.bf16.mxu0 0
        %705 = vmatpush1.bf16.msra.mxu0 %v686
        %706 = vmatprep.subr.bf16.mxu0 0
        %707 = vmatpush1.bf16.msra.mxu0 %v687
        %708 = vmatprep.subr.bf16.mxu0 0
        %709 = vmatpush1.bf16.msra.mxu0 %v688
        %710 = vmatprep.subr.bf16.mxu0 0
        %711 = vmatpush1.bf16.msra.mxu0 %v689
        %712 = vmatprep.subr.bf16.mxu0 0
        %713 = vmatpush1.bf16.msra.mxu0 %v690
        %714 = vmatprep.subr.bf16.mxu0 0
        %715 = vmatpush1.bf16.msra.mxu0 %v691
        %716 = vmatprep.subr.bf16.mxu0 0
        %717 = vmatpush1.bf16.msra.mxu0 0
        %718 = vmatprep.subr.bf16.mxu0 0
        %719 = vmatpush1.bf16.msra.mxu0 0
        %720 = vmatprep.subr.bf16.mxu0 0
        %721 = vmatpush1.bf16.msra.mxu0 0
        %722 = vmatprep.subr.bf16.mxu0 0
        %723 = vmatpush1.bf16.msra.mxu0 0
        %724 = vmatprep.subr.bf16.mxu0 0
        %725 = vmatpush1.bf16.msra.mxu0 0
        %726 = vmatprep.subr.bf16.mxu0 0
        %727 = vmatpush1.bf16.msra.mxu0 0
        %728 = vmatprep.subr.bf16.mxu0 0
        %729 = vmatpush1.bf16.msra.mxu0 0
        %730 = vmatprep.subr.bf16.mxu0 0
        %731 = vmatpush1.bf16.msra.mxu0 0
        %732 = vmatprep.mubr.bf16.mxu0 0
        %733 = vmatmul.mubr.bf16.gmra.mrb[0].mxu0 %v604
        %v734 = vpop.f32.mrb[0].mxu0
        %v735 = vadd.f32 0.0, %v734
        %v736 = vpop.f32.mrb[0].mxu0
        %v737 = vpop.f32.mrb[0].mxu0
        %v738 = vadd.f32 0.0, %v737
        %v739 = vpop.f32.mrb[0].mxu0
        %740 = vmatprep.mubr.bf16.mxu0 0
        %741 = vmatmul.mubr.bf16.gmra.mrb[0].mxu0 %v605
        %v742 = vpop.f32.mrb[0].mxu0
        %v743 = vadd.f32 0.0, %v742
        %v744 = vpop.f32.mrb[0].mxu0
        %v745 = vpop.f32.mrb[0].mxu0
        %v746 = vadd.f32 0.0, %v745
        %v747 = vpop.f32.mrb[0].mxu0
        %748 = vmatprep.mubr.bf16.mxu0 0
        %749 = vmatmul.mubr.bf16.gmra.mrb[0].mxu0 %v606
        %v750 = vpop.f32.mrb[0].mxu0
        %v751 = vadd.f32 0.0, %v750
        %v752 = vpop.f32.mrb[0].mxu0
        %v753 = vpop.f32.mrb[0].mxu0
        %v754 = vadd.f32 0.0, %v753
        %v755 = vpop.f32.mrb[0].mxu0
        %756 = vmatprep.mubr.bf16.mxu0 0
        %757 = vmatmul.mubr.bf16.gmra.mrb[0].mxu0 %v607
        %v758 = vpop.f32.mrb[0].mxu0
        %v759 = vadd.f32 0.0, %v758
        %v760 = vpop.f32.mrb[0].mxu0
        %v761 = vpop.f32.mrb[0].mxu0
        %v762 = vadd.f32 0.0, %v761
        %v763 = vpop.f32.mrb[0].mxu0
        %764 = vmatprep.mubr.bf16.mxu0 0
        %765 = vmatmul.mubr.bf16.gmra.mrb[0].mxu0 %v608
        %v766 = vpop.f32.mrb[0].mxu0
        %v767 = vadd.f32 0.0, %v766
        %v768 = vpop.f32.mrb[0].mxu0
        %v769 = vpop.f32.mrb[0].mxu0
        %v770 = vadd.f32 0.0, %v769
        %v771 = vpop.f32.mrb[0].mxu0
        %772 = vmatprep.mubr.bf16.mxu0 0
        %773 = vmatmul.mubr.bf16.gmra.mrb[0].mxu0 %v609
        %v774 = vpop.f32.mrb[0].mxu0
        %v775 = vadd.f32 0.0, %v774
        %v776 = vpop.f32.mrb[0].mxu0
        %v777 = vpop.f32.mrb[0].mxu0
        %v778 = vadd.f32 0.0, %v777
        %v779 = vpop.f32.mrb[0].mxu0
        %780 = vmatprep.mubr.bf16.mxu0 0
        %781 = vmatmul.mubr.bf16.gmra.mrb[0].mxu0 %v610
        %v782 = vpop.f32.mrb[0].mxu0
        %v783 = vadd.f32 0.0, %v782
        %v784 = vpop.f32.mrb[0].mxu0
        %v785 = vpop.f32.mrb[0].mxu0
        %v786 = vadd.f32 0.0, %v785
        %v787 = vpop.f32.mrb[0].mxu0
        %788 = vmatprep.mubr.bf16.mxu0 0
        %789 = vmatmul.mubr.bf16.gmra.mrb[0].mxu0 %v611
        %v790 = vpop.f32.mrb[0].mxu0
        %v791 = vadd.f32 0.0, %v790
        %v792 = vpop.f32.mrb[0].mxu0
        %v793 = vpop.f32.mrb[0].mxu0
        %v794 = vadd.f32 0.0, %v793
        %v795 = vpop.f32.mrb[0].mxu0
        %796 = vmatprep.mubr.bf16.mxu0 0
        %797 = vmatmul.mubr.bf16.gmra.mrb[0].mxu0 %v612
        %v798 = vpop.f32.mrb[0].mxu0
        %v799 = vadd.f32 0.0, %v798
        %v800 = vpop.f32.mrb[0].mxu0
        %v801 = vpop.f32.mrb[0].mxu0
        %v802 = vadd.f32 0.0, %v801
        %v803 = vpop.f32.mrb[0].mxu0
        %804 = vmatprep.mubr.bf16.mxu0 0
        %805 = vmatmul.mubr.bf16.gmra.mrb[0].mxu0 %v613
        %v806 = vpop.f32.mrb[0].mxu0
        %v807 = vadd.f32 0.0, %v806
        %v808 = vpop.f32.mrb[0].mxu0
        %v809 = vpop.f32.mrb[0].mxu0
        %v810 = vadd.f32 0.0, %v809
        %v811 = vpop.f32.mrb[0].mxu0
        %812 = vmatprep.mubr.bf16.mxu0 0
        %813 = vmatmul.mubr.bf16.gmra.mrb[0].mxu0 %v614
        %v814 = vpop.f32.mrb[0].mxu0
        %v815 = vadd.f32 0.0, %v814
        %v816 = vpop.f32.mrb[0].mxu0
        %v817 = vpop.f32.mrb[0].mxu0
        %v818 = vadd.f32 0.0, %v817
        %v819 = vpop.f32.mrb[0].mxu0
        %820 = vmatprep.mubr.bf16.mxu0 0
        %821 = vmatmul.mubr.bf16.gmra.mrb[0].mxu0 %v615
        %v822 = vpop.f32.mrb[0].mxu0
        %v823 = vadd.f32 0.0, %v822
        %v824 = vpop.f32.mrb[0].mxu0
        %v825 = vpop.f32.mrb[0].mxu0
        %v826 = vadd.f32 0.0, %v825
        %v827 = vpop.f32.mrb[0].mxu0
        %828 = vmatprep.mubr.bf16.mxu0 0
        %829 = vmatmul.mubr.bf16.gmra.mrb[0].mxu0 %v616
        %v830 = vpop.f32.mrb[0].mxu0
        %v831 = vadd.f32 0.0, %v830
        %v832 = vpop.f32.mrb[0].mxu0
        %v833 = vpop.f32.mrb[0].mxu0
        %v834 = vadd.f32 0.0, %v833
        %v835 = vpop.f32.mrb[0].mxu0
        %836 = vmatprep.mubr.bf16.mxu0 0
        %837 = vmatmul.mubr.bf16.gmra.mrb[0].mxu0 %v617
        %v838 = vpop.f32.mrb[0].mxu0
        %v839 = vadd.f32 0.0, %v838
        %v840 = vpop.f32.mrb[0].mxu0
        %v841 = vpop.f32.mrb[0].mxu0
        %v842 = vadd.f32 0.0, %v841
        %v843 = vpop.f32.mrb[0].mxu0
        %844 = vmatprep.mubr.bf16.mxu0 0
        %845 = vmatmul.mubr.bf16.gmra.mrb[0].mxu0 %v618
        %v846 = vpop.f32.mrb[0].mxu0
        %v847 = vadd.f32 0.0, %v846
        %v848 = vpop.f32.mrb[0].mxu0
        %v849 = vpop.f32.mrb[0].mxu0
        %v850 = vadd.f32 0.0, %v849
        %v851 = vpop.f32.mrb[0].mxu0
        %852 = vmatprep.mubr.bf16.mxu0 0
        %853 = vmatmul.mubr.bf16.gmra.mrb[0].mxu0 %v619
        %v854 = vpop.f32.mrb[0].mxu0
        %v855 = vadd.f32 0.0, %v854
        %v856 = vpop.f32.mrb[0].mxu0
        %v857 = vpop.f32.mrb[0].mxu0
        %v858 = vadd.f32 0.0, %v857
        %v859 = vpop.f32.mrb[0].mxu0
        %860 = vmatprep.mubr.bf16.mxu0 0
        %861 = vmatmul.mubr.bf16.gmra.mrb[0].mxu0 %v620
        %v862 = vpop.f32.mrb[0].mxu0
        %v863 = vadd.f32 0.0, %v862
        %v864 = vpop.f32.mrb[0].mxu0
        %v865 = vpop.f32.mrb[0].mxu0
        %v866 = vadd.f32 0.0, %v865
        %v867 = vpop.f32.mrb[0].mxu0
        %868 = vmatprep.mubr.bf16.mxu0 0
        %869 = vmatmul.mubr.bf16.gmra.mrb[0].mxu0 %v621
        %v870 = vpop.f32.mrb[0].mxu0
        %v871 = vadd.f32 0.0, %v870
        %v872 = vpop.f32.mrb[0].mxu0
        %v873 = vpop.f32.mrb[0].mxu0
        %v874 = vadd.f32 0.0, %v873
        %v875 = vpop.f32.mrb[0].mxu0
        %876 = vmatprep.mubr.bf16.mxu0 0
        %877 = vmatmul.mubr.bf16.gmra.mrb[0].mxu0 %v622
        %v878 = vpop.f32.mrb[0].mxu0
        %v879 = vadd.f32 0.0, %v878
        %v880 = vpop.f32.mrb[0].mxu0
        %v881 = vpop.f32.mrb[0].mxu0
        %v882 = vadd.f32 0.0, %v881
        %v883 = vpop.f32.mrb[0].mxu0
        %884 = vmatprep.mubr.bf16.mxu0 0
        %885 = vmatmul.mubr.bf16.gmra.mrb[0].mxu0 %v623
        %v886 = vpop.f32.mrb[0].mxu0
        %v887 = vadd.f32 0.0, %v886
        %v888 = vpop.f32.mrb[0].mxu0
        %v889 = vpop.f32.mrb[0].mxu0
        %v890 = vadd.f32 0.0, %v889
        %v891 = vpop.f32.mrb[0].mxu0
        %892 = vmatprep.mubr.bf16.mxu0 0
        %893 = vmatmul.mubr.bf16.gmra.mrb[0].mxu0 %v624
        %v894 = vpop.f32.mrb[0].mxu0
        %v895 = vadd.f32 0.0, %v894
        %v896 = vpop.f32.mrb[0].mxu0
        %v897 = vpop.f32.mrb[0].mxu0
        %v898 = vadd.f32 0.0, %v897
        %v899 = vpop.f32.mrb[0].mxu0
        %900 = vmatprep.mubr.bf16.mxu0 0
        %901 = vmatmul.mubr.bf16.gmra.mrb[0].mxu0 %v625
        %v902 = vpop.f32.mrb[0].mxu0
        %v903 = vadd.f32 0.0, %v902
        %v904 = vpop.f32.mrb[0].mxu0
        %v905 = vpop.f32.mrb[0].mxu0
        %v906 = vadd.f32 0.0, %v905
        %v907 = vpop.f32.mrb[0].mxu0
        %908 = vmatprep.mubr.bf16.mxu0 0
        %909 = vmatmul.mubr.bf16.gmra.mrb[0].mxu0 %v626
        %v910 = vpop.f32.mrb[0].mxu0
        %v911 = vadd.f32 0.0, %v910
        %v912 = vpop.f32.mrb[0].mxu0
        %v913 = vpop.f32.mrb[0].mxu0
        %v914 = vadd.f32 0.0, %v913
        %v915 = vpop.f32.mrb[0].mxu0
        %916 = vmatprep.mubr.bf16.mxu0 0
        %917 = vmatmul.mubr.bf16.gmra.mrb[0].mxu0 %v627
        %v918 = vpop.f32.mrb[0].mxu0
        %v919 = vadd.f32 0.0, %v918
        %v920 = vpop.f32.mrb[0].mxu0
        %v921 = vpop.f32.mrb[0].mxu0
        %v922 = vadd.f32 0.0, %v921
        %v923 = vpop.f32.mrb[0].mxu0
        %924 = vdwg.mxu0
        %v925 = vmax.f32 %v735, 0.0
        %v926 = vmax.f32 %v738, 0.0
        %v927 = vmax.f32 %v743, 0.0
        %v928 = vmax.f32 %v746, 0.0
        %v929 = vmax.f32 %v751, 0.0
        %v930 = vmax.f32 %v754, 0.0
        %v931 = vmax.f32 %v759, 0.0
        %v932 = vmax.f32 %v762, 0.0
        %v933 = vmax.f32 %v767, 0.0
        %v934 = vmax.f32 %v770, 0.0
        %v935 = vmax.f32 %v775, 0.0
        %v936 = vmax.f32 %v778, 0.0
        %v937 = vmax.f32 %v783, 0.0
        %v938 = vmax.f32 %v786, 0.0
        %v939 = vmax.f32 %v791, 0.0
        %v940 = vmax.f32 %v794, 0.0
        %v941 = vmax.f32 %v799, 0.0
        %v942 = vmax.f32 %v802, 0.0
        %v943 = vmax.f32 %v807, 0.0
        %v944 = vmax.f32 %v810, 0.0
        %v945 = vmax.f32 %v815, 0.0
        %v946 = vmax.f32 %v818, 0.0
        %v947 = vmax.f32 %v823, 0.0
        %v948 = vmax.f32 %v826, 0.0
        %v949 = vmax.f32 %v831, 0.0
        %v950 = vmax.f32 %v834, 0.0
        %v951 = vmax.f32 %v839, 0.0
        %v952 = vmax.f32 %v842, 0.0
        %v953 = vmax.f32 %v847, 0.0
        %v954 = vmax.f32 %v850, 0.0
        %v955 = vmax.f32 %v855, 0.0
        %v956 = vmax.f32 %v858, 0.0
        %v957 = vmax.f32 %v863, 0.0
        %v958 = vmax.f32 %v866, 0.0
        %v959 = vmax.f32 %v871, 0.0
        %v960 = vmax.f32 %v874, 0.0
        %v961 = vmax.f32 %v879, 0.0
        %v962 = vmax.f32 %v882, 0.0
        %v963 = vmax.f32 %v887, 0.0
        %v964 = vmax.f32 %v890, 0.0
        %v965 = vmax.f32 %v895, 0.0
        %v966 = vmax.f32 %v898, 0.0
        %v967 = vmax.f32 %v903, 0.0
        %v968 = vmax.f32 %v906, 0.0
        %v969 = vmax.f32 %v911, 0.0
        %v970 = vmax.f32 %v914, 0.0
        %v971 = vmax.f32 %v919, 0.0
        %v972 = vmax.f32 %v922, 0.0
        %v973 = vpack.c.bf16 %v925, %v925
        %v974 = vpack.c.bf16 %v926, %v926
        %v975 = vpack.c.bf16 %v927, %v927
        %v976 = vpack.c.bf16 %v928, %v928
        %v977 = vpack.c.bf16 %v929, %v929
        %v978 = vpack.c.bf16 %v930, %v930
        %v979 = vpack.c.bf16 %v931, %v931
        %v980 = vpack.c.bf16 %v932, %v932
        %v981 = vpack.c.bf16 %v933, %v933
        %v982 = vpack.c.bf16 %v934, %v934
        %v983 = vpack.c.bf16 %v935, %v935
        %v984 = vpack.c.bf16 %v936, %v936
        %v985 = vpack.c.bf16 %v937, %v937
        %v986 = vpack.c.bf16 %v938, %v938
        %v987 = vpack.c.bf16 %v939, %v939
        %v988 = vpack.c.bf16 %v940, %v940
        %v989 = vpack.c.bf16 %v941, %v941
        %v990 = vpack.c.bf16 %v942, %v942
        %v991 = vpack.c.bf16 %v943, %v943
        %v992 = vpack.c.bf16 %v944, %v944
        %v993 = vpack.c.bf16 %v945, %v945
        %v994 = vpack.c.bf16 %v946, %v946
        %v995 = vpack.c.bf16 %v947, %v947
        %v996 = vpack.c.bf16 %v948, %v948
        %v997 = vpack.c.bf16 %v949, %v949
        %v998 = vpack.c.bf16 %v950, %v950
        %v999 = vpack.c.bf16 %v951, %v951
        %v1000 = vpack.c.bf16 %v952, %v952
        %v1001 = vpack.c.bf16 %v953, %v953
        %v1002 = vpack.c.bf16 %v954, %v954
        %v1003 = vpack.c.bf16 %v955, %v955
        %v1004 = vpack.c.bf16 %v956, %v956
        %v1005 = vpack.c.bf16 %v957, %v957
        %v1006 = vpack.c.bf16 %v958, %v958
        %v1007 = vpack.c.bf16 %v959, %v959
        %v1008 = vpack.c.bf16 %v960, %v960
        %v1009 = vpack.c.bf16 %v961, %v961
        %v1010 = vpack.c.bf16 %v962, %v962
        %v1011 = vpack.c.bf16 %v963, %v963
        %v1012 = vpack.c.bf16 %v964, %v964
        %v1013 = vpack.c.bf16 %v965, %v965
        %v1014 = vpack.c.bf16 %v966, %v966
        %v1015 = vpack.c.bf16 %v967, %v967
        %v1016 = vpack.c.bf16 %v968, %v968
        %v1017 = vpack.c.bf16 %v969, %v969
        %v1018 = vpack.c.bf16 %v970, %v970
        %v1019 = vpack.c.bf16 %v971, %v971
        %v1020 = vpack.c.bf16 %v972, %v972
        %v1022 = vshrl.u32 %v973, 16
        %v1024 = vrot.slane %v1022, 7
        %v1025 = vshll.u32 %v973, 16
        %v1027 = vor.u32 %v1024, %v1025
        %v1029 = vshrl.u32 %v974, 16
        %v1031 = vrot.slane %v1029, 7
        %v1032 = vshll.u32 %v974, 16
        %v1034 = vor.u32 %v1031, %v1032
        %v1036 = vshrl.u32 %v975, 16
        %v1038 = vrot.slane %v1036, 7
        %v1039 = vshll.u32 %v975, 16
        %v1041 = vor.u32 %v1038, %v1039
        %v1043 = vshrl.u32 %v976, 16
        %v1045 = vrot.slane %v1043, 7
        %v1046 = vshll.u32 %v976, 16
        %v1048 = vor.u32 %v1045, %v1046
        %v1050 = vshrl.u32 %v977, 16
        %v1052 = vrot.slane %v1050, 7
        %v1053 = vshll.u32 %v977, 16
        %v1055 = vor.u32 %v1052, %v1053
        %v1057 = vshrl.u32 %v978, 16
        %v1059 = vrot.slane %v1057, 7
        %v1060 = vshll.u32 %v978, 16
        %v1062 = vor.u32 %v1059, %v1060
        %v1064 = vshrl.u32 %v979, 16
        %v1066 = vrot.slane %v1064, 7
        %v1067 = vshll.u32 %v979, 16
        %v1069 = vor.u32 %v1066, %v1067
        %v1071 = vshrl.u32 %v980, 16
        %v1073 = vrot.slane %v1071, 7
        %v1074 = vshll.u32 %v980, 16
        %v1076 = vor.u32 %v1073, %v1074
        %v1078 = vshrl.u32 %v981, 16
        %v1080 = vrot.slane %v1078, 7
        %v1081 = vshll.u32 %v981, 16
        %v1083 = vor.u32 %v1080, %v1081
        %v1085 = vshrl.u32 %v982, 16
        %v1087 = vrot.slane %v1085, 7
        %v1088 = vshll.u32 %v982, 16
        %v1090 = vor.u32 %v1087, %v1088
        %v1092 = vshrl.u32 %v983, 16
        %v1094 = vrot.slane %v1092, 7
        %v1095 = vshll.u32 %v983, 16
        %v1097 = vor.u32 %v1094, %v1095
        %v1099 = vshrl.u32 %v984, 16
        %v1101 = vrot.slane %v1099, 7
        %v1102 = vshll.u32 %v984, 16
        %v1104 = vor.u32 %v1101, %v1102
        %v1106 = vshrl.u32 %v985, 16
        %v1108 = vrot.slane %v1106, 7
        %v1109 = vshll.u32 %v985, 16
        %v1111 = vor.u32 %v1108, %v1109
        %v1113 = vshrl.u32 %v986, 16
        %v1115 = vrot.slane %v1113, 7
        %v1116 = vshll.u32 %v986, 16
        %v1118 = vor.u32 %v1115, %v1116
        %v1120 = vshrl.u32 %v987, 16
        %v1122 = vrot.slane %v1120, 7
        %v1123 = vshll.u32 %v987, 16
        %v1125 = vor.u32 %v1122, %v1123
        %v1127 = vshrl.u32 %v988, 16
        %v1129 = vrot.slane %v1127, 7
        %v1130 = vshll.u32 %v988, 16
        %v1132 = vor.u32 %v1129, %v1130
        %v1134 = vshrl.u32 %v989, 16
        %v1136 = vrot.slane %v1134, 7
        %v1137 = vshll.u32 %v989, 16
        %v1139 = vor.u32 %v1136, %v1137
        %v1141 = vshrl.u32 %v990, 16
        %v1143 = vrot.slane %v1141, 7
        %v1144 = vshll.u32 %v990, 16
        %v1146 = vor.u32 %v1143, %v1144
        %v1148 = vshrl.u32 %v991, 16
        %v1150 = vrot.slane %v1148, 7
        %v1151 = vshll.u32 %v991, 16
        %v1153 = vor.u32 %v1150, %v1151
        %v1155 = vshrl.u32 %v992, 16
        %v1157 = vrot.slane %v1155, 7
        %v1158 = vshll.u32 %v992, 16
        %v1160 = vor.u32 %v1157, %v1158
        %v1162 = vshrl.u32 %v993, 16
        %v1164 = vrot.slane %v1162, 7
        %v1165 = vshll.u32 %v993, 16
        %v1167 = vor.u32 %v1164, %v1165
        %v1169 = vshrl.u32 %v994, 16
        %v1171 = vrot.slane %v1169, 7
        %v1172 = vshll.u32 %v994, 16
        %v1174 = vor.u32 %v1171, %v1172
        %v1176 = vshrl.u32 %v995, 16
        %v1178 = vrot.slane %v1176, 7
        %v1179 = vshll.u32 %v995, 16
        %v1181 = vor.u32 %v1178, %v1179
        %v1183 = vshrl.u32 %v996, 16
        %v1185 = vrot.slane %v1183, 7
        %v1186 = vshll.u32 %v996, 16
        %v1188 = vor.u32 %v1185, %v1186
        %v1190 = vshrl.u32 %v997, 16
        %v1192 = vrot.slane %v1190, 7
        %v1193 = vshll.u32 %v997, 16
        %v1195 = vor.u32 %v1192, %v1193
        %v1197 = vshrl.u32 %v998, 16
        %v1199 = vrot.slane %v1197, 7
        %v1200 = vshll.u32 %v998, 16
        %v1202 = vor.u32 %v1199, %v1200
        %v1204 = vshrl.u32 %v999, 16
        %v1206 = vrot.slane %v1204, 7
        %v1207 = vshll.u32 %v999, 16
        %v1209 = vor.u32 %v1206, %v1207
        %v1211 = vshrl.u32 %v1000, 16
        %v1213 = vrot.slane %v1211, 7
        %v1214 = vshll.u32 %v1000, 16
        %v1216 = vor.u32 %v1213, %v1214
        %v1218 = vshrl.u32 %v1001, 16
        %v1220 = vrot.slane %v1218, 7
        %v1221 = vshll.u32 %v1001, 16
        %v1223 = vor.u32 %v1220, %v1221
        %v1225 = vshrl.u32 %v1002, 16
        %v1227 = vrot.slane %v1225, 7
        %v1228 = vshll.u32 %v1002, 16
        %v1230 = vor.u32 %v1227, %v1228
        %v1232 = vshrl.u32 %v1003, 16
        %v1234 = vrot.slane %v1232, 7
        %v1235 = vshll.u32 %v1003, 16
        %v1237 = vor.u32 %v1234, %v1235
        %v1239 = vshrl.u32 %v1004, 16
        %v1241 = vrot.slane %v1239, 7
        %v1242 = vshll.u32 %v1004, 16
        %v1244 = vor.u32 %v1241, %v1242
        %v1246 = vshrl.u32 %v1005, 16
        %v1248 = vrot.slane %v1246, 7
        %v1249 = vshll.u32 %v1005, 16
        %v1251 = vor.u32 %v1248, %v1249
        %v1253 = vshrl.u32 %v1006, 16
        %v1255 = vrot.slane %v1253, 7
        %v1256 = vshll.u32 %v1006, 16
        %v1258 = vor.u32 %v1255, %v1256
        %v1260 = vshrl.u32 %v1007, 16
        %v1262 = vrot.slane %v1260, 7
        %v1263 = vshll.u32 %v1007, 16
        %v1265 = vor.u32 %v1262, %v1263
        %v1267 = vshrl.u32 %v1008, 16
        %v1269 = vrot.slane %v1267, 7
        %v1270 = vshll.u32 %v1008, 16
        %v1272 = vor.u32 %v1269, %v1270
        %v1274 = vshrl.u32 %v1009, 16
        %v1276 = vrot.slane %v1274, 7
        %v1277 = vshll.u32 %v1009, 16
        %v1279 = vor.u32 %v1276, %v1277
        %v1281 = vshrl.u32 %v1010, 16
        %v1283 = vrot.slane %v1281, 7
        %v1284 = vshll.u32 %v1010, 16
        %v1286 = vor.u32 %v1283, %v1284
        %v1288 = vshrl.u32 %v1011, 16
        %v1290 = vrot.slane %v1288, 7
        %v1291 = vshll.u32 %v1011, 16
        %v1293 = vor.u32 %v1290, %v1291
        %v1295 = vshrl.u32 %v1012, 16
        %v1297 = vrot.slane %v1295, 7
        %v1298 = vshll.u32 %v1012, 16
        %v1300 = vor.u32 %v1297, %v1298
        %v1302 = vshrl.u32 %v1013, 16
        %v1304 = vrot.slane %v1302, 7
        %v1305 = vshll.u32 %v1013, 16
        %v1307 = vor.u32 %v1304, %v1305
        %v1309 = vshrl.u32 %v1014, 16
        %v1311 = vrot.slane %v1309, 7
        %v1312 = vshll.u32 %v1014, 16
        %v1314 = vor.u32 %v1311, %v1312
        %v1316 = vshrl.u32 %v1015, 16
        %v1318 = vrot.slane %v1316, 7
        %v1319 = vshll.u32 %v1015, 16
        %v1321 = vor.u32 %v1318, %v1319
        %v1323 = vshrl.u32 %v1016, 16
        %v1325 = vrot.slane %v1323, 7
        %v1326 = vshll.u32 %v1016, 16
        %v1328 = vor.u32 %v1325, %v1326
        %v1330 = vshrl.u32 %v1017, 16
        %v1332 = vrot.slane %v1330, 7
        %v1333 = vshll.u32 %v1017, 16
        %v1335 = vor.u32 %v1332, %v1333
        %v1337 = vshrl.u32 %v1018, 16
        %v1339 = vrot.slane %v1337, 7
        %v1340 = vshll.u32 %v1018, 16
        %v1342 = vor.u32 %v1339, %v1340
        %v1344 = vshrl.u32 %v1019, 16
        %v1346 = vrot.slane %v1344, 7
        %v1347 = vshll.u32 %v1019, 16
        %v1349 = vor.u32 %v1346, %v1347
        %v1351 = vshrl.u32 %v1020, 16
        %v1353 = vrot.slane %v1351, 7
        %v1354 = vshll.u32 %v1020, 16
        %v1356 = vor.u32 %v1353, %v1354
        %vm1405 = vcmask 1040384
        %vm1406 = vsmask.f32 256
        %vm1407 = vmand %vm1405, %vm1406
        %v1408 = vsel %vm1407, 0, %v1027
        %v1409 = vsel %vm1407, 0, %v1034
        %v1410 = vsel %vm1407, 0, %v1041
        %v1411 = vsel %vm1407, 0, %v1048
        %v1412 = vsel %vm1407, 0, %v1055
        %v1413 = vsel %vm1407, 0, %v1062
        %v1414 = vsel %vm1407, 0, %v1069
        %v1415 = vsel %vm1407, 0, %v1076
        %v1416 = vsel %vm1407, 0, %v1083
        %v1417 = vsel %vm1407, 0, %v1090
        %v1418 = vsel %vm1407, 0, %v1097
        %v1419 = vsel %vm1407, 0, %v1104
        %v1420 = vsel %vm1407, 0, %v1111
        %v1421 = vsel %vm1407, 0, %v1118
        %v1422 = vsel %vm1407, 0, %v1125
        %v1423 = vsel %vm1407, 0, %v1132
        %v1424 = vsel %vm1407, 0, %v1139
        %v1425 = vsel %vm1407, 0, %v1146
        %v1426 = vsel %vm1407, 0, %v1153
        %v1427 = vsel %vm1407, 0, %v1160
        %v1428 = vsel %vm1407, 0, %v1167
        %v1429 = vsel %vm1407, 0, %v1174
        %v1430 = vsel %vm1407, 0, %v1181
        %v1431 = vsel %vm1407, 0, %v1188
        %v1432 = vsel %vm1407, 0, %v1195
        %v1433 = vsel %vm1407, 0, %v1202
        %v1434 = vsel %vm1407, 0, %v1209
        %v1435 = vsel %vm1407, 0, %v1216
        %v1436 = vsel %vm1407, 0, %v1223
        %v1437 = vsel %vm1407, 0, %v1230
        %v1438 = vsel %vm1407, 0, %v1237
        %v1439 = vsel %vm1407, 0, %v1244
        %v1440 = vsel %vm1407, 0, %v1251
        %v1441 = vsel %vm1407, 0, %v1258
        %v1442 = vsel %vm1407, 0, %v1265
        %v1443 = vsel %vm1407, 0, %v1272
        %v1444 = vsel %vm1407, 0, %v1279
        %v1445 = vsel %vm1407, 0, %v1286
        %v1446 = vsel %vm1407, 0, %v1293
        %v1447 = vsel %vm1407, 0, %v1300
        %v1448 = vsel %vm1407, 0, %v1307
        %v1449 = vsel %vm1407, 0, %v1314
        %v1450 = vsel %vm1407, 0, %v1321
        %v1451 = vsel %vm1407, 0, %v1328
        %v1452 = vsel %vm1407, 0, %v1335
        %v1453 = vsel %vm1407, 0, %v1342
        %v1454 = vsel %vm1407, 0, %v1349
        %v1455 = vsel %vm1407, 0, %v1356
        %vm1456 = vcmask 1044480
        %vm1457 = vsmask.f32 4352
        %vm1458 = vmand %vm1456, %vm1457
        %v1459 = vsel %vm1458, %v1408, 0
        %v1460 = vsel %vm1458, %v1409, 0
        %v1461 = vsel %vm1458, %v1410, 0
        %v1462 = vsel %vm1458, %v1411, 0
        %v1463 = vsel %vm1458, %v1412, 0
        %v1464 = vsel %vm1458, %v1413, 0
        %v1465 = vsel %vm1458, %v1414, 0
        %v1466 = vsel %vm1458, %v1415, 0
        %v1467 = vsel %vm1458, %v1416, 0
        %v1468 = vsel %vm1458, %v1417, 0
        %v1469 = vsel %vm1458, %v1418, 0
        %v1470 = vsel %vm1458, %v1419, 0
        %v1471 = vsel %vm1458, %v1420, 0
        %v1472 = vsel %vm1458, %v1421, 0
        %v1473 = vsel %vm1458, %v1422, 0
        %v1474 = vsel %vm1458, %v1423, 0
        %v1475 = vsel %vm1458, %v1424, 0
        %v1476 = vsel %vm1458, %v1425, 0
        %v1477 = vsel %vm1458, %v1426, 0
        %v1478 = vsel %vm1458, %v1427, 0
        %v1479 = vsel %vm1458, %v1428, 0
        %v1480 = vsel %vm1458, %v1429, 0
        %v1481 = vsel %vm1458, %v1430, 0
        %v1482 = vsel %vm1458, %v1431, 0
        %v1483 = vsel %vm1458, %v1432, 0
        %v1484 = vsel %vm1458, %v1433, 0
        %v1485 = vsel %vm1458, %v1434, 0
        %v1486 = vsel %vm1458, %v1435, 0
        %v1487 = vsel %vm1458, %v1436, 0
        %v1488 = vsel %vm1458, %v1437, 0
        %v1489 = vsel %vm1458, %v1438, 0
        %v1490 = vsel %vm1458, %v1439, 0
        %v1491 = vsel %vm1458, %v1440, 0
        %v1492 = vsel %vm1458, %v1441, 0
        %v1493 = vsel %vm1458, %v1442, 0
        %v1494 = vsel %vm1458, %v1443, 0
        %v1495 = vsel %vm1458, %v1444, 0
        %v1496 = vsel %vm1458, %v1445, 0
        %v1497 = vsel %vm1458, %v1446, 0
        %v1498 = vsel %vm1458, %v1447, 0
        %v1499 = vsel %vm1458, %v1448, 0
        %v1500 = vsel %vm1458, %v1449, 0
        %v1501 = vsel %vm1458, %v1450, 0
        %v1502 = vsel %vm1458, %v1451, 0
        %v1503 = vsel %vm1458, %v1452, 0
        %v1504 = vsel %vm1458, %v1453, 0
        %v1505 = vsel %vm1458, %v1454, 0
        %v1506 = vsel %vm1458, %v1455, 0
        %v1508 = vshrl.u32 %v1459, 16
        %v1510 = vshll.u32 %v1459, 16
        %v1512 = vrot.slane %v1510, 1
        %v1513 = vor.u32 %v1508, %v1512
        %v1515 = vshrl.u32 %v1460, 16
        %v1517 = vshll.u32 %v1460, 16
        %v1519 = vrot.slane %v1517, 1
        %v1520 = vor.u32 %v1515, %v1519
        %v1522 = vshrl.u32 %v1461, 16
        %v1524 = vshll.u32 %v1461, 16
        %v1526 = vrot.slane %v1524, 1
        %v1527 = vor.u32 %v1522, %v1526
        %v1529 = vshrl.u32 %v1462, 16
        %v1531 = vshll.u32 %v1462, 16
        %v1533 = vrot.slane %v1531, 1
        %v1534 = vor.u32 %v1529, %v1533
        %v1536 = vshrl.u32 %v1463, 16
        %v1538 = vshll.u32 %v1463, 16
        %v1540 = vrot.slane %v1538, 1
        %v1541 = vor.u32 %v1536, %v1540
        %v1543 = vshrl.u32 %v1464, 16
        %v1545 = vshll.u32 %v1464, 16
        %v1547 = vrot.slane %v1545, 1
        %v1548 = vor.u32 %v1543, %v1547
        %v1550 = vshrl.u32 %v1465, 16
        %v1552 = vshll.u32 %v1465, 16
        %v1554 = vrot.slane %v1552, 1
        %v1555 = vor.u32 %v1550, %v1554
        %v1557 = vshrl.u32 %v1466, 16
        %v1559 = vshll.u32 %v1466, 16
        %v1561 = vrot.slane %v1559, 1
        %v1562 = vor.u32 %v1557, %v1561
        %v1564 = vshrl.u32 %v1467, 16
        %v1566 = vshll.u32 %v1467, 16
        %v1568 = vrot.slane %v1566, 1
        %v1569 = vor.u32 %v1564, %v1568
        %v1571 = vshrl.u32 %v1468, 16
        %v1573 = vshll.u32 %v1468, 16
        %v1575 = vrot.slane %v1573, 1
        %v1576 = vor.u32 %v1571, %v1575
        %v1578 = vshrl.u32 %v1469, 16
        %v1580 = vshll.u32 %v1469, 16
        %v1582 = vrot.slane %v1580, 1
        %v1583 = vor.u32 %v1578, %v1582
        %v1585 = vshrl.u32 %v1470, 16
        %v1587 = vshll.u32 %v1470, 16
        %v1589 = vrot.slane %v1587, 1
        %v1590 = vor.u32 %v1585, %v1589
        %v1592 = vshrl.u32 %v1471, 16
        %v1594 = vshll.u32 %v1471, 16
        %v1596 = vrot.slane %v1594, 1
        %v1597 = vor.u32 %v1592, %v1596
        %v1599 = vshrl.u32 %v1472, 16
        %v1601 = vshll.u32 %v1472, 16
        %v1603 = vrot.slane %v1601, 1
        %v1604 = vor.u32 %v1599, %v1603
        %v1606 = vshrl.u32 %v1473, 16
        %v1608 = vshll.u32 %v1473, 16
        %v1610 = vrot.slane %v1608, 1
        %v1611 = vor.u32 %v1606, %v1610
        %v1613 = vshrl.u32 %v1474, 16
        %v1615 = vshll.u32 %v1474, 16
        %v1617 = vrot.slane %v1615, 1
        %v1618 = vor.u32 %v1613, %v1617
        %v1620 = vshrl.u32 %v1475, 16
        %v1622 = vshll.u32 %v1475, 16
        %v1624 = vrot.slane %v1622, 1
        %v1625 = vor.u32 %v1620, %v1624
        %v1627 = vshrl.u32 %v1476, 16
        %v1629 = vshll.u32 %v1476, 16
        %v1631 = vrot.slane %v1629, 1
        %v1632 = vor.u32 %v1627, %v1631
        %v1634 = vshrl.u32 %v1477, 16
        %v1636 = vshll.u32 %v1477, 16
        %v1638 = vrot.slane %v1636, 1
        %v1639 = vor.u32 %v1634, %v1638
        %v1641 = vshrl.u32 %v1478, 16
        %v1643 = vshll.u32 %v1478, 16
        %v1645 = vrot.slane %v1643, 1
        %v1646 = vor.u32 %v1641, %v1645
        %v1648 = vshrl.u32 %v1479, 16
        %v1650 = vshll.u32 %v1479, 16
        %v1652 = vrot.slane %v1650, 1
        %v1653 = vor.u32 %v1648, %v1652
        %v1655 = vshrl.u32 %v1480, 16
        %v1657 = vshll.u32 %v1480, 16
        %v1659 = vrot.slane %v1657, 1
        %v1660 = vor.u32 %v1655, %v1659
        %v1662 = vshrl.u32 %v1481, 16
        %v1664 = vshll.u32 %v1481, 16
        %v1666 = vrot.slane %v1664, 1
        %v1667 = vor.u32 %v1662, %v1666
        %v1669 = vshrl.u32 %v1482, 16
        %v1671 = vshll.u32 %v1482, 16
        %v1673 = vrot.slane %v1671, 1
        %v1674 = vor.u32 %v1669, %v1673
        %v1676 = vshrl.u32 %v1483, 16
        %v1678 = vshll.u32 %v1483, 16
        %v1680 = vrot.slane %v1678, 1
        %v1681 = vor.u32 %v1676, %v1680
        %v1683 = vshrl.u32 %v1484, 16
        %v1685 = vshll.u32 %v1484, 16
        %v1687 = vrot.slane %v1685, 1
        %v1688 = vor.u32 %v1683, %v1687
        %v1690 = vshrl.u32 %v1485, 16
        %v1692 = vshll.u32 %v1485, 16
        %v1694 = vrot.slane %v1692, 1
        %v1695 = vor.u32 %v1690, %v1694
        %v1697 = vshrl.u32 %v1486, 16
        %v1699 = vshll.u32 %v1486, 16
        %v1701 = vrot.slane %v1699, 1
        %v1702 = vor.u32 %v1697, %v1701
        %v1704 = vshrl.u32 %v1487, 16
        %v1706 = vshll.u32 %v1487, 16
        %v1708 = vrot.slane %v1706, 1
        %v1709 = vor.u32 %v1704, %v1708
        %v1711 = vshrl.u32 %v1488, 16
        %v1713 = vshll.u32 %v1488, 16
        %v1715 = vrot.slane %v1713, 1
        %v1716 = vor.u32 %v1711, %v1715
        %v1718 = vshrl.u32 %v1489, 16
        %v1720 = vshll.u32 %v1489, 16
        %v1722 = vrot.slane %v1720, 1
        %v1723 = vor.u32 %v1718, %v1722
        %v1725 = vshrl.u32 %v1490, 16
        %v1727 = vshll.u32 %v1490, 16
        %v1729 = vrot.slane %v1727, 1
        %v1730 = vor.u32 %v1725, %v1729
        %v1732 = vshrl.u32 %v1491, 16
        %v1734 = vshll.u32 %v1491, 16
        %v1736 = vrot.slane %v1734, 1
        %v1737 = vor.u32 %v1732, %v1736
        %v1739 = vshrl.u32 %v1492, 16
        %v1741 = vshll.u32 %v1492, 16
        %v1743 = vrot.slane %v1741, 1
        %v1744 = vor.u32 %v1739, %v1743
        %v1746 = vshrl.u32 %v1493, 16
        %v1748 = vshll.u32 %v1493, 16
        %v1750 = vrot.slane %v1748, 1
        %v1751 = vor.u32 %v1746, %v1750
        %v1753 = vshrl.u32 %v1494, 16
        %v1755 = vshll.u32 %v1494, 16
        %v1757 = vrot.slane %v1755, 1
        %v1758 = vor.u32 %v1753, %v1757
        %v1760 = vshrl.u32 %v1495, 16
        %v1762 = vshll.u32 %v1495, 16
        %v1764 = vrot.slane %v1762, 1
        %v1765 = vor.u32 %v1760, %v1764
        %v1767 = vshrl.u32 %v1496, 16
        %v1769 = vshll.u32 %v1496, 16
        %v1771 = vrot.slane %v1769, 1
        %v1772 = vor.u32 %v1767, %v1771
        %v1774 = vshrl.u32 %v1497, 16
        %v1776 = vshll.u32 %v1497, 16
        %v1778 = vrot.slane %v1776, 1
        %v1779 = vor.u32 %v1774, %v1778
        %v1781 = vshrl.u32 %v1498, 16
        %v1783 = vshll.u32 %v1498, 16
        %v1785 = vrot.slane %v1783, 1
        %v1786 = vor.u32 %v1781, %v1785
        %v1788 = vshrl.u32 %v1499, 16
        %v1790 = vshll.u32 %v1499, 16
        %v1792 = vrot.slane %v1790, 1
        %v1793 = vor.u32 %v1788, %v1792
        %v1795 = vshrl.u32 %v1500, 16
        %v1797 = vshll.u32 %v1500, 16
        %v1799 = vrot.slane %v1797, 1
        %v1800 = vor.u32 %v1795, %v1799
        %v1802 = vshrl.u32 %v1501, 16
        %v1804 = vshll.u32 %v1501, 16
        %v1806 = vrot.slane %v1804, 1
        %v1807 = vor.u32 %v1802, %v1806
        %v1809 = vshrl.u32 %v1502, 16
        %v1811 = vshll.u32 %v1502, 16
        %v1813 = vrot.slane %v1811, 1
        %v1814 = vor.u32 %v1809, %v1813
        %v1816 = vshrl.u32 %v1503, 16
        %v1818 = vshll.u32 %v1503, 16
        %v1820 = vrot.slane %v1818, 1
        %v1821 = vor.u32 %v1816, %v1820
        %v1823 = vshrl.u32 %v1504, 16
        %v1825 = vshll.u32 %v1504, 16
        %v1827 = vrot.slane %v1825, 1
        %v1828 = vor.u32 %v1823, %v1827
        %v1830 = vshrl.u32 %v1505, 16
        %v1832 = vshll.u32 %v1505, 16
        %v1834 = vrot.slane %v1832, 1
        %v1835 = vor.u32 %v1830, %v1834
        %v1837 = vshrl.u32 %v1506, 16
        %v1839 = vshll.u32 %v1506, 16
        %v1841 = vrot.slane %v1839, 1
        %v1842 = vor.u32 %v1837, %v1841
        %v1891 = vrot.slane %v1459, 1
        %v1892 = vrot.slane %v1460, 1
        %v1893 = vrot.slane %v1461, 1
        %v1894 = vrot.slane %v1462, 1
        %v1895 = vrot.slane %v1463, 1
        %v1896 = vrot.slane %v1464, 1
        %v1897 = vrot.slane %v1465, 1
        %v1898 = vrot.slane %v1466, 1
        %v1899 = vrot.slane %v1467, 1
        %v1900 = vrot.slane %v1468, 1
        %v1901 = vrot.slane %v1469, 1
        %v1902 = vrot.slane %v1470, 1
        %v1903 = vrot.slane %v1471, 1
        %v1904 = vrot.slane %v1472, 1
        %v1905 = vrot.slane %v1473, 1
        %v1906 = vrot.slane %v1474, 1
        %v1907 = vrot.slane %v1475, 1
        %v1908 = vrot.slane %v1476, 1
        %v1909 = vrot.slane %v1477, 1
        %v1910 = vrot.slane %v1478, 1
        %v1911 = vrot.slane %v1479, 1
        %v1912 = vrot.slane %v1480, 1
        %v1913 = vrot.slane %v1481, 1
        %v1914 = vrot.slane %v1482, 1
        %v1915 = vrot.slane %v1483, 1
        %v1916 = vrot.slane %v1484, 1
        %v1917 = vrot.slane %v1485, 1
        %v1918 = vrot.slane %v1486, 1
        %v1919 = vrot.slane %v1487, 1
        %v1920 = vrot.slane %v1488, 1
        %v1921 = vrot.slane %v1489, 1
        %v1922 = vrot.slane %v1490, 1
        %v1923 = vrot.slane %v1491, 1
        %v1924 = vrot.slane %v1492, 1
        %v1925 = vrot.slane %v1493, 1
        %v1926 = vrot.slane %v1494, 1
        %v1927 = vrot.slane %v1495, 1
        %v1928 = vrot.slane %v1496, 1
        %v1929 = vrot.slane %v1497, 1
        %v1930 = vrot.slane %v1498, 1
        %v1931 = vrot.slane %v1499, 1
        %v1932 = vrot.slane %v1500, 1
        %v1933 = vrot.slane %v1501, 1
        %v1934 = vrot.slane %v1502, 1
        %v1935 = vrot.slane %v1503, 1
        %v1936 = vrot.slane %v1504, 1
        %v1937 = vrot.slane %v1505, 1
        %v1938 = vrot.slane %v1506, 1
        %v1939 = vld [vmem:[#allocation7] sm:$0xf]
        %v1940 = vld [vmem:[#allocation7 + $0x4] sm:$0xf]
        %v1941 = vld [vmem:[#allocation7 + $0x8] sm:$0xf]
        %v1942 = vld [vmem:[#allocation7 + $0xc] sm:$0xf]
        %v1943 = vld [vmem:[#allocation7 + $0x10] sm:$0xf]
        %v1944 = vld [vmem:[#allocation7 + $0x14] sm:$0xf]
        %v1945 = vld [vmem:[#allocation7 + $0x18] sm:$0xf]
        %v1946 = vld [vmem:[#allocation7 + $0x1c] sm:$0xf]
        %v1947 = vld [vmem:[#allocation7 + $0x20] sm:$0xf]
        %v1948 = vld [vmem:[#allocation7 + $0x24] sm:$0xf]
        %v1949 = vld [vmem:[#allocation7 + $0x28] sm:$0xf]
        %v1950 = vld [vmem:[#allocation7 + $0x2c] sm:$0xf]
        %v1951 = vld [vmem:[#allocation7 + $0x30] sm:$0xf]
        %v1952 = vld [vmem:[#allocation7 + $0x34] sm:$0xf]
        %v1953 = vld [vmem:[#allocation7 + $0x38] sm:$0xf]
        %v1954 = vld [vmem:[#allocation7 + $0x3c] sm:$0xf]
        %v1955 = vld [vmem:[#allocation7 + $0x40] sm:$0xf]
        %v1956 = vld [vmem:[#allocation7 + $0x44] sm:$0xf]
        %v1957 = vld [vmem:[#allocation7 + $0x48] sm:$0xf]
        %v1958 = vld [vmem:[#allocation7 + $0x4c] sm:$0xf]
        %v1959 = vld [vmem:[#allocation7 + $0x50] sm:$0xf]
        %v1960 = vld [vmem:[#allocation7 + $0x54] sm:$0xf]
        %v1961 = vld [vmem:[#allocation7 + $0x58] sm:$0xf]
        %v1962 = vld [vmem:[#allocation7 + $0x5c] sm:$0xf]
        %v1963 = vld [vmem:[#allocation7 + $0x60] sm:$0xf]
        %v1964 = vld [vmem:[#allocation7 + $0x64] sm:$0xf]
        %v1965 = vld [vmem:[#allocation7 + $0x68] sm:$0xf]
        %v1966 = vld [vmem:[#allocation7 + $0x6c] sm:$0xf]
        %v1967 = vld [vmem:[#allocation7 + $0x70] sm:$0xf]
        %v1968 = vld [vmem:[#allocation7 + $0x74] sm:$0xf]
        %v1969 = vld [vmem:[#allocation7 + $0x78] sm:$0xf]
        %v1970 = vld [vmem:[#allocation7 + $0x7c] sm:$0xf]
        %v1971 = vld [vmem:[#allocation7 + $0x80] sm:$0xf]
        %v1972 = vld [vmem:[#allocation7 + $0x84] sm:$0xf]
        %v1973 = vld [vmem:[#allocation7 + $0x88] sm:$0xf]
        %v1974 = vld [vmem:[#allocation7 + $0x8c] sm:$0xf]
        %v1975 = vld [vmem:[#allocation7 + $0x90] sm:$0xf]
        %v1976 = vld [vmem:[#allocation7 + $0x94] sm:$0xf]
        %v1977 = vld [vmem:[#allocation7 + $0x98] sm:$0xf]
        %v1978 = vld [vmem:[#allocation7 + $0x9c] sm:$0xf]
        %v1979 = vld [vmem:[#allocation7 + $0xa0] sm:$0xf]
        %v1980 = vld [vmem:[#allocation7 + $0xa4] sm:$0xf]
        %v1981 = vld [vmem:[#allocation7 + $0xa8] sm:$0xf]
        %v1982 = vld [vmem:[#allocation7 + $0xac] sm:$0xf]
        %v1983 = vld [vmem:[#allocation7 + $0xb0] sm:$0xf]
        %v1984 = vld [vmem:[#allocation7 + $0xb4] sm:$0xf]
        %v1985 = vld [vmem:[#allocation7 + $0xb8] sm:$0xf]
        %v1986 = vld [vmem:[#allocation7 + $0xbc] sm:$0xf]
        %v1987 = vunpack.c.l.b16 %v1459
        %v1988 = vunpack.c.l.b16 %v1513
        %v1989 = vunpack.c.l.b16 %v1891
        %v1990 = vunpack.c.l.b16 %v1460
        %v1991 = vunpack.c.l.b16 %v1520
        %v1992 = vunpack.c.l.b16 %v1892
        %v1993 = vunpack.c.l.b16 %v1461
        %v1994 = vunpack.c.l.b16 %v1527
        %v1995 = vunpack.c.l.b16 %v1893
        %v1996 = vunpack.c.l.b16 %v1462
        %v1997 = vunpack.c.l.b16 %v1534
        %v1998 = vunpack.c.l.b16 %v1894
        %v1999 = vunpack.c.l.b16 %v1463
        %v2000 = vunpack.c.l.b16 %v1541
        %v2001 = vunpack.c.l.b16 %v1895
        %v2002 = vunpack.c.l.b16 %v1464
        %v2003 = vunpack.c.l.b16 %v1548
        %v2004 = vunpack.c.l.b16 %v1896
        %v2005 = vunpack.c.l.b16 %v1465
        %v2006 = vunpack.c.l.b16 %v1555
        %v2007 = vunpack.c.l.b16 %v1897
        %v2008 = vunpack.c.l.b16 %v1466
        %v2009 = vunpack.c.l.b16 %v1562
        %v2010 = vunpack.c.l.b16 %v1898
        %v2011 = vunpack.c.l.b16 %v1467
        %v2012 = vunpack.c.l.b16 %v1569
        %v2013 = vunpack.c.l.b16 %v1899
        %v2014 = vunpack.c.l.b16 %v1468
        %v2015 = vunpack.c.l.b16 %v1576
        %v2016 = vunpack.c.l.b16 %v1900
        %v2017 = vunpack.c.l.b16 %v1469
        %v2018 = vunpack.c.l.b16 %v1583
        %v2019 = vunpack.c.l.b16 %v1901
        %v2020 = vunpack.c.l.b16 %v1470
        %v2021 = vunpack.c.l.b16 %v1590
        %v2022 = vunpack.c.l.b16 %v1902
        %v2023 = vunpack.c.l.b16 %v1471
        %v2024 = vunpack.c.l.b16 %v1597
        %v2025 = vunpack.c.l.b16 %v1903
        %v2026 = vunpack.c.l.b16 %v1472
        %v2027 = vunpack.c.l.b16 %v1604
        %v2028 = vunpack.c.l.b16 %v1904
        %v2029 = vunpack.c.l.b16 %v1473
        %v2030 = vunpack.c.l.b16 %v1611
        %v2031 = vunpack.c.l.b16 %v1905
        %v2032 = vunpack.c.l.b16 %v1474
        %v2033 = vunpack.c.l.b16 %v1618
        %v2034 = vunpack.c.l.b16 %v1906
        %v2035 = vunpack.c.l.b16 %v1475
        %v2036 = vunpack.c.l.b16 %v1625
        %v2037 = vunpack.c.l.b16 %v1907
        %v2038 = vunpack.c.l.b16 %v1476
        %v2039 = vunpack.c.l.b16 %v1632
        %v2040 = vunpack.c.l.b16 %v1908
        %v2041 = vunpack.c.l.b16 %v1477
        %v2042 = vunpack.c.l.b16 %v1639
        %v2043 = vunpack.c.l.b16 %v1909
        %v2044 = vunpack.c.l.b16 %v1478
        %v2045 = vunpack.c.l.b16 %v1646
        %v2046 = vunpack.c.l.b16 %v1910
        %v2047 = vunpack.c.l.b16 %v1479
        %v2048 = vunpack.c.l.b16 %v1653
        %v2049 = vunpack.c.l.b16 %v1911
        %v2050 = vunpack.c.l.b16 %v1480
        %v2051 = vunpack.c.l.b16 %v1660
        %v2052 = vunpack.c.l.b16 %v1912
        %v2053 = vunpack.c.l.b16 %v1481
        %v2054 = vunpack.c.l.b16 %v1667
        %v2055 = vunpack.c.l.b16 %v1913
        %v2056 = vunpack.c.l.b16 %v1482
        %v2057 = vunpack.c.l.b16 %v1674
        %v2058 = vunpack.c.l.b16 %v1914
        %v2059 = vunpack.c.l.b16 %v1483
        %v2060 = vunpack.c.l.b16 %v1681
        %v2061 = vunpack.c.l.b16 %v1915
        %v2062 = vunpack.c.l.b16 %v1484
        %v2063 = vunpack.c.l.b16 %v1688
        %v2064 = vunpack.c.l.b16 %v1916
        %v2065 = vunpack.c.l.b16 %v1485
        %v2066 = vunpack.c.l.b16 %v1695
        %v2067 = vunpack.c.l.b16 %v1917
        %v2068 = vunpack.c.l.b16 %v1486
        %v2069 = vunpack.c.l.b16 %v1702
        %v2070 = vunpack.c.l.b16 %v1918
        %v2071 = vunpack.c.l.b16 %v1487
        %v2072 = vunpack.c.l.b16 %v1709
        %v2073 = vunpack.c.l.b16 %v1919
        %v2074 = vunpack.c.l.b16 %v1488
        %v2075 = vunpack.c.l.b16 %v1716
        %v2076 = vunpack.c.l.b16 %v1920
        %v2077 = vunpack.c.l.b16 %v1489
        %v2078 = vunpack.c.l.b16 %v1723
        %v2079 = vunpack.c.l.b16 %v1921
        %v2080 = vunpack.c.l.b16 %v1490
        %v2081 = vunpack.c.l.b16 %v1730
        %v2082 = vunpack.c.l.b16 %v1922
        %v2083 = vunpack.c.l.b16 %v1491
        %v2084 = vunpack.c.l.b16 %v1737
        %v2085 = vunpack.c.l.b16 %v1923
        %v2086 = vunpack.c.l.b16 %v1492
        %v2087 = vunpack.c.l.b16 %v1744
        %v2088 = vunpack.c.l.b16 %v1924
        %v2089 = vunpack.c.l.b16 %v1493
        %v2090 = vunpack.c.l.b16 %v1751
        %v2091 = vunpack.c.l.b16 %v1925
        %v2092 = vunpack.c.l.b16 %v1494
        %v2093 = vunpack.c.l.b16 %v1758
        %v2094 = vunpack.c.l.b16 %v1926
        %v2095 = vunpack.c.l.b16 %v1495
        %v2096 = vunpack.c.l.b16 %v1765
        %v2097 = vunpack.c.l.b16 %v1927
        %v2098 = vunpack.c.l.b16 %v1496
        %v2099 = vunpack.c.l.b16 %v1772
        %v2100 = vunpack.c.l.b16 %v1928
        %v2101 = vunpack.c.l.b16 %v1497
        %v2102 = vunpack.c.l.b16 %v1779
        %v2103 = vunpack.c.l.b16 %v1929
        %v2104 = vunpack.c.l.b16 %v1498
        %v2105 = vunpack.c.l.b16 %v1786
        %v2106 = vunpack.c.l.b16 %v1930
        %v2107 = vunpack.c.l.b16 %v1499
        %v2108 = vunpack.c.l.b16 %v1793
        %v2109 = vunpack.c.l.b16 %v1931
        %v2110 = vunpack.c.l.b16 %v1500
        %v2111 = vunpack.c.l.b16 %v1800
        %v2112 = vunpack.c.l.b16 %v1932
        %v2113 = vunpack.c.l.b16 %v1501
        %v2114 = vunpack.c.l.b16 %v1807
        %v2115 = vunpack.c.l.b16 %v1933
        %v2116 = vunpack.c.l.b16 %v1502
        %v2117 = vunpack.c.l.b16 %v1814
        %v2118 = vunpack.c.l.b16 %v1934
        %v2119 = vunpack.c.l.b16 %v1503
        %v2120 = vunpack.c.l.b16 %v1821
        %v2121 = vunpack.c.l.b16 %v1935
        %v2122 = vunpack.c.l.b16 %v1504
        %v2123 = vunpack.c.l.b16 %v1828
        %v2124 = vunpack.c.l.b16 %v1936
        %v2125 = vunpack.c.l.b16 %v1505
        %v2126 = vunpack.c.l.b16 %v1835
        %v2127 = vunpack.c.l.b16 %v1937
        %v2128 = vunpack.c.l.b16 %v1506
        %v2129 = vunpack.c.l.b16 %v1842
        %v2130 = vunpack.c.l.b16 %v1938
        %v2131 = vpack.c.b16 %v1990, %v1987
        %v2132 = vpack.c.b16 %v1991, %v1988
        %v2133 = vpack.c.b16 %v1992, %v1989
        %v2134 = vpack.c.b16 %v1996, %v1993
        %v2135 = vpack.c.b16 %v1997, %v1994
        %v2136 = vpack.c.b16 %v1998, %v1995
        %v2137 = vpack.c.b16 %v2002, %v1999
        %v2138 = vpack.c.b16 %v2003, %v2000
        %v2139 = vpack.c.b16 %v2004, %v2001
        %v2140 = vpack.c.b16 %v2008, %v2005
        %v2141 = vpack.c.b16 %v2009, %v2006
        %v2142 = vpack.c.b16 %v2010, %v2007
        %v2143 = vpack.c.b16 %v2014, %v2011
        %v2144 = vpack.c.b16 %v2015, %v2012
        %v2145 = vpack.c.b16 %v2016, %v2013
        %v2146 = vpack.c.b16 %v2020, %v2017
        %v2147 = vpack.c.b16 %v2021, %v2018
        %v2148 = vpack.c.b16 %v2022, %v2019
        %v2149 = vpack.c.b16 %v2026, %v2023
        %v2150 = vpack.c.b16 %v2027, %v2024
        %v2151 = vpack.c.b16 %v2028, %v2025
        %v2152 = vpack.c.b16 %v2032, %v2029
        %v2153 = vpack.c.b16 %v2033, %v2030
        %v2154 = vpack.c.b16 %v2034, %v2031
        %v2155 = vpack.c.b16 %v2038, %v2035
        %v2156 = vpack.c.b16 %v2039, %v2036
        %v2157 = vpack.c.b16 %v2040, %v2037
        %v2158 = vpack.c.b16 %v2044, %v2041
        %v2159 = vpack.c.b16 %v2045, %v2042
        %v2160 = vpack.c.b16 %v2046, %v2043
        %v2161 = vpack.c.b16 %v2050, %v2047
        %v2162 = vpack.c.b16 %v2051, %v2048
        %v2163 = vpack.c.b16 %v2052, %v2049
        %v2164 = vpack.c.b16 %v2056, %v2053
        %v2165 = vpack.c.b16 %v2057, %v2054
        %v2166 = vpack.c.b16 %v2058, %v2055
        %v2167 = vpack.c.b16 %v2062, %v2059
        %v2168 = vpack.c.b16 %v2063, %v2060
        %v2169 = vpack.c.b16 %v2064, %v2061
        %v2170 = vpack.c.b16 %v2068, %v2065
        %v2171 = vpack.c.b16 %v2069, %v2066
        %v2172 = vpack.c.b16 %v2070, %v2067
        %v2173 = vpack.c.b16 %v2074, %v2071
        %v2174 = vpack.c.b16 %v2075, %v2072
        %v2175 = vpack.c.b16 %v2076, %v2073
        %v2176 = vpack.c.b16 %v2080, %v2077
        %v2177 = vpack.c.b16 %v2081, %v2078
        %v2178 = vpack.c.b16 %v2082, %v2079
        %v2179 = vpack.c.b16 %v2086, %v2083
        %v2180 = vpack.c.b16 %v2087, %v2084
        %v2181 = vpack.c.b16 %v2088, %v2085
        %v2182 = vpack.c.b16 %v2092, %v2089
        %v2183 = vpack.c.b16 %v2093, %v2090
        %v2184 = vpack.c.b16 %v2094, %v2091
        %v2185 = vpack.c.b16 %v2098, %v2095
        %v2186 = vpack.c.b16 %v2099, %v2096
        %v2187 = vpack.c.b16 %v2100, %v2097
        %v2188 = vpack.c.b16 %v2104, %v2101
        %v2189 = vpack.c.b16 %v2105, %v2102
        %v2190 = vpack.c.b16 %v2106, %v2103
        %v2191 = vpack.c.b16 %v2110, %v2107
        %v2192 = vpack.c.b16 %v2111, %v2108
        %v2193 = vpack.c.b16 %v2112, %v2109
        %v2194 = vpack.c.b16 %v2116, %v2113
        %v2195 = vpack.c.b16 %v2117, %v2114
        %v2196 = vpack.c.b16 %v2118, %v2115
        %v2197 = vpack.c.b16 %v2122, %v2119
        %v2198 = vpack.c.b16 %v2123, %v2120
        %v2199 = vpack.c.b16 %v2124, %v2121
        %v2200 = vpack.c.b16 %v2128, %v2125
        %v2201 = vpack.c.b16 %v2129, %v2126
        %v2202 = vpack.c.b16 %v2130, %v2127
        %v2323 = vunpack.c.l.b16 %v1939
        %v2324 = vunpack.c.l.b16 %v1940
        %v2325 = vunpack.c.l.b16 %v1941
        %v2326 = vunpack.c.l.b16 %v1942
        %v2327 = vunpack.c.l.b16 %v1943
        %v2328 = vunpack.c.l.b16 %v1944
        %v2329 = vunpack.c.l.b16 %v1945
        %v2330 = vunpack.c.l.b16 %v1946
        %v2331 = vunpack.c.l.b16 %v1947
        %v2332 = vunpack.c.l.b16 %v1948
        %v2333 = vunpack.c.l.b16 %v1949
        %v2334 = vunpack.c.l.b16 %v1950
        %v2335 = vunpack.c.l.b16 %v1951
        %v2336 = vunpack.c.l.b16 %v1952
        %v2337 = vunpack.c.l.b16 %v1953
        %v2338 = vunpack.c.l.b16 %v1954
        %v2339 = vunpack.c.l.b16 %v1955
        %v2340 = vunpack.c.l.b16 %v1956
        %v2341 = vunpack.c.l.b16 %v1957
        %v2342 = vunpack.c.l.b16 %v1958
        %v2343 = vunpack.c.l.b16 %v1959
        %v2344 = vunpack.c.l.b16 %v1960
        %v2345 = vunpack.c.l.b16 %v1961
        %v2346 = vunpack.c.l.b16 %v1962
        %v2347 = vunpack.c.l.b16 %v1963
        %v2348 = vunpack.c.l.b16 %v1964
        %v2349 = vunpack.c.l.b16 %v1965
        %v2350 = vunpack.c.l.b16 %v1966
        %v2351 = vunpack.c.l.b16 %v1967
        %v2352 = vunpack.c.l.b16 %v1968
        %v2353 = vunpack.c.l.b16 %v1969
        %v2354 = vunpack.c.l.b16 %v1970
        %v2355 = vunpack.c.l.b16 %v1971
        %v2356 = vunpack.c.l.b16 %v1972
        %v2357 = vunpack.c.l.b16 %v1973
        %v2358 = vunpack.c.l.b16 %v1974
        %v2359 = vunpack.c.l.b16 %v1975
        %v2360 = vunpack.c.l.b16 %v1976
        %v2361 = vunpack.c.l.b16 %v1977
        %v2362 = vunpack.c.l.b16 %v1978
        %v2363 = vunpack.c.l.b16 %v1979
        %v2364 = vunpack.c.l.b16 %v1980
        %v2365 = vunpack.c.l.b16 %v1981
        %v2366 = vunpack.c.l.b16 %v1982
        %v2367 = vunpack.c.l.b16 %v1983
        %v2368 = vunpack.c.l.b16 %v1984
        %v2369 = vunpack.c.l.b16 %v1985
        %v2370 = vunpack.c.l.b16 %v1986
        %v2371 = vpack.c.b16 %v2324, %v2323
        %v2372 = vpack.c.b16 %v2326, %v2325
        %v2373 = vpack.c.b16 %v2328, %v2327
        %v2374 = vpack.c.b16 %v2330, %v2329
        %v2375 = vpack.c.b16 %v2332, %v2331
        %v2376 = vpack.c.b16 %v2334, %v2333
        %v2377 = vpack.c.b16 %v2336, %v2335
        %v2378 = vpack.c.b16 %v2338, %v2337
        %v2379 = vpack.c.b16 %v2340, %v2339
        %v2380 = vpack.c.b16 %v2342, %v2341
        %v2381 = vpack.c.b16 %v2344, %v2343
        %v2382 = vpack.c.b16 %v2346, %v2345
        %v2383 = vpack.c.b16 %v2348, %v2347
        %v2384 = vpack.c.b16 %v2350, %v2349
        %v2385 = vpack.c.b16 %v2352, %v2351
        %v2386 = vpack.c.b16 %v2354, %v2353
        %v2387 = vpack.c.b16 %v2356, %v2355
        %v2388 = vpack.c.b16 %v2358, %v2357
        %v2389 = vpack.c.b16 %v2360, %v2359
        %v2390 = vpack.c.b16 %v2362, %v2361
        %v2391 = vpack.c.b16 %v2364, %v2363
        %v2392 = vpack.c.b16 %v2366, %v2365
        %v2393 = vpack.c.b16 %v2368, %v2367
        %v2394 = vpack.c.b16 %v2370, %v2369
        %2419 = vmatprep.subr.bf16.mxu0 0
        %2420 = vmatpush1.bf16.msra.mxu0 %v2371
        %2421 = vmatprep.subr.bf16.mxu0 0
        %2422 = vmatpush1.bf16.msra.mxu0 %v2372
        %2423 = vmatprep.subr.bf16.mxu0 0
        %2424 = vmatpush1.bf16.msra.mxu0 %v2373
        %2425 = vmatprep.subr.bf16.mxu0 0
        %2426 = vmatpush1.bf16.msra.mxu0 %v2374
        %2427 = vmatprep.subr.bf16.mxu0 0
        %2428 = vmatpush1.bf16.msra.mxu0 %v2375
        %2429 = vmatprep.subr.bf16.mxu0 0
        %2430 = vmatpush1.bf16.msra.mxu0 %v2376
        %2431 = vmatprep.subr.bf16.mxu0 0
        %2432 = vmatpush1.bf16.msra.mxu0 %v2377
        %2433 = vmatprep.subr.bf16.mxu0 0
        %2434 = vmatpush1.bf16.msra.mxu0 %v2378
        %2435 = vmatprep.subr.bf16.mxu0 0
        %2436 = vmatpush1.bf16.msra.mxu0 %v2379
        %2437 = vmatprep.subr.bf16.mxu0 0
        %2438 = vmatpush1.bf16.msra.mxu0 %v2380
        %2439 = vmatprep.subr.bf16.mxu0 0
        %2440 = vmatpush1.bf16.msra.mxu0 %v2381
        %2441 = vmatprep.subr.bf16.mxu0 0
        %2442 = vmatpush1.bf16.msra.mxu0 %v2382
        %2443 = vmatprep.subr.bf16.mxu0 0
        %2444 = vmatpush1.bf16.msra.mxu0 %v2383
        %2445 = vmatprep.subr.bf16.mxu0 0
        %2446 = vmatpush1.bf16.msra.mxu0 %v2384
        %2447 = vmatprep.subr.bf16.mxu0 0
        %2448 = vmatpush1.bf16.msra.mxu0 %v2385
        %2449 = vmatprep.subr.bf16.mxu0 0
        %2450 = vmatpush1.bf16.msra.mxu0 %v2386
        %2451 = vmatprep.mubr.bf16.mxu0 %v2132
        %2452 = vmatmul.mubr.bf16.gmra.mrb[0].mxu0 %v2131
        %v2453 = vpop.f32.mrb[0].mxu0
        %v2454 = vadd.f32 0.0, %v2453
        %v2455 = vpop.f32.mrb[0].mxu0
        %v2456 = vpop.f32.mrb[0].mxu0
        %v2457 = vadd.f32 0.0, %v2456
        %v2458 = vpop.f32.mrb[0].mxu0
        %2459 = vmatprep.mubr.bf16.mxu0 %v2135
        %2460 = vmatmul.mubr.bf16.gmra.mrb[0].mxu0 %v2134
        %v2461 = vpop.f32.mrb[0].mxu0
        %v2462 = vadd.f32 0.0, %v2461
        %v2463 = vpop.f32.mrb[0].mxu0
        %v2464 = vpop.f32.mrb[0].mxu0
        %v2465 = vadd.f32 0.0, %v2464
        %v2466 = vpop.f32.mrb[0].mxu0
        %2467 = vmatprep.mubr.bf16.mxu0 %v2138
        %2468 = vmatmul.mubr.bf16.gmra.mrb[0].mxu0 %v2137
        %v2469 = vpop.f32.mrb[0].mxu0
        %v2470 = vadd.f32 0.0, %v2469
        %v2471 = vpop.f32.mrb[0].mxu0
        %v2472 = vpop.f32.mrb[0].mxu0
        %v2473 = vadd.f32 0.0, %v2472
        %v2474 = vpop.f32.mrb[0].mxu0
        %2475 = vmatprep.mubr.bf16.mxu0 %v2141
        %2476 = vmatmul.mubr.bf16.gmra.mrb[0].mxu0 %v2140
        %v2477 = vpop.f32.mrb[0].mxu0
        %v2478 = vadd.f32 0.0, %v2477
        %v2479 = vpop.f32.mrb[0].mxu0
        %v2480 = vpop.f32.mrb[0].mxu0
        %v2481 = vadd.f32 0.0, %v2480
        %v2482 = vpop.f32.mrb[0].mxu0
        %2483 = vmatprep.mubr.bf16.mxu0 %v2144
        %2484 = vmatmul.mubr.bf16.gmra.mrb[0].mxu0 %v2143
        %v2485 = vpop.f32.mrb[0].mxu0
        %v2486 = vadd.f32 0.0, %v2485
        %v2487 = vpop.f32.mrb[0].mxu0
        %v2488 = vpop.f32.mrb[0].mxu0
        %v2489 = vadd.f32 0.0, %v2488
        %v2490 = vpop.f32.mrb[0].mxu0
        %2491 = vmatprep.mubr.bf16.mxu0 %v2147
        %2492 = vmatmul.mubr.bf16.gmra.mrb[0].mxu0 %v2146
        %v2493 = vpop.f32.mrb[0].mxu0
        %v2494 = vadd.f32 0.0, %v2493
        %v2495 = vpop.f32.mrb[0].mxu0
        %v2496 = vpop.f32.mrb[0].mxu0
        %v2497 = vadd.f32 0.0, %v2496
        %v2498 = vpop.f32.mrb[0].mxu0
        %2499 = vmatprep.mubr.bf16.mxu0 %v2150
        %2500 = vmatmul.mubr.bf16.gmra.mrb[0].mxu0 %v2149
        %v2501 = vpop.f32.mrb[0].mxu0
        %v2502 = vadd.f32 0.0, %v2501
        %v2503 = vpop.f32.mrb[0].mxu0
        %v2504 = vpop.f32.mrb[0].mxu0
        %v2505 = vadd.f32 0.0, %v2504
        %v2506 = vpop.f32.mrb[0].mxu0
        %2507 = vmatprep.mubr.bf16.mxu0 %v2153
        %2508 = vmatmul.mubr.bf16.gmra.mrb[0].mxu0 %v2152
        %v2509 = vpop.f32.mrb[0].mxu0
        %v2510 = vadd.f32 0.0, %v2509
        %v2511 = vpop.f32.mrb[0].mxu0
        %v2512 = vpop.f32.mrb[0].mxu0
        %v2513 = vadd.f32 0.0, %v2512
        %v2514 = vpop.f32.mrb[0].mxu0
        %2515 = vmatprep.mubr.bf16.mxu0 %v2156
        %2516 = vmatmul.mubr.bf16.gmra.mrb[0].mxu0 %v2155
        %v2517 = vpop.f32.mrb[0].mxu0
        %v2518 = vadd.f32 0.0, %v2517
        %v2519 = vpop.f32.mrb[0].mxu0
        %v2520 = vpop.f32.mrb[0].mxu0
        %v2521 = vadd.f32 0.0, %v2520
        %v2522 = vpop.f32.mrb[0].mxu0
        %2523 = vmatprep.mubr.bf16.mxu0 %v2159
        %2524 = vmatmul.mubr.bf16.gmra.mrb[0].mxu0 %v2158
        %v2525 = vpop.f32.mrb[0].mxu0
        %v2526 = vadd.f32 0.0, %v2525
        %v2527 = vpop.f32.mrb[0].mxu0
        %v2528 = vpop.f32.mrb[0].mxu0
        %v2529 = vadd.f32 0.0, %v2528
        %v2530 = vpop.f32.mrb[0].mxu0
        %2531 = vmatprep.mubr.bf16.mxu0 %v2162
        %2532 = vmatmul.mubr.bf16.gmra.mrb[0].mxu0 %v2161
        %v2533 = vpop.f32.mrb[0].mxu0
        %v2534 = vadd.f32 0.0, %v2533
        %v2535 = vpop.f32.mrb[0].mxu0
        %v2536 = vpop.f32.mrb[0].mxu0
        %v2537 = vadd.f32 0.0, %v2536
        %v2538 = vpop.f32.mrb[0].mxu0
        %2539 = vmatprep.mubr.bf16.mxu0 %v2165
        %2540 = vmatmul.mubr.bf16.gmra.mrb[0].mxu0 %v2164
        %v2541 = vpop.f32.mrb[0].mxu0
        %v2542 = vadd.f32 0.0, %v2541
        %v2543 = vpop.f32.mrb[0].mxu0
        %v2544 = vpop.f32.mrb[0].mxu0
        %v2545 = vadd.f32 0.0, %v2544
        %v2546 = vpop.f32.mrb[0].mxu0
        %2547 = vmatprep.mubr.bf16.mxu0 %v2168
        %2548 = vmatmul.mubr.bf16.gmra.mrb[0].mxu0 %v2167
        %v2549 = vpop.f32.mrb[0].mxu0
        %v2550 = vadd.f32 0.0, %v2549
        %v2551 = vpop.f32.mrb[0].mxu0
        %v2552 = vpop.f32.mrb[0].mxu0
        %v2553 = vadd.f32 0.0, %v2552
        %v2554 = vpop.f32.mrb[0].mxu0
        %2555 = vmatprep.mubr.bf16.mxu0 %v2171
        %2556 = vmatmul.mubr.bf16.gmra.mrb[0].mxu0 %v2170
        %v2557 = vpop.f32.mrb[0].mxu0
        %v2558 = vadd.f32 0.0, %v2557
        %v2559 = vpop.f32.mrb[0].mxu0
        %v2560 = vpop.f32.mrb[0].mxu0
        %v2561 = vadd.f32 0.0, %v2560
        %v2562 = vpop.f32.mrb[0].mxu0
        %2563 = vmatprep.mubr.bf16.mxu0 %v2174
        %2564 = vmatmul.mubr.bf16.gmra.mrb[0].mxu0 %v2173
        %v2565 = vpop.f32.mrb[0].mxu0
        %v2566 = vadd.f32 0.0, %v2565
        %v2567 = vpop.f32.mrb[0].mxu0
        %v2568 = vpop.f32.mrb[0].mxu0
        %v2569 = vadd.f32 0.0, %v2568
        %v2570 = vpop.f32.mrb[0].mxu0
        %2571 = vmatprep.mubr.bf16.mxu0 %v2177
        %2572 = vmatmul.mubr.bf16.gmra.mrb[0].mxu0 %v2176
        %v2573 = vpop.f32.mrb[0].mxu0
        %v2574 = vadd.f32 0.0, %v2573
        %v2575 = vpop.f32.mrb[0].mxu0
        %v2576 = vpop.f32.mrb[0].mxu0
        %v2577 = vadd.f32 0.0, %v2576
        %v2578 = vpop.f32.mrb[0].mxu0
        %2579 = vmatprep.mubr.bf16.mxu0 %v2180
        %2580 = vmatmul.mubr.bf16.gmra.mrb[0].mxu0 %v2179
        %v2581 = vpop.f32.mrb[0].mxu0
        %v2582 = vadd.f32 0.0, %v2581
        %v2583 = vpop.f32.mrb[0].mxu0
        %v2584 = vpop.f32.mrb[0].mxu0
        %v2585 = vadd.f32 0.0, %v2584
        %v2586 = vpop.f32.mrb[0].mxu0
        %2587 = vmatprep.mubr.bf16.mxu0 %v2183
        %2588 = vmatmul.mubr.bf16.gmra.mrb[0].mxu0 %v2182
        %v2589 = vpop.f32.mrb[0].mxu0
        %v2590 = vadd.f32 0.0, %v2589
        %v2591 = vpop.f32.mrb[0].mxu0
        %v2592 = vpop.f32.mrb[0].mxu0
        %v2593 = vadd.f32 0.0, %v2592
        %v2594 = vpop.f32.mrb[0].mxu0
        %2595 = vmatprep.mubr.bf16.mxu0 %v2186
        %2596 = vmatmul.mubr.bf16.gmra.mrb[0].mxu0 %v2185
        %v2597 = vpop.f32.mrb[0].mxu0
        %v2598 = vadd.f32 0.0, %v2597
        %v2599 = vpop.f32.mrb[0].mxu0
        %v2600 = vpop.f32.mrb[0].mxu0
        %v2601 = vadd.f32 0.0, %v2600
        %v2602 = vpop.f32.mrb[0].mxu0
        %2603 = vmatprep.mubr.bf16.mxu0 %v2189
        %2604 = vmatmul.mubr.bf16.gmra.mrb[0].mxu0 %v2188
        %v2605 = vpop.f32.mrb[0].mxu0
        %v2606 = vadd.f32 0.0, %v2605
        %v2607 = vpop.f32.mrb[0].mxu0
        %v2608 = vpop.f32.mrb[0].mxu0
        %v2609 = vadd.f32 0.0, %v2608
        %v2610 = vpop.f32.mrb[0].mxu0
        %2611 = vmatprep.mubr.bf16.mxu0 %v2192
        %2612 = vmatmul.mubr.bf16.gmra.mrb[0].mxu0 %v2191
        %v2613 = vpop.f32.mrb[0].mxu0
        %v2614 = vadd.f32 0.0, %v2613
        %v2615 = vpop.f32.mrb[0].mxu0
        %v2616 = vpop.f32.mrb[0].mxu0
        %v2617 = vadd.f32 0.0, %v2616
        %v2618 = vpop.f32.mrb[0].mxu0
        %2619 = vmatprep.mubr.bf16.mxu0 %v2195
        %2620 = vmatmul.mubr.bf16.gmra.mrb[0].mxu0 %v2194
        %v2621 = vpop.f32.mrb[0].mxu0
        %v2622 = vadd.f32 0.0, %v2621
        %v2623 = vpop.f32.mrb[0].mxu0
        %v2624 = vpop.f32.mrb[0].mxu0
        %v2625 = vadd.f32 0.0, %v2624
        %v2626 = vpop.f32.mrb[0].mxu0
        %2627 = vmatprep.mubr.bf16.mxu0 %v2198
        %2628 = vmatmul.mubr.bf16.gmra.mrb[0].mxu0 %v2197
        %v2629 = vpop.f32.mrb[0].mxu0
        %v2630 = vadd.f32 0.0, %v2629
        %v2631 = vpop.f32.mrb[0].mxu0
        %v2632 = vpop.f32.mrb[0].mxu0
        %v2633 = vadd.f32 0.0, %v2632
        %v2634 = vpop.f32.mrb[0].mxu0
        %2635 = vmatprep.mubr.bf16.mxu0 %v2201
        %2636 = vmatmul.mubr.bf16.gmra.mrb[0].mxu0 %v2200
        %v2637 = vpop.f32.mrb[0].mxu0
        %v2638 = vadd.f32 0.0, %v2637
        %v2639 = vpop.f32.mrb[0].mxu0
        %v2640 = vpop.f32.mrb[0].mxu0
        %v2641 = vadd.f32 0.0, %v2640
        %v2642 = vpop.f32.mrb[0].mxu0
        %2643 = vdwg.mxu0
        %2644 = vmatprep.subr.bf16.mxu0 0
        %2645 = vmatpush1.bf16.msra.mxu0 %v2387
        %2646 = vmatprep.subr.bf16.mxu0 0
        %2647 = vmatpush1.bf16.msra.mxu0 %v2388
        %2648 = vmatprep.subr.bf16.mxu0 0
        %2649 = vmatpush1.bf16.msra.mxu0 %v2389
        %2650 = vmatprep.subr.bf16.mxu0 0
        %2651 = vmatpush1.bf16.msra.mxu0 %v2390
        %2652 = vmatprep.subr.bf16.mxu0 0
        %2653 = vmatpush1.bf16.msra.mxu0 %v2391
        %2654 = vmatprep.subr.bf16.mxu0 0
        %2655 = vmatpush1.bf16.msra.mxu0 %v2392
        %2656 = vmatprep.subr.bf16.mxu0 0
        %2657 = vmatpush1.bf16.msra.mxu0 %v2393
        %2658 = vmatprep.subr.bf16.mxu0 0
        %2659 = vmatpush1.bf16.msra.mxu0 %v2394
        %2660 = vmatprep.subr.bf16.mxu0 0
        %2661 = vmatpush1.bf16.msra.mxu0 0
        %2662 = vmatprep.subr.bf16.mxu0 0
        %2663 = vmatpush1.bf16.msra.mxu0 0
        %2664 = vmatprep.subr.bf16.mxu0 0
        %2665 = vmatpush1.bf16.msra.mxu0 0
        %2666 = vmatprep.subr.bf16.mxu0 0
        %2667 = vmatpush1.bf16.msra.mxu0 0
        %2668 = vmatprep.subr.bf16.mxu0 0
        %2669 = vmatpush1.bf16.msra.mxu0 0
        %2670 = vmatprep.subr.bf16.mxu0 0
        %2671 = vmatpush1.bf16.msra.mxu0 0
        %2672 = vmatprep.subr.bf16.mxu0 0
        %2673 = vmatpush1.bf16.msra.mxu0 0
        %2674 = vmatprep.subr.bf16.mxu0 0
        %2675 = vmatpush1.bf16.msra.mxu0 0
        %2676 = vmatprep.mubr.bf16.mxu0 0
        %2677 = vmatmul.mubr.bf16.gmra.mrb[0].mxu0 %v2133
        %v2678 = vpop.f32.mrb[0].mxu0
        %v2679 = vadd.f32 %v2454, %v2678
        %v2680 = vpop.f32.mrb[0].mxu0
        %v2681 = vpop.f32.mrb[0].mxu0
        %v2682 = vadd.f32 %v2457, %v2681
        %v2683 = vpop.f32.mrb[0].mxu0
        %2684 = vmatprep.mubr.bf16.mxu0 0
        %2685 = vmatmul.mubr.bf16.gmra.mrb[0].mxu0 %v2136
        %v2686 = vpop.f32.mrb[0].mxu0
        %v2687 = vadd.f32 %v2462, %v2686
        %v2688 = vpop.f32.mrb[0].mxu0
        %v2689 = vpop.f32.mrb[0].mxu0
        %v2690 = vadd.f32 %v2465, %v2689
        %v2691 = vpop.f32.mrb[0].mxu0
        %2692 = vmatprep.mubr.bf16.mxu0 0
        %2693 = vmatmul.mubr.bf16.gmra.mrb[0].mxu0 %v2139
        %v2694 = vpop.f32.mrb[0].mxu0
        %v2695 = vadd.f32 %v2470, %v2694
        %v2696 = vpop.f32.mrb[0].mxu0
        %v2697 = vpop.f32.mrb[0].mxu0
        %v2698 = vadd.f32 %v2473, %v2697
        %v2699 = vpop.f32.mrb[0].mxu0
        %2700 = vmatprep.mubr.bf16.mxu0 0
        %2701 = vmatmul.mubr.bf16.gmra.mrb[0].mxu0 %v2142
        %v2702 = vpop.f32.mrb[0].mxu0
        %v2703 = vadd.f32 %v2478, %v2702
        %v2704 = vpop.f32.mrb[0].mxu0
        %v2705 = vpop.f32.mrb[0].mxu0
        %v2706 = vadd.f32 %v2481, %v2705
        %v2707 = vpop.f32.mrb[0].mxu0
        %2708 = vmatprep.mubr.bf16.mxu0 0
        %2709 = vmatmul.mubr.bf16.gmra.mrb[0].mxu0 %v2145
        %v2710 = vpop.f32.mrb[0].mxu0
        %v2711 = vadd.f32 %v2486, %v2710
        %v2712 = vpop.f32.mrb[0].mxu0
        %v2713 = vpop.f32.mrb[0].mxu0
        %v2714 = vadd.f32 %v2489, %v2713
        %v2715 = vpop.f32.mrb[0].mxu0
        %2716 = vmatprep.mubr.bf16.mxu0 0
        %2717 = vmatmul.mubr.bf16.gmra.mrb[0].mxu0 %v2148
        %v2718 = vpop.f32.mrb[0].mxu0
        %v2719 = vadd.f32 %v2494, %v2718
        %v2720 = vpop.f32.mrb[0].mxu0
        %v2721 = vpop.f32.mrb[0].mxu0
        %v2722 = vadd.f32 %v2497, %v2721
        %v2723 = vpop.f32.mrb[0].mxu0
        %2724 = vmatprep.mubr.bf16.mxu0 0
        %2725 = vmatmul.mubr.bf16.gmra.mrb[0].mxu0 %v2151
        %v2726 = vpop.f32.mrb[0].mxu0
        %v2727 = vadd.f32 %v2502, %v2726
        %v2728 = vpop.f32.mrb[0].mxu0
        %v2729 = vpop.f32.mrb[0].mxu0
        %v2730 = vadd.f32 %v2505, %v2729
        %v2731 = vpop.f32.mrb[0].mxu0
        %2732 = vmatprep.mubr.bf16.mxu0 0
        %2733 = vmatmul.mubr.bf16.gmra.mrb[0].mxu0 %v2154
        %v2734 = vpop.f32.mrb[0].mxu0
        %v2735 = vadd.f32 %v2510, %v2734
        %v2736 = vpop.f32.mrb[0].mxu0
        %v2737 = vpop.f32.mrb[0].mxu0
        %v2738 = vadd.f32 %v2513, %v2737
        %v2739 = vpop.f32.mrb[0].mxu0
        %2740 = vmatprep.mubr.bf16.mxu0 0
        %2741 = vmatmul.mubr.bf16.gmra.mrb[0].mxu0 %v2157
        %v2742 = vpop.f32.mrb[0].mxu0
        %v2743 = vadd.f32 %v2518, %v2742
        %v2744 = vpop.f32.mrb[0].mxu0
        %v2745 = vpop.f32.mrb[0].mxu0
        %v2746 = vadd.f32 %v2521, %v2745
        %v2747 = vpop.f32.mrb[0].mxu0
        %2748 = vmatprep.mubr.bf16.mxu0 0
        %2749 = vmatmul.mubr.bf16.gmra.mrb[0].mxu0 %v2160
        %v2750 = vpop.f32.mrb[0].mxu0
        %v2751 = vadd.f32 %v2526, %v2750
        %v2752 = vpop.f32.mrb[0].mxu0
        %v2753 = vpop.f32.mrb[0].mxu0
        %v2754 = vadd.f32 %v2529, %v2753
        %v2755 = vpop.f32.mrb[0].mxu0
        %2756 = vmatprep.mubr.bf16.mxu0 0
        %2757 = vmatmul.mubr.bf16.gmra.mrb[0].mxu0 %v2163
        %v2758 = vpop.f32.mrb[0].mxu0
        %v2759 = vadd.f32 %v2534, %v2758
        %v2760 = vpop.f32.mrb[0].mxu0
        %v2761 = vpop.f32.mrb[0].mxu0
        %v2762 = vadd.f32 %v2537, %v2761
        %v2763 = vpop.f32.mrb[0].mxu0
        %2764 = vmatprep.mubr.bf16.mxu0 0
        %2765 = vmatmul.mubr.bf16.gmra.mrb[0].mxu0 %v2166
        %v2766 = vpop.f32.mrb[0].mxu0
        %v2767 = vadd.f32 %v2542, %v2766
        %v2768 = vpop.f32.mrb[0].mxu0
        %v2769 = vpop.f32.mrb[0].mxu0
        %v2770 = vadd.f32 %v2545, %v2769
        %v2771 = vpop.f32.mrb[0].mxu0
        %2772 = vmatprep.mubr.bf16.mxu0 0
        %2773 = vmatmul.mubr.bf16.gmra.mrb[0].mxu0 %v2169
        %v2774 = vpop.f32.mrb[0].mxu0
        %v2775 = vadd.f32 %v2550, %v2774
        %v2776 = vpop.f32.mrb[0].mxu0
        %v2777 = vpop.f32.mrb[0].mxu0
        %v2778 = vadd.f32 %v2553, %v2777
        %v2779 = vpop.f32.mrb[0].mxu0
        %2780 = vmatprep.mubr.bf16.mxu0 0
        %2781 = vmatmul.mubr.bf16.gmra.mrb[0].mxu0 %v2172
        %v2782 = vpop.f32.mrb[0].mxu0
        %v2783 = vadd.f32 %v2558, %v2782
        %v2784 = vpop.f32.mrb[0].mxu0
        %v2785 = vpop.f32.mrb[0].mxu0
        %v2786 = vadd.f32 %v2561, %v2785
        %v2787 = vpop.f32.mrb[0].mxu0
        %2788 = vmatprep.mubr.bf16.mxu0 0
        %2789 = vmatmul.mubr.bf16.gmra.mrb[0].mxu0 %v2175
        %v2790 = vpop.f32.mrb[0].mxu0
        %v2791 = vadd.f32 %v2566, %v2790
        %v2792 = vpop.f32.mrb[0].mxu0
        %v2793 = vpop.f32.mrb[0].mxu0
        %v2794 = vadd.f32 %v2569, %v2793
        %v2795 = vpop.f32.mrb[0].mxu0
        %2796 = vmatprep.mubr.bf16.mxu0 0
        %2797 = vmatmul.mubr.bf16.gmra.mrb[0].mxu0 %v2178
        %v2798 = vpop.f32.mrb[0].mxu0
        %v2799 = vadd.f32 %v2574, %v2798
        %v2800 = vpop.f32.mrb[0].mxu0
        %v2801 = vpop.f32.mrb[0].mxu0
        %v2802 = vadd.f32 %v2577, %v2801
        %v2803 = vpop.f32.mrb[0].mxu0
        %2804 = vmatprep.mubr.bf16.mxu0 0
        %2805 = vmatmul.mubr.bf16.gmra.mrb[0].mxu0 %v2181
        %v2806 = vpop.f32.mrb[0].mxu0
        %v2807 = vadd.f32 %v2582, %v2806
        %v2808 = vpop.f32.mrb[0].mxu0
        %v2809 = vpop.f32.mrb[0].mxu0
        %v2810 = vadd.f32 %v2585, %v2809
        %v2811 = vpop.f32.mrb[0].mxu0
        %2812 = vmatprep.mubr.bf16.mxu0 0
        %2813 = vmatmul.mubr.bf16.gmra.mrb[0].mxu0 %v2184
        %v2814 = vpop.f32.mrb[0].mxu0
        %v2815 = vadd.f32 %v2590, %v2814
        %v2816 = vpop.f32.mrb[0].mxu0
        %v2817 = vpop.f32.mrb[0].mxu0
        %v2818 = vadd.f32 %v2593, %v2817
        %v2819 = vpop.f32.mrb[0].mxu0
        %2820 = vmatprep.mubr.bf16.mxu0 0
        %2821 = vmatmul.mubr.bf16.gmra.mrb[0].mxu0 %v2187
        %v2822 = vpop.f32.mrb[0].mxu0
        %v2823 = vadd.f32 %v2598, %v2822
        %v2824 = vpop.f32.mrb[0].mxu0
        %v2825 = vpop.f32.mrb[0].mxu0
        %v2826 = vadd.f32 %v2601, %v2825
        %v2827 = vpop.f32.mrb[0].mxu0
        %2828 = vmatprep.mubr.bf16.mxu0 0
        %2829 = vmatmul.mubr.bf16.gmra.mrb[0].mxu0 %v2190
        %v2830 = vpop.f32.mrb[0].mxu0
        %v2831 = vadd.f32 %v2606, %v2830
        %v2832 = vpop.f32.mrb[0].mxu0
        %v2833 = vpop.f32.mrb[0].mxu0
        %v2834 = vadd.f32 %v2609, %v2833
        %v2835 = vpop.f32.mrb[0].mxu0
        %2836 = vmatprep.mubr.bf16.mxu0 0
        %2837 = vmatmul.mubr.bf16.gmra.mrb[0].mxu0 %v2193
        %v2838 = vpop.f32.mrb[0].mxu0
        %v2839 = vadd.f32 %v2614, %v2838
        %v2840 = vpop.f32.mrb[0].mxu0
        %v2841 = vpop.f32.mrb[0].mxu0
        %v2842 = vadd.f32 %v2617, %v2841
        %v2843 = vpop.f32.mrb[0].mxu0
        %2844 = vmatprep.mubr.bf16.mxu0 0
        %2845 = vmatmul.mubr.bf16.gmra.mrb[0].mxu0 %v2196
        %v2846 = vpop.f32.mrb[0].mxu0
        %v2847 = vadd.f32 %v2622, %v2846
        %v2848 = vpop.f32.mrb[0].mxu0
        %v2849 = vpop.f32.mrb[0].mxu0
        %v2850 = vadd.f32 %v2625, %v2849
        %v2851 = vpop.f32.mrb[0].mxu0
        %2852 = vmatprep.mubr.bf16.mxu0 0
        %2853 = vmatmul.mubr.bf16.gmra.mrb[0].mxu0 %v2199
        %v2854 = vpop.f32.mrb[0].mxu0
        %v2855 = vadd.f32 %v2630, %v2854
        %v2856 = vpop.f32.mrb[0].mxu0
        %v2857 = vpop.f32.mrb[0].mxu0
        %v2858 = vadd.f32 %v2633, %v2857
        %v2859 = vpop.f32.mrb[0].mxu0
        %2860 = vmatprep.mubr.bf16.mxu0 0
        %2861 = vmatmul.mubr.bf16.gmra.mrb[0].mxu0 %v2202
        %v2862 = vpop.f32.mrb[0].mxu0
        %v2863 = vadd.f32 %v2638, %v2862
        %v2864 = vpop.f32.mrb[0].mxu0
        %v2865 = vpop.f32.mrb[0].mxu0
        %v2866 = vadd.f32 %v2641, %v2865
        %v2867 = vpop.f32.mrb[0].mxu0
        %2868 = vdwg.mxu0
        %v2869 = vld [vmem:[%s3] sm:$0x1]
        %v2871 = vlaneseq
        %v2872 = vshrl.u32 %v2871, 7
        %v2873 = vsub.s32 0, %v2872
        %v2874 = vrot.slane %v2869, %v2873
        %v2876 = vadd.f32 %v2679, %v2874
        %v2877 = vadd.f32 %v2682, %v2874
        %v2878 = vadd.f32 %v2687, %v2874
        %v2879 = vadd.f32 %v2690, %v2874
        %v2880 = vadd.f32 %v2695, %v2874
        %v2881 = vadd.f32 %v2698, %v2874
        %v2882 = vadd.f32 %v2703, %v2874
        %v2883 = vadd.f32 %v2706, %v2874
        %v2884 = vadd.f32 %v2711, %v2874
        %v2885 = vadd.f32 %v2714, %v2874
        %v2886 = vadd.f32 %v2719, %v2874
        %v2887 = vadd.f32 %v2722, %v2874
        %v2888 = vadd.f32 %v2727, %v2874
        %v2889 = vadd.f32 %v2730, %v2874
        %v2890 = vadd.f32 %v2735, %v2874
        %v2891 = vadd.f32 %v2738, %v2874
        %v2892 = vadd.f32 %v2743, %v2874
        %v2893 = vadd.f32 %v2746, %v2874
        %v2894 = vadd.f32 %v2751, %v2874
        %v2895 = vadd.f32 %v2754, %v2874
        %v2896 = vadd.f32 %v2759, %v2874
        %v2897 = vadd.f32 %v2762, %v2874
        %v2898 = vadd.f32 %v2767, %v2874
        %v2899 = vadd.f32 %v2770, %v2874
        %v2900 = vadd.f32 %v2775, %v2874
        %v2901 = vadd.f32 %v2778, %v2874
        %v2902 = vadd.f32 %v2783, %v2874
        %v2903 = vadd.f32 %v2786, %v2874
        %v2904 = vadd.f32 %v2791, %v2874
        %v2905 = vadd.f32 %v2794, %v2874
        %v2906 = vadd.f32 %v2799, %v2874
        %v2907 = vadd.f32 %v2802, %v2874
        %v2908 = vadd.f32 %v2807, %v2874
        %v2909 = vadd.f32 %v2810, %v2874
        %v2910 = vadd.f32 %v2815, %v2874
        %v2911 = vadd.f32 %v2818, %v2874
        %v2912 = vadd.f32 %v2823, %v2874
        %v2913 = vadd.f32 %v2826, %v2874
        %v2914 = vadd.f32 %v2831, %v2874
        %v2915 = vadd.f32 %v2834, %v2874
        %v2916 = vadd.f32 %v2839, %v2874
        %v2917 = vadd.f32 %v2842, %v2874
        %v2918 = vadd.f32 %v2847, %v2874
        %v2919 = vadd.f32 %v2850, %v2874
        %v2920 = vadd.f32 %v2855, %v2874
        %v2921 = vadd.f32 %v2858, %v2874
        %v2922 = vadd.f32 %v2863, %v2874
        %v2923 = vadd.f32 %v2866, %v2874
        %v2924 = vmax.f32 %v2876, 0.0
        %v2925 = vmax.f32 %v2877, 0.0
        %v2926 = vmax.f32 %v2878, 0.0
        %v2927 = vmax.f32 %v2879, 0.0
        %v2928 = vmax.f32 %v2880, 0.0
        %v2929 = vmax.f32 %v2881, 0.0
        %v2930 = vmax.f32 %v2882, 0.0
        %v2931 = vmax.f32 %v2883, 0.0
        %v2932 = vmax.f32 %v2884, 0.0
        %v2933 = vmax.f32 %v2885, 0.0
        %v2934 = vmax.f32 %v2886, 0.0
        %v2935 = vmax.f32 %v2887, 0.0
        %v2936 = vmax.f32 %v2888, 0.0
        %v2937 = vmax.f32 %v2889, 0.0
        %v2938 = vmax.f32 %v2890, 0.0
        %v2939 = vmax.f32 %v2891, 0.0
        %v2940 = vmax.f32 %v2892, 0.0
        %v2941 = vmax.f32 %v2893, 0.0
        %v2942 = vmax.f32 %v2894, 0.0
        %v2943 = vmax.f32 %v2895, 0.0
        %v2944 = vmax.f32 %v2896, 0.0
        %v2945 = vmax.f32 %v2897, 0.0
        %v2946 = vmax.f32 %v2898, 0.0
        %v2947 = vmax.f32 %v2899, 0.0
        %v2948 = vmax.f32 %v2900, 0.0
        %v2949 = vmax.f32 %v2901, 0.0
        %v2950 = vmax.f32 %v2902, 0.0
        %v2951 = vmax.f32 %v2903, 0.0
        %v2952 = vmax.f32 %v2904, 0.0
        %v2953 = vmax.f32 %v2905, 0.0
        %v2954 = vmax.f32 %v2906, 0.0
        %v2955 = vmax.f32 %v2907, 0.0
        %v2956 = vmax.f32 %v2908, 0.0
        %v2957 = vmax.f32 %v2909, 0.0
        %v2958 = vmax.f32 %v2910, 0.0
        %v2959 = vmax.f32 %v2911, 0.0
        %v2960 = vmax.f32 %v2912, 0.0
        %v2961 = vmax.f32 %v2913, 0.0
        %v2962 = vmax.f32 %v2914, 0.0
        %v2963 = vmax.f32 %v2915, 0.0
        %v2964 = vmax.f32 %v2916, 0.0
        %v2965 = vmax.f32 %v2917, 0.0
        %v2966 = vmax.f32 %v2918, 0.0
        %v2967 = vmax.f32 %v2919, 0.0
        %v2968 = vmax.f32 %v2920, 0.0
        %v2969 = vmax.f32 %v2921, 0.0
        %v2970 = vmax.f32 %v2922, 0.0
        %v2971 = vmax.f32 %v2923, 0.0
        %v2972 = vpack.c.bf16 %v2924, %v2924
        %v2973 = vpack.c.bf16 %v2925, %v2925
        %v2974 = vpack.c.bf16 %v2926, %v2926
        %v2975 = vpack.c.bf16 %v2927, %v2927
        %v2976 = vpack.c.bf16 %v2928, %v2928
        %v2977 = vpack.c.bf16 %v2929, %v2929
        %v2978 = vpack.c.bf16 %v2930, %v2930
        %v2979 = vpack.c.bf16 %v2931, %v2931
        %v2980 = vpack.c.bf16 %v2932, %v2932
        %v2981 = vpack.c.bf16 %v2933, %v2933
        %v2982 = vpack.c.bf16 %v2934, %v2934
        %v2983 = vpack.c.bf16 %v2935, %v2935
        %v2984 = vpack.c.bf16 %v2936, %v2936
        %v2985 = vpack.c.bf16 %v2937, %v2937
        %v2986 = vpack.c.bf16 %v2938, %v2938
        %v2987 = vpack.c.bf16 %v2939, %v2939
        %v2988 = vpack.c.bf16 %v2940, %v2940
        %v2989 = vpack.c.bf16 %v2941, %v2941
        %v2990 = vpack.c.bf16 %v2942, %v2942
        %v2991 = vpack.c.bf16 %v2943, %v2943
        %v2992 = vpack.c.bf16 %v2944, %v2944
        %v2993 = vpack.c.bf16 %v2945, %v2945
        %v2994 = vpack.c.bf16 %v2946, %v2946
        %v2995 = vpack.c.bf16 %v2947, %v2947
        %v2996 = vpack.c.bf16 %v2948, %v2948
        %v2997 = vpack.c.bf16 %v2949, %v2949
        %v2998 = vpack.c.bf16 %v2950, %v2950
        %v2999 = vpack.c.bf16 %v2951, %v2951
        %v3000 = vpack.c.bf16 %v2952, %v2952
        %v3001 = vpack.c.bf16 %v2953, %v2953
        %v3002 = vpack.c.bf16 %v2954, %v2954
        %v3003 = vpack.c.bf16 %v2955, %v2955
        %v3004 = vpack.c.bf16 %v2956, %v2956
        %v3005 = vpack.c.bf16 %v2957, %v2957
        %v3006 = vpack.c.bf16 %v2958, %v2958
        %v3007 = vpack.c.bf16 %v2959, %v2959
        %v3008 = vpack.c.bf16 %v2960, %v2960
        %v3009 = vpack.c.bf16 %v2961, %v2961
        %v3010 = vpack.c.bf16 %v2962, %v2962
        %v3011 = vpack.c.bf16 %v2963, %v2963
        %v3012 = vpack.c.bf16 %v2964, %v2964
        %v3013 = vpack.c.bf16 %v2965, %v2965
        %v3014 = vpack.c.bf16 %v2966, %v2966
        %v3015 = vpack.c.bf16 %v2967, %v2967
        %v3016 = vpack.c.bf16 %v2968, %v2968
        %v3017 = vpack.c.bf16 %v2969, %v2969
        %v3018 = vpack.c.bf16 %v2970, %v2970
        %v3019 = vpack.c.bf16 %v2971, %v2971
        %v3020 = vld [vmem:[#allocation9] sm:$0xf]
        %v3021 = vld [vmem:[#allocation9 + $0x4] sm:$0xf]
        %v3022 = vld [vmem:[#allocation9 + $0x8] sm:$0xf]
        %v3023 = vld [vmem:[#allocation9 + $0xc] sm:$0xf]
        %v3024 = vld [vmem:[#allocation9 + $0x10] sm:$0xf]
        %v3025 = vld [vmem:[#allocation9 + $0x14] sm:$0xf]
        %v3026 = vld [vmem:[#allocation9 + $0x18] sm:$0xf]
        %v3027 = vld [vmem:[#allocation9 + $0x1c] sm:$0xf]
        %v3028 = vld [vmem:[#allocation9 + $0x20] sm:$0xf]
        %v3029 = vld [vmem:[#allocation9 + $0x24] sm:$0xf]
        %v3030 = vld [vmem:[#allocation9 + $0x28] sm:$0xf]
        %v3031 = vld [vmem:[#allocation9 + $0x2c] sm:$0xf]
        %v3032 = vld [vmem:[#allocation9 + $0x30] sm:$0xf]
        %v3033 = vld [vmem:[#allocation9 + $0x34] sm:$0xf]
        %v3034 = vld [vmem:[#allocation9 + $0x38] sm:$0xf]
        %v3035 = vld [vmem:[#allocation9 + $0x3c] sm:$0xf]
        %v3036 = vld [vmem:[#allocation9 + $0x40] sm:$0xf]
        %v3037 = vld [vmem:[#allocation9 + $0x44] sm:$0xf]
        %v3038 = vld [vmem:[#allocation9 + $0x48] sm:$0xf]
        %v3039 = vld [vmem:[#allocation9 + $0x4c] sm:$0xf]
        %v3040 = vld [vmem:[#allocation9 + $0x50] sm:$0xf]
        %v3041 = vld [vmem:[#allocation9 + $0x54] sm:$0xf]
        %v3042 = vld [vmem:[#allocation9 + $0x58] sm:$0xf]
        %v3043 = vld [vmem:[#allocation9 + $0x5c] sm:$0xf]
        %v3044 = vld [vmem:[#allocation9 + $0x60] sm:$0xf]
        %v3045 = vld [vmem:[#allocation9 + $0x64] sm:$0xf]
        %v3046 = vld [vmem:[#allocation9 + $0x68] sm:$0xf]
        %v3047 = vld [vmem:[#allocation9 + $0x6c] sm:$0xf]
        %v3048 = vld [vmem:[#allocation9 + $0x70] sm:$0xf]
        %v3049 = vld [vmem:[#allocation9 + $0x74] sm:$0xf]
        %v3050 = vld [vmem:[#allocation9 + $0x78] sm:$0xf]
        %v3051 = vld [vmem:[#allocation9 + $0x7c] sm:$0xf]
        %v3052 = vld [vmem:[#allocation9 + $0x80] sm:$0xf]
        %v3053 = vld [vmem:[#allocation9 + $0x84] sm:$0xf]
        %v3054 = vld [vmem:[#allocation9 + $0x88] sm:$0xf]
        %v3055 = vld [vmem:[#allocation9 + $0x8c] sm:$0xf]
        %v3056 = vld [vmem:[#allocation9 + $0x90] sm:$0xf]
        %v3057 = vld [vmem:[#allocation9 + $0x94] sm:$0xf]
        %v3058 = vld [vmem:[#allocation9 + $0x98] sm:$0xf]
        %v3059 = vld [vmem:[#allocation9 + $0x9c] sm:$0xf]
        %v3060 = vld [vmem:[#allocation9 + $0xa0] sm:$0xf]
        %v3061 = vld [vmem:[#allocation9 + $0xa4] sm:$0xf]
        %v3062 = vld [vmem:[#allocation9 + $0xa8] sm:$0xf]
        %v3063 = vld [vmem:[#allocation9 + $0xac] sm:$0xf]
        %v3064 = vld [vmem:[#allocation9 + $0xb0] sm:$0xf]
        %v3065 = vld [vmem:[#allocation9 + $0xb4] sm:$0xf]
        %v3066 = vld [vmem:[#allocation9 + $0xb8] sm:$0xf]
        %v3067 = vld [vmem:[#allocation9 + $0xbc] sm:$0xf]
        %v3117 = vunpack.c.l.b16 0
        %v3118 = vunpack.c.l.b16 %v2972
        %v3119 = vunpack.c.l.b16 %v2973
        %v3120 = vunpack.c.l.b16 %v2974
        %v3121 = vunpack.c.l.b16 %v2975
        %v3122 = vunpack.c.l.b16 %v2976
        %v3123 = vunpack.c.l.b16 %v2977
        %v3124 = vunpack.c.l.b16 %v2978
        %v3125 = vunpack.c.l.b16 %v2979
        %v3126 = vunpack.c.l.b16 %v2980
        %v3127 = vunpack.c.l.b16 %v2981
        %v3128 = vunpack.c.l.b16 %v2982
        %v3129 = vunpack.c.l.b16 %v2983
        %v3130 = vunpack.c.l.b16 %v2984
        %v3131 = vunpack.c.l.b16 %v2985
        %v3132 = vunpack.c.l.b16 %v2986
        %v3133 = vunpack.c.l.b16 %v2987
        %v3134 = vunpack.c.l.b16 %v2988
        %v3135 = vunpack.c.l.b16 %v2989
        %v3136 = vunpack.c.l.b16 %v2990
        %v3137 = vunpack.c.l.b16 %v2991
        %v3138 = vunpack.c.l.b16 %v2992
        %v3139 = vunpack.c.l.b16 %v2993
        %v3140 = vunpack.c.l.b16 %v2994
        %v3141 = vunpack.c.l.b16 %v2995
        %v3142 = vunpack.c.l.b16 %v2996
        %v3143 = vunpack.c.l.b16 %v2997
        %v3144 = vunpack.c.l.b16 %v2998
        %v3145 = vunpack.c.l.b16 %v2999
        %v3146 = vunpack.c.l.b16 %v3000
        %v3147 = vunpack.c.l.b16 %v3001
        %v3148 = vunpack.c.l.b16 %v3002
        %v3149 = vunpack.c.l.b16 %v3003
        %v3150 = vunpack.c.l.b16 %v3004
        %v3151 = vunpack.c.l.b16 %v3005
        %v3152 = vunpack.c.l.b16 %v3006
        %v3153 = vunpack.c.l.b16 %v3007
        %v3154 = vunpack.c.l.b16 %v3008
        %v3155 = vunpack.c.l.b16 %v3009
        %v3156 = vunpack.c.l.b16 %v3010
        %v3157 = vunpack.c.l.b16 %v3011
        %v3158 = vunpack.c.l.b16 %v3012
        %v3159 = vunpack.c.l.b16 %v3013
        %v3160 = vunpack.c.l.b16 %v3014
        %v3161 = vunpack.c.l.b16 %v3015
        %v3162 = vunpack.c.l.b16 %v3016
        %v3163 = vunpack.c.l.b16 %v3017
        %v3164 = vunpack.c.l.b16 %v3018
        %v3165 = vunpack.c.l.b16 %v3019
        %v3166 = vpack.c.b16 %v3118, %v3117
        %v3167 = vpack.c.b16 %v3119, %v3118
        %v3168 = vpack.c.b16 %v3120, %v3119
        %v3169 = vpack.c.b16 %v3121, %v3120
        %v3170 = vpack.c.b16 %v3122, %v3121
        %v3171 = vpack.c.b16 %v3123, %v3122
        %v3172 = vpack.c.b16 %v3124, %v3123
        %v3173 = vpack.c.b16 %v3125, %v3124
        %v3174 = vpack.c.b16 %v3117, %v3125
        %v3175 = vpack.c.b16 %v3126, %v3117
        %v3176 = vpack.c.b16 %v3127, %v3126
        %v3177 = vpack.c.b16 %v3128, %v3127
        %v3178 = vpack.c.b16 %v3129, %v3128
        %v3179 = vpack.c.b16 %v3130, %v3129
        %v3180 = vpack.c.b16 %v3131, %v3130
        %v3181 = vpack.c.b16 %v3132, %v3131
        %v3182 = vpack.c.b16 %v3133, %v3132
        %v3183 = vpack.c.b16 %v3117, %v3133
        %v3184 = vpack.c.b16 %v3134, %v3117
        %v3185 = vpack.c.b16 %v3135, %v3134
        %v3186 = vpack.c.b16 %v3136, %v3135
        %v3187 = vpack.c.b16 %v3137, %v3136
        %v3188 = vpack.c.b16 %v3138, %v3137
        %v3189 = vpack.c.b16 %v3139, %v3138
        %v3190 = vpack.c.b16 %v3140, %v3139
        %v3191 = vpack.c.b16 %v3141, %v3140
        %v3192 = vpack.c.b16 %v3117, %v3141
        %v3193 = vpack.c.b16 %v3142, %v3117
        %v3194 = vpack.c.b16 %v3143, %v3142
        %v3195 = vpack.c.b16 %v3144, %v3143
        %v3196 = vpack.c.b16 %v3145, %v3144
        %v3197 = vpack.c.b16 %v3146, %v3145
        %v3198 = vpack.c.b16 %v3147, %v3146
        %v3199 = vpack.c.b16 %v3148, %v3147
        %v3200 = vpack.c.b16 %v3149, %v3148
        %v3201 = vpack.c.b16 %v3117, %v3149
        %v3202 = vpack.c.b16 %v3150, %v3117
        %v3203 = vpack.c.b16 %v3151, %v3150
        %v3204 = vpack.c.b16 %v3152, %v3151
        %v3205 = vpack.c.b16 %v3153, %v3152
        %v3206 = vpack.c.b16 %v3154, %v3153
        %v3207 = vpack.c.b16 %v3155, %v3154
        %v3208 = vpack.c.b16 %v3156, %v3155
        %v3209 = vpack.c.b16 %v3157, %v3156
        %v3210 = vpack.c.b16 %v3117, %v3157
        %v3211 = vpack.c.b16 %v3158, %v3117
        %v3212 = vpack.c.b16 %v3159, %v3158
        %v3213 = vpack.c.b16 %v3160, %v3159
        %v3214 = vpack.c.b16 %v3161, %v3160
        %v3215 = vpack.c.b16 %v3162, %v3161
        %v3216 = vpack.c.b16 %v3163, %v3162
        %v3217 = vpack.c.b16 %v3164, %v3163
        %v3218 = vpack.c.b16 %v3165, %v3164
        %v3219 = vpack.c.b16 %v3117, %v3165
        %v3322 = vunpack.c.l.b16 %v3020
        %v3323 = vunpack.c.l.b16 %v3021
        %v3324 = vunpack.c.l.b16 %v3022
        %v3325 = vunpack.c.l.b16 %v3023
        %v3326 = vunpack.c.l.b16 %v3024
        %v3327 = vunpack.c.l.b16 %v3025
        %v3328 = vunpack.c.l.b16 %v3026
        %v3329 = vunpack.c.l.b16 %v3027
        %v3330 = vunpack.c.l.b16 %v3028
        %v3331 = vunpack.c.l.b16 %v3029
        %v3332 = vunpack.c.l.b16 %v3030
        %v3333 = vunpack.c.l.b16 %v3031
        %v3334 = vunpack.c.l.b16 %v3032
        %v3335 = vunpack.c.l.b16 %v3033
        %v3336 = vunpack.c.l.b16 %v3034
        %v3337 = vunpack.c.l.b16 %v3035
        %v3338 = vunpack.c.l.b16 %v3036
        %v3339 = vunpack.c.l.b16 %v3037
        %v3340 = vunpack.c.l.b16 %v3038
        %v3341 = vunpack.c.l.b16 %v3039
        %v3342 = vunpack.c.l.b16 %v3040
        %v3343 = vunpack.c.l.b16 %v3041
        %v3344 = vunpack.c.l.b16 %v3042
        %v3345 = vunpack.c.l.b16 %v3043
        %v3346 = vunpack.c.l.b16 %v3044
        %v3347 = vunpack.c.l.b16 %v3045
        %v3348 = vunpack.c.l.b16 %v3046
        %v3349 = vunpack.c.l.b16 %v3047
        %v3350 = vunpack.c.l.b16 %v3048
        %v3351 = vunpack.c.l.b16 %v3049
        %v3352 = vunpack.c.l.b16 %v3050
        %v3353 = vunpack.c.l.b16 %v3051
        %v3354 = vunpack.c.l.b16 %v3052
        %v3355 = vunpack.c.l.b16 %v3053
        %v3356 = vunpack.c.l.b16 %v3054
        %v3357 = vunpack.c.l.b16 %v3055
        %v3358 = vunpack.c.l.b16 %v3056
        %v3359 = vunpack.c.l.b16 %v3057
        %v3360 = vunpack.c.l.b16 %v3058
        %v3361 = vunpack.c.l.b16 %v3059
        %v3362 = vunpack.c.l.b16 %v3060
        %v3363 = vunpack.c.l.b16 %v3061
        %v3364 = vunpack.c.l.b16 %v3062
        %v3365 = vunpack.c.l.b16 %v3063
        %v3366 = vunpack.c.l.b16 %v3064
        %v3367 = vunpack.c.l.b16 %v3065
        %v3368 = vunpack.c.l.b16 %v3066
        %v3369 = vunpack.c.l.b16 %v3067
        %v3370 = vpack.c.b16 %v3323, %v3322
        %v3371 = vpack.c.b16 %v3325, %v3324
        %v3372 = vpack.c.b16 %v3327, %v3326
        %v3373 = vpack.c.b16 %v3329, %v3328
        %v3374 = vpack.c.b16 %v3331, %v3330
        %v3375 = vpack.c.b16 %v3333, %v3332
        %v3376 = vpack.c.b16 %v3335, %v3334
        %v3377 = vpack.c.b16 %v3337, %v3336
        %v3378 = vpack.c.b16 %v3339, %v3338
        %v3379 = vpack.c.b16 %v3341, %v3340
        %v3380 = vpack.c.b16 %v3343, %v3342
        %v3381 = vpack.c.b16 %v3345, %v3344
        %v3382 = vpack.c.b16 %v3347, %v3346
        %v3383 = vpack.c.b16 %v3349, %v3348
        %v3384 = vpack.c.b16 %v3351, %v3350
        %v3385 = vpack.c.b16 %v3353, %v3352
        %v3386 = vpack.c.b16 %v3355, %v3354
        %v3387 = vpack.c.b16 %v3357, %v3356
        %v3388 = vpack.c.b16 %v3359, %v3358
        %v3389 = vpack.c.b16 %v3361, %v3360
        %v3390 = vpack.c.b16 %v3363, %v3362
        %v3391 = vpack.c.b16 %v3365, %v3364
        %v3392 = vpack.c.b16 %v3367, %v3366
        %v3393 = vpack.c.b16 %v3369, %v3368
        %3418 = vmatprep.subr.bf16.mxu0 0
        %3419 = vmatpush1.bf16.msra.mxu0 %v3370
        %3420 = vmatprep.subr.bf16.mxu0 0
        %3421 = vmatpush1.bf16.msra.mxu0 %v3371
        %3422 = vmatprep.subr.bf16.mxu0 0
        %3423 = vmatpush1.bf16.msra.mxu0 %v3372
        %3424 = vmatprep.subr.bf16.mxu0 0
        %3425 = vmatpush1.bf16.msra.mxu0 %v3373
        %3426 = vmatprep.subr.bf16.mxu0 0
        %3427 = vmatpush1.bf16.msra.mxu0 %v3374
        %3428 = vmatprep.subr.bf16.mxu0 0
        %3429 = vmatpush1.bf16.msra.mxu0 %v3375
        %3430 = vmatprep.subr.bf16.mxu0 0
        %3431 = vmatpush1.bf16.msra.mxu0 %v3376
        %3432 = vmatprep.subr.bf16.mxu0 0
        %3433 = vmatpush1.bf16.msra.mxu0 %v3377
        %3434 = vmatprep.subr.bf16.mxu0 0
        %3435 = vmatpush1.bf16.msra.mxu0 %v3378
        %3436 = vmatprep.subr.bf16.mxu0 0
        %3437 = vmatpush1.bf16.msra.mxu0 %v3379
        %3438 = vmatprep.subr.bf16.mxu0 0
        %3439 = vmatpush1.bf16.msra.mxu0 %v3380
        %3440 = vmatprep.subr.bf16.mxu0 0
        %3441 = vmatpush1.bf16.msra.mxu0 %v3381
        %3442 = vmatprep.subr.bf16.mxu0 0
        %3443 = vmatpush1.bf16.msra.mxu0 %v3382
        %3444 = vmatprep.subr.bf16.mxu0 0
        %3445 = vmatpush1.bf16.msra.mxu0 %v3383
        %3446 = vmatprep.subr.bf16.mxu0 0
        %3447 = vmatpush1.bf16.msra.mxu0 %v3384
        %3448 = vmatprep.subr.bf16.mxu0 0
        %3449 = vmatpush1.bf16.msra.mxu0 %v3385
        %3450 = vmatprep.mubr.bf16.mxu0 %v3167
        %3451 = vmatmul.mubr.bf16.gmra.mrb[0].mxu0 %v3166
        %v3452 = vpop.f32.mrb[0].mxu0
        %v3453 = vadd.f32 0.0, %v3452
        %v3454 = vpop.f32.mrb[0].mxu0
        %v3455 = vpop.f32.mrb[0].mxu0
        %v3456 = vadd.f32 0.0, %v3455
        %v3457 = vpop.f32.mrb[0].mxu0
        %3458 = vmatprep.mubr.bf16.mxu0 %v3169
        %3459 = vmatmul.mubr.bf16.gmra.mrb[0].mxu0 %v3168
        %v3460 = vpop.f32.mrb[0].mxu0
        %v3461 = vadd.f32 0.0, %v3460
        %v3462 = vpop.f32.mrb[0].mxu0
        %v3463 = vpop.f32.mrb[0].mxu0
        %v3464 = vadd.f32 0.0, %v3463
        %v3465 = vpop.f32.mrb[0].mxu0
        %3466 = vmatprep.mubr.bf16.mxu0 %v3171
        %3467 = vmatmul.mubr.bf16.gmra.mrb[0].mxu0 %v3170
        %v3468 = vpop.f32.mrb[0].mxu0
        %v3469 = vadd.f32 0.0, %v3468
        %v3470 = vpop.f32.mrb[0].mxu0
        %v3471 = vpop.f32.mrb[0].mxu0
        %v3472 = vadd.f32 0.0, %v3471
        %v3473 = vpop.f32.mrb[0].mxu0
        %3474 = vmatprep.mubr.bf16.mxu0 %v3173
        %3475 = vmatmul.mubr.bf16.gmra.mrb[0].mxu0 %v3172
        %v3476 = vpop.f32.mrb[0].mxu0
        %v3477 = vadd.f32 0.0, %v3476
        %v3478 = vpop.f32.mrb[0].mxu0
        %v3479 = vpop.f32.mrb[0].mxu0
        %v3480 = vadd.f32 0.0, %v3479
        %v3481 = vpop.f32.mrb[0].mxu0
        %3482 = vmatprep.mubr.bf16.mxu0 %v3176
        %3483 = vmatmul.mubr.bf16.gmra.mrb[0].mxu0 %v3175
        %v3484 = vpop.f32.mrb[0].mxu0
        %v3485 = vadd.f32 0.0, %v3484
        %v3486 = vpop.f32.mrb[0].mxu0
        %v3487 = vpop.f32.mrb[0].mxu0
        %v3488 = vadd.f32 0.0, %v3487
        %v3489 = vpop.f32.mrb[0].mxu0
        %3490 = vmatprep.mubr.bf16.mxu0 %v3178
        %3491 = vmatmul.mubr.bf16.gmra.mrb[0].mxu0 %v3177
        %v3492 = vpop.f32.mrb[0].mxu0
        %v3493 = vadd.f32 0.0, %v3492
        %v3494 = vpop.f32.mrb[0].mxu0
        %v3495 = vpop.f32.mrb[0].mxu0
        %v3496 = vadd.f32 0.0, %v3495
        %v3497 = vpop.f32.mrb[0].mxu0
        %3498 = vmatprep.mubr.bf16.mxu0 %v3180
        %3499 = vmatmul.mubr.bf16.gmra.mrb[0].mxu0 %v3179
        %v3500 = vpop.f32.mrb[0].mxu0
        %v3501 = vadd.f32 0.0, %v3500
        %v3502 = vpop.f32.mrb[0].mxu0
        %v3503 = vpop.f32.mrb[0].mxu0
        %v3504 = vadd.f32 0.0, %v3503
        %v3505 = vpop.f32.mrb[0].mxu0
        %3506 = vmatprep.mubr.bf16.mxu0 %v3182
        %3507 = vmatmul.mubr.bf16.gmra.mrb[0].mxu0 %v3181
        %v3508 = vpop.f32.mrb[0].mxu0
        %v3509 = vadd.f32 0.0, %v3508
        %v3510 = vpop.f32.mrb[0].mxu0
        %v3511 = vpop.f32.mrb[0].mxu0
        %v3512 = vadd.f32 0.0, %v3511
        %v3513 = vpop.f32.mrb[0].mxu0
        %3514 = vmatprep.mubr.bf16.mxu0 %v3185
        %3515 = vmatmul.mubr.bf16.gmra.mrb[0].mxu0 %v3184
        %v3516 = vpop.f32.mrb[0].mxu0
        %v3517 = vadd.f32 0.0, %v3516
        %v3518 = vpop.f32.mrb[0].mxu0
        %v3519 = vpop.f32.mrb[0].mxu0
        %v3520 = vadd.f32 0.0, %v3519
        %v3521 = vpop.f32.mrb[0].mxu0
        %3522 = vmatprep.mubr.bf16.mxu0 %v3187
        %3523 = vmatmul.mubr.bf16.gmra.mrb[0].mxu0 %v3186
        %v3524 = vpop.f32.mrb[0].mxu0
        %v3525 = vadd.f32 0.0, %v3524
        %v3526 = vpop.f32.mrb[0].mxu0
        %v3527 = vpop.f32.mrb[0].mxu0
        %v3528 = vadd.f32 0.0, %v3527
        %v3529 = vpop.f32.mrb[0].mxu0
        %3530 = vmatprep.mubr.bf16.mxu0 %v3189
        %3531 = vmatmul.mubr.bf16.gmra.mrb[0].mxu0 %v3188
        %v3532 = vpop.f32.mrb[0].mxu0
        %v3533 = vadd.f32 0.0, %v3532
        %v3534 = vpop.f32.mrb[0].mxu0
        %v3535 = vpop.f32.mrb[0].mxu0
        %v3536 = vadd.f32 0.0, %v3535
        %v3537 = vpop.f32.mrb[0].mxu0
        %3538 = vmatprep.mubr.bf16.mxu0 %v3191
        %3539 = vmatmul.mubr.bf16.gmra.mrb[0].mxu0 %v3190
        %v3540 = vpop.f32.mrb[0].mxu0
        %v3541 = vadd.f32 0.0, %v3540
        %v3542 = vpop.f32.mrb[0].mxu0
        %v3543 = vpop.f32.mrb[0].mxu0
        %v3544 = vadd.f32 0.0, %v3543
        %v3545 = vpop.f32.mrb[0].mxu0
        %3546 = vmatprep.mubr.bf16.mxu0 %v3194
        %3547 = vmatmul.mubr.bf16.gmra.mrb[0].mxu0 %v3193
        %v3548 = vpop.f32.mrb[0].mxu0
        %v3549 = vadd.f32 0.0, %v3548
        %v3550 = vpop.f32.mrb[0].mxu0
        %v3551 = vpop.f32.mrb[0].mxu0
        %v3552 = vadd.f32 0.0, %v3551
        %v3553 = vpop.f32.mrb[0].mxu0
        %3554 = vmatprep.mubr.bf16.mxu0 %v3196
        %3555 = vmatmul.mubr.bf16.gmra.mrb[0].mxu0 %v3195
        %v3556 = vpop.f32.mrb[0].mxu0
        %v3557 = vadd.f32 0.0, %v3556
        %v3558 = vpop.f32.mrb[0].mxu0
        %v3559 = vpop.f32.mrb[0].mxu0
        %v3560 = vadd.f32 0.0, %v3559
        %v3561 = vpop.f32.mrb[0].mxu0
        %3562 = vmatprep.mubr.bf16.mxu0 %v3198
        %3563 = vmatmul.mubr.bf16.gmra.mrb[0].mxu0 %v3197
        %v3564 = vpop.f32.mrb[0].mxu0
        %v3565 = vadd.f32 0.0, %v3564
        %v3566 = vpop.f32.mrb[0].mxu0
        %v3567 = vpop.f32.mrb[0].mxu0
        %v3568 = vadd.f32 0.0, %v3567
        %v3569 = vpop.f32.mrb[0].mxu0
        %3570 = vmatprep.mubr.bf16.mxu0 %v3200
        %3571 = vmatmul.mubr.bf16.gmra.mrb[0].mxu0 %v3199
        %v3572 = vpop.f32.mrb[0].mxu0
        %v3573 = vadd.f32 0.0, %v3572
        %v3574 = vpop.f32.mrb[0].mxu0
        %v3575 = vpop.f32.mrb[0].mxu0
        %v3576 = vadd.f32 0.0, %v3575
        %v3577 = vpop.f32.mrb[0].mxu0
        %3578 = vmatprep.mubr.bf16.mxu0 %v3203
        %3579 = vmatmul.mubr.bf16.gmra.mrb[0].mxu0 %v3202
        %v3580 = vpop.f32.mrb[0].mxu0
        %v3581 = vadd.f32 0.0, %v3580
        %v3582 = vpop.f32.mrb[0].mxu0
        %v3583 = vpop.f32.mrb[0].mxu0
        %v3584 = vadd.f32 0.0, %v3583
        %v3585 = vpop.f32.mrb[0].mxu0
        %3586 = vmatprep.mubr.bf16.mxu0 %v3205
        %3587 = vmatmul.mubr.bf16.gmra.mrb[0].mxu0 %v3204
        %v3588 = vpop.f32.mrb[0].mxu0
        %v3589 = vadd.f32 0.0, %v3588
        %v3590 = vpop.f32.mrb[0].mxu0
        %v3591 = vpop.f32.mrb[0].mxu0
        %v3592 = vadd.f32 0.0, %v3591
        %v3593 = vpop.f32.mrb[0].mxu0
        %3594 = vmatprep.mubr.bf16.mxu0 %v3207
        %3595 = vmatmul.mubr.bf16.gmra.mrb[0].mxu0 %v3206
        %v3596 = vpop.f32.mrb[0].mxu0
        %v3597 = vadd.f32 0.0, %v3596
        %v3598 = vpop.f32.mrb[0].mxu0
        %v3599 = vpop.f32.mrb[0].mxu0
        %v3600 = vadd.f32 0.0, %v3599
        %v3601 = vpop.f32.mrb[0].mxu0
        %3602 = vmatprep.mubr.bf16.mxu0 %v3209
        %3603 = vmatmul.mubr.bf16.gmra.mrb[0].mxu0 %v3208
        %v3604 = vpop.f32.mrb[0].mxu0
        %v3605 = vadd.f32 0.0, %v3604
        %v3606 = vpop.f32.mrb[0].mxu0
        %v3607 = vpop.f32.mrb[0].mxu0
        %v3608 = vadd.f32 0.0, %v3607
        %v3609 = vpop.f32.mrb[0].mxu0
        %3610 = vmatprep.mubr.bf16.mxu0 %v3212
        %3611 = vmatmul.mubr.bf16.gmra.mrb[0].mxu0 %v3211
        %v3612 = vpop.f32.mrb[0].mxu0
        %v3613 = vadd.f32 0.0, %v3612
        %v3614 = vpop.f32.mrb[0].mxu0
        %v3615 = vpop.f32.mrb[0].mxu0
        %v3616 = vadd.f32 0.0, %v3615
        %v3617 = vpop.f32.mrb[0].mxu0
        %3618 = vmatprep.mubr.bf16.mxu0 %v3214
        %3619 = vmatmul.mubr.bf16.gmra.mrb[0].mxu0 %v3213
        %v3620 = vpop.f32.mrb[0].mxu0
        %v3621 = vadd.f32 0.0, %v3620
        %v3622 = vpop.f32.mrb[0].mxu0
        %v3623 = vpop.f32.mrb[0].mxu0
        %v3624 = vadd.f32 0.0, %v3623
        %v3625 = vpop.f32.mrb[0].mxu0
        %3626 = vmatprep.mubr.bf16.mxu0 %v3216
        %3627 = vmatmul.mubr.bf16.gmra.mrb[0].mxu0 %v3215
        %v3628 = vpop.f32.mrb[0].mxu0
        %v3629 = vadd.f32 0.0, %v3628
        %v3630 = vpop.f32.mrb[0].mxu0
        %v3631 = vpop.f32.mrb[0].mxu0
        %v3632 = vadd.f32 0.0, %v3631
        %v3633 = vpop.f32.mrb[0].mxu0
        %3634 = vmatprep.mubr.bf16.mxu0 %v3218
        %3635 = vmatmul.mubr.bf16.gmra.mrb[0].mxu0 %v3217
        %v3636 = vpop.f32.mrb[0].mxu0
        %v3637 = vadd.f32 0.0, %v3636
        %v3638 = vpop.f32.mrb[0].mxu0
        %v3639 = vpop.f32.mrb[0].mxu0
        %v3640 = vadd.f32 0.0, %v3639
        %v3641 = vpop.f32.mrb[0].mxu0
        %3642 = vdwg.mxu0
        %3643 = vmatprep.subr.bf16.mxu0 0
        %3644 = vmatpush1.bf16.msra.mxu0 %v3386
        %3645 = vmatprep.subr.bf16.mxu0 0
        %3646 = vmatpush1.bf16.msra.mxu0 %v3387
        %3647 = vmatprep.subr.bf16.mxu0 0
        %3648 = vmatpush1.bf16.msra.mxu0 %v3388
        %3649 = vmatprep.subr.bf16.mxu0 0
        %3650 = vmatpush1.bf16.msra.mxu0 %v3389
        %3651 = vmatprep.subr.bf16.mxu0 0
        %3652 = vmatpush1.bf16.msra.mxu0 %v3390
        %3653 = vmatprep.subr.bf16.mxu0 0
        %3654 = vmatpush1.bf16.msra.mxu0 %v3391
        %3655 = vmatprep.subr.bf16.mxu0 0
        %3656 = vmatpush1.bf16.msra.mxu0 %v3392
        %3657 = vmatprep.subr.bf16.mxu0 0
        %3658 = vmatpush1.bf16.msra.mxu0 %v3393
        %3659 = vmatprep.subr.bf16.mxu0 0
        %3660 = vmatpush1.bf16.msra.mxu0 0
        %3661 = vmatprep.subr.bf16.mxu0 0
        %3662 = vmatpush1.bf16.msra.mxu0 0
        %3663 = vmatprep.subr.bf16.mxu0 0
        %3664 = vmatpush1.bf16.msra.mxu0 0
        %3665 = vmatprep.subr.bf16.mxu0 0
        %3666 = vmatpush1.bf16.msra.mxu0 0
        %3667 = vmatprep.subr.bf16.mxu0 0
        %3668 = vmatpush1.bf16.msra.mxu0 0
        %3669 = vmatprep.subr.bf16.mxu0 0
        %3670 = vmatpush1.bf16.msra.mxu0 0
        %3671 = vmatprep.subr.bf16.mxu0 0
        %3672 = vmatpush1.bf16.msra.mxu0 0
        %3673 = vmatprep.subr.bf16.mxu0 0
        %3674 = vmatpush1.bf16.msra.mxu0 0
        %3675 = vmatprep.mubr.bf16.mxu0 0
        %3676 = vmatmul.mubr.bf16.gmra.mrb[0].mxu0 %v3168
        %v3677 = vpop.f32.mrb[0].mxu0
        %v3678 = vadd.f32 %v3453, %v3677
        %v3679 = vpop.f32.mrb[0].mxu0
        %v3680 = vpop.f32.mrb[0].mxu0
        %v3681 = vadd.f32 %v3456, %v3680
        %v3682 = vpop.f32.mrb[0].mxu0
        %3683 = vmatprep.mubr.bf16.mxu0 0
        %3684 = vmatmul.mubr.bf16.gmra.mrb[0].mxu0 %v3170
        %v3685 = vpop.f32.mrb[0].mxu0
        %v3686 = vadd.f32 %v3461, %v3685
        %v3687 = vpop.f32.mrb[0].mxu0
        %v3688 = vpop.f32.mrb[0].mxu0
        %v3689 = vadd.f32 %v3464, %v3688
        %v3690 = vpop.f32.mrb[0].mxu0
        %3691 = vmatprep.mubr.bf16.mxu0 0
        %3692 = vmatmul.mubr.bf16.gmra.mrb[0].mxu0 %v3172
        %v3693 = vpop.f32.mrb[0].mxu0
        %v3694 = vadd.f32 %v3469, %v3693
        %v3695 = vpop.f32.mrb[0].mxu0
        %v3696 = vpop.f32.mrb[0].mxu0
        %v3697 = vadd.f32 %v3472, %v3696
        %v3698 = vpop.f32.mrb[0].mxu0
        %3699 = vmatprep.mubr.bf16.mxu0 0
        %3700 = vmatmul.mubr.bf16.gmra.mrb[0].mxu0 %v3174
        %v3701 = vpop.f32.mrb[0].mxu0
        %v3702 = vadd.f32 %v3477, %v3701
        %v3703 = vpop.f32.mrb[0].mxu0
        %v3704 = vpop.f32.mrb[0].mxu0
        %v3705 = vadd.f32 %v3480, %v3704
        %v3706 = vpop.f32.mrb[0].mxu0
        %3707 = vmatprep.mubr.bf16.mxu0 0
        %3708 = vmatmul.mubr.bf16.gmra.mrb[0].mxu0 %v3177
        %v3709 = vpop.f32.mrb[0].mxu0
        %v3710 = vadd.f32 %v3485, %v3709
        %v3711 = vpop.f32.mrb[0].mxu0
        %v3712 = vpop.f32.mrb[0].mxu0
        %v3713 = vadd.f32 %v3488, %v3712
        %v3714 = vpop.f32.mrb[0].mxu0
        %3715 = vmatprep.mubr.bf16.mxu0 0
        %3716 = vmatmul.mubr.bf16.gmra.mrb[0].mxu0 %v3179
        %v3717 = vpop.f32.mrb[0].mxu0
        %v3718 = vadd.f32 %v3493, %v3717
        %v3719 = vpop.f32.mrb[0].mxu0
        %v3720 = vpop.f32.mrb[0].mxu0
        %v3721 = vadd.f32 %v3496, %v3720
        %v3722 = vpop.f32.mrb[0].mxu0
        %3723 = vmatprep.mubr.bf16.mxu0 0
        %3724 = vmatmul.mubr.bf16.gmra.mrb[0].mxu0 %v3181
        %v3725 = vpop.f32.mrb[0].mxu0
        %v3726 = vadd.f32 %v3501, %v3725
        %v3727 = vpop.f32.mrb[0].mxu0
        %v3728 = vpop.f32.mrb[0].mxu0
        %v3729 = vadd.f32 %v3504, %v3728
        %v3730 = vpop.f32.mrb[0].mxu0
        %3731 = vmatprep.mubr.bf16.mxu0 0
        %3732 = vmatmul.mubr.bf16.gmra.mrb[0].mxu0 %v3183
        %v3733 = vpop.f32.mrb[0].mxu0
        %v3734 = vadd.f32 %v3509, %v3733
        %v3735 = vpop.f32.mrb[0].mxu0
        %v3736 = vpop.f32.mrb[0].mxu0
        %v3737 = vadd.f32 %v3512, %v3736
        %v3738 = vpop.f32.mrb[0].mxu0
        %3739 = vmatprep.mubr.bf16.mxu0 0
        %3740 = vmatmul.mubr.bf16.gmra.mrb[0].mxu0 %v3186
        %v3741 = vpop.f32.mrb[0].mxu0
        %v3742 = vadd.f32 %v3517, %v3741
        %v3743 = vpop.f32.mrb[0].mxu0
        %v3744 = vpop.f32.mrb[0].mxu0
        %v3745 = vadd.f32 %v3520, %v3744
        %v3746 = vpop.f32.mrb[0].mxu0
        %3747 = vmatprep.mubr.bf16.mxu0 0
        %3748 = vmatmul.mubr.bf16.gmra.mrb[0].mxu0 %v3188
        %v3749 = vpop.f32.mrb[0].mxu0
        %v3750 = vadd.f32 %v3525, %v3749
        %v3751 = vpop.f32.mrb[0].mxu0
        %v3752 = vpop.f32.mrb[0].mxu0
        %v3753 = vadd.f32 %v3528, %v3752
        %v3754 = vpop.f32.mrb[0].mxu0
        %3755 = vmatprep.mubr.bf16.mxu0 0
        %3756 = vmatmul.mubr.bf16.gmra.mrb[0].mxu0 %v3190
        %v3757 = vpop.f32.mrb[0].mxu0
        %v3758 = vadd.f32 %v3533, %v3757
        %v3759 = vpop.f32.mrb[0].mxu0
        %v3760 = vpop.f32.mrb[0].mxu0
        %v3761 = vadd.f32 %v3536, %v3760
        %v3762 = vpop.f32.mrb[0].mxu0
        %3763 = vmatprep.mubr.bf16.mxu0 0
        %3764 = vmatmul.mubr.bf16.gmra.mrb[0].mxu0 %v3192
        %v3765 = vpop.f32.mrb[0].mxu0
        %v3766 = vadd.f32 %v3541, %v3765
        %v3767 = vpop.f32.mrb[0].mxu0
        %v3768 = vpop.f32.mrb[0].mxu0
        %v3769 = vadd.f32 %v3544, %v3768
        %v3770 = vpop.f32.mrb[0].mxu0
        %3771 = vmatprep.mubr.bf16.mxu0 0
        %3772 = vmatmul.mubr.bf16.gmra.mrb[0].mxu0 %v3195
        %v3773 = vpop.f32.mrb[0].mxu0
        %v3774 = vadd.f32 %v3549, %v3773
        %v3775 = vpop.f32.mrb[0].mxu0
        %v3776 = vpop.f32.mrb[0].mxu0
        %v3777 = vadd.f32 %v3552, %v3776
        %v3778 = vpop.f32.mrb[0].mxu0
        %3779 = vmatprep.mubr.bf16.mxu0 0
        %3780 = vmatmul.mubr.bf16.gmra.mrb[0].mxu0 %v3197
        %v3781 = vpop.f32.mrb[0].mxu0
        %v3782 = vadd.f32 %v3557, %v3781
        %v3783 = vpop.f32.mrb[0].mxu0
        %v3784 = vpop.f32.mrb[0].mxu0
        %v3785 = vadd.f32 %v3560, %v3784
        %v3786 = vpop.f32.mrb[0].mxu0
        %3787 = vmatprep.mubr.bf16.mxu0 0
        %3788 = vmatmul.mubr.bf16.gmra.mrb[0].mxu0 %v3199
        %v3789 = vpop.f32.mrb[0].mxu0
        %v3790 = vadd.f32 %v3565, %v3789
        %v3791 = vpop.f32.mrb[0].mxu0
        %v3792 = vpop.f32.mrb[0].mxu0
        %v3793 = vadd.f32 %v3568, %v3792
        %v3794 = vpop.f32.mrb[0].mxu0
        %3795 = vmatprep.mubr.bf16.mxu0 0
        %3796 = vmatmul.mubr.bf16.gmra.mrb[0].mxu0 %v3201
        %v3797 = vpop.f32.mrb[0].mxu0
        %v3798 = vadd.f32 %v3573, %v3797
        %v3799 = vpop.f32.mrb[0].mxu0
        %v3800 = vpop.f32.mrb[0].mxu0
        %v3801 = vadd.f32 %v3576, %v3800
        %v3802 = vpop.f32.mrb[0].mxu0
        %3803 = vmatprep.mubr.bf16.mxu0 0
        %3804 = vmatmul.mubr.bf16.gmra.mrb[0].mxu0 %v3204
        %v3805 = vpop.f32.mrb[0].mxu0
        %v3806 = vadd.f32 %v3581, %v3805
        %v3807 = vpop.f32.mrb[0].mxu0
        %v3808 = vpop.f32.mrb[0].mxu0
        %v3809 = vadd.f32 %v3584, %v3808
        %v3810 = vpop.f32.mrb[0].mxu0
        %3811 = vmatprep.mubr.bf16.mxu0 0
        %3812 = vmatmul.mubr.bf16.gmra.mrb[0].mxu0 %v3206
        %v3813 = vpop.f32.mrb[0].mxu0
        %v3814 = vadd.f32 %v3589, %v3813
        %v3815 = vpop.f32.mrb[0].mxu0
        %v3816 = vpop.f32.mrb[0].mxu0
        %v3817 = vadd.f32 %v3592, %v3816
        %v3818 = vpop.f32.mrb[0].mxu0
        %3819 = vmatprep.mubr.bf16.mxu0 0
        %3820 = vmatmul.mubr.bf16.gmra.mrb[0].mxu0 %v3208
        %v3821 = vpop.f32.mrb[0].mxu0
        %v3822 = vadd.f32 %v3597, %v3821
        %v3823 = vpop.f32.mrb[0].mxu0
        %v3824 = vpop.f32.mrb[0].mxu0
        %v3825 = vadd.f32 %v3600, %v3824
        %v3826 = vpop.f32.mrb[0].mxu0
        %3827 = vmatprep.mubr.bf16.mxu0 0
        %3828 = vmatmul.mubr.bf16.gmra.mrb[0].mxu0 %v3210
        %v3829 = vpop.f32.mrb[0].mxu0
        %v3830 = vadd.f32 %v3605, %v3829
        %v3831 = vpop.f32.mrb[0].mxu0
        %v3832 = vpop.f32.mrb[0].mxu0
        %v3833 = vadd.f32 %v3608, %v3832
        %v3834 = vpop.f32.mrb[0].mxu0
        %3835 = vmatprep.mubr.bf16.mxu0 0
        %3836 = vmatmul.mubr.bf16.gmra.mrb[0].mxu0 %v3213
        %v3837 = vpop.f32.mrb[0].mxu0
        %v3838 = vadd.f32 %v3613, %v3837
        %v3839 = vpop.f32.mrb[0].mxu0
        %v3840 = vpop.f32.mrb[0].mxu0
        %v3841 = vadd.f32 %v3616, %v3840
        %v3842 = vpop.f32.mrb[0].mxu0
        %3843 = vmatprep.mubr.bf16.mxu0 0
        %3844 = vmatmul.mubr.bf16.gmra.mrb[0].mxu0 %v3215
        %v3845 = vpop.f32.mrb[0].mxu0
        %v3846 = vadd.f32 %v3621, %v3845
        %v3847 = vpop.f32.mrb[0].mxu0
        %v3848 = vpop.f32.mrb[0].mxu0
        %v3849 = vadd.f32 %v3624, %v3848
        %v3850 = vpop.f32.mrb[0].mxu0
        %3851 = vmatprep.mubr.bf16.mxu0 0
        %3852 = vmatmul.mubr.bf16.gmra.mrb[0].mxu0 %v3217
        %v3853 = vpop.f32.mrb[0].mxu0
        %v3854 = vadd.f32 %v3629, %v3853
        %v3855 = vpop.f32.mrb[0].mxu0
        %v3856 = vpop.f32.mrb[0].mxu0
        %v3857 = vadd.f32 %v3632, %v3856
        %v3858 = vpop.f32.mrb[0].mxu0
        %3859 = vmatprep.mubr.bf16.mxu0 0
        %3860 = vmatmul.mubr.bf16.gmra.mrb[0].mxu0 %v3219
        %v3861 = vpop.f32.mrb[0].mxu0
        %v3862 = vadd.f32 %v3637, %v3861
        %v3863 = vpop.f32.mrb[0].mxu0
        %v3864 = vpop.f32.mrb[0].mxu0
        %v3865 = vadd.f32 %v3640, %v3864
        %v3866 = vpop.f32.mrb[0].mxu0
        %3867 = vdwg.mxu0
        %v3868 = vld [vmem:[%s5] sm:$0x1]
        %v3870 = vlaneseq
        %v3871 = vshrl.u32 %v3870, 7
        %v3872 = vsub.s32 0, %v3871
        %v3873 = vrot.slane %v3868, %v3872
        %v3875 = vadd.f32 %v3678, %v3873
        %v3876 = vadd.f32 %v3681, %v3873
        %v3877 = vadd.f32 %v3686, %v3873
        %v3878 = vadd.f32 %v3689, %v3873
        %v3879 = vadd.f32 %v3694, %v3873
        %v3880 = vadd.f32 %v3697, %v3873
        %v3881 = vadd.f32 %v3702, %v3873
        %v3882 = vadd.f32 %v3705, %v3873
        %v3883 = vadd.f32 %v3710, %v3873
        %v3884 = vadd.f32 %v3713, %v3873
        %v3885 = vadd.f32 %v3718, %v3873
        %v3886 = vadd.f32 %v3721, %v3873
        %v3887 = vadd.f32 %v3726, %v3873
        %v3888 = vadd.f32 %v3729, %v3873
        %v3889 = vadd.f32 %v3734, %v3873
        %v3890 = vadd.f32 %v3737, %v3873
        %v3891 = vadd.f32 %v3742, %v3873
        %v3892 = vadd.f32 %v3745, %v3873
        %v3893 = vadd.f32 %v3750, %v3873
        %v3894 = vadd.f32 %v3753, %v3873
        %v3895 = vadd.f32 %v3758, %v3873
        %v3896 = vadd.f32 %v3761, %v3873
        %v3897 = vadd.f32 %v3766, %v3873
        %v3898 = vadd.f32 %v3769, %v3873
        %v3899 = vadd.f32 %v3774, %v3873
        %v3900 = vadd.f32 %v3777, %v3873
        %v3901 = vadd.f32 %v3782, %v3873
        %v3902 = vadd.f32 %v3785, %v3873
        %v3903 = vadd.f32 %v3790, %v3873
        %v3904 = vadd.f32 %v3793, %v3873
        %v3905 = vadd.f32 %v3798, %v3873
        %v3906 = vadd.f32 %v3801, %v3873
        %v3907 = vadd.f32 %v3806, %v3873
        %v3908 = vadd.f32 %v3809, %v3873
        %v3909 = vadd.f32 %v3814, %v3873
        %v3910 = vadd.f32 %v3817, %v3873
        %v3911 = vadd.f32 %v3822, %v3873
        %v3912 = vadd.f32 %v3825, %v3873
        %v3913 = vadd.f32 %v3830, %v3873
        %v3914 = vadd.f32 %v3833, %v3873
        %v3915 = vadd.f32 %v3838, %v3873
        %v3916 = vadd.f32 %v3841, %v3873
        %v3917 = vadd.f32 %v3846, %v3873
        %v3918 = vadd.f32 %v3849, %v3873
        %v3919 = vadd.f32 %v3854, %v3873
        %v3920 = vadd.f32 %v3857, %v3873
        %v3921 = vadd.f32 %v3862, %v3873
        %v3922 = vadd.f32 %v3865, %v3873
        %v3923 = vunpack.c.l.bf16 %v2972
        %v3924 = vunpack.c.l.bf16 %v2973
        %v3925 = vunpack.c.l.bf16 %v2974
        %v3926 = vunpack.c.l.bf16 %v2975
        %v3927 = vunpack.c.l.bf16 %v2976
        %v3928 = vunpack.c.l.bf16 %v2977
        %v3929 = vunpack.c.l.bf16 %v2978
        %v3930 = vunpack.c.l.bf16 %v2979
        %v3931 = vunpack.c.l.bf16 %v2980
        %v3932 = vunpack.c.l.bf16 %v2981
        %v3933 = vunpack.c.l.bf16 %v2982
        %v3934 = vunpack.c.l.bf16 %v2983
        %v3935 = vunpack.c.l.bf16 %v2984
        %v3936 = vunpack.c.l.bf16 %v2985
        %v3937 = vunpack.c.l.bf16 %v2986
        %v3938 = vunpack.c.l.bf16 %v2987
        %v3939 = vunpack.c.l.bf16 %v2988
        %v3940 = vunpack.c.l.bf16 %v2989
        %v3941 = vunpack.c.l.bf16 %v2990
        %v3942 = vunpack.c.l.bf16 %v2991
        %v3943 = vunpack.c.l.bf16 %v2992
        %v3944 = vunpack.c.l.bf16 %v2993
        %v3945 = vunpack.c.l.bf16 %v2994
        %v3946 = vunpack.c.l.bf16 %v2995
        %v3947 = vunpack.c.l.bf16 %v2996
        %v3948 = vunpack.c.l.bf16 %v2997
        %v3949 = vunpack.c.l.bf16 %v2998
        %v3950 = vunpack.c.l.bf16 %v2999
        %v3951 = vunpack.c.l.bf16 %v3000
        %v3952 = vunpack.c.l.bf16 %v3001
        %v3953 = vunpack.c.l.bf16 %v3002
        %v3954 = vunpack.c.l.bf16 %v3003
        %v3955 = vunpack.c.l.bf16 %v3004
        %v3956 = vunpack.c.l.bf16 %v3005
        %v3957 = vunpack.c.l.bf16 %v3006
        %v3958 = vunpack.c.l.bf16 %v3007
        %v3959 = vunpack.c.l.bf16 %v3008
        %v3960 = vunpack.c.l.bf16 %v3009
        %v3961 = vunpack.c.l.bf16 %v3010
        %v3962 = vunpack.c.l.bf16 %v3011
        %v3963 = vunpack.c.l.bf16 %v3012
        %v3964 = vunpack.c.l.bf16 %v3013
        %v3965 = vunpack.c.l.bf16 %v3014
        %v3966 = vunpack.c.l.bf16 %v3015
        %v3967 = vunpack.c.l.bf16 %v3016
        %v3968 = vunpack.c.l.bf16 %v3017
        %v3969 = vunpack.c.l.bf16 %v3018
        %v3970 = vunpack.c.l.bf16 %v3019
        %v3971 = vadd.f32 %v3875, %v3923
        %v3972 = vadd.f32 %v3876, %v3924
        %v3973 = vadd.f32 %v3877, %v3925
        %v3974 = vadd.f32 %v3878, %v3926
        %v3975 = vadd.f32 %v3879, %v3927
        %v3976 = vadd.f32 %v3880, %v3928
        %v3977 = vadd.f32 %v3881, %v3929
        %v3978 = vadd.f32 %v3882, %v3930
        %v3979 = vadd.f32 %v3883, %v3931
        %v3980 = vadd.f32 %v3884, %v3932
        %v3981 = vadd.f32 %v3885, %v3933
        %v3982 = vadd.f32 %v3886, %v3934
        %v3983 = vadd.f32 %v3887, %v3935
        %v3984 = vadd.f32 %v3888, %v3936
        %v3985 = vadd.f32 %v3889, %v3937
        %v3986 = vadd.f32 %v3890, %v3938
        %v3987 = vadd.f32 %v3891, %v3939
        %v3988 = vadd.f32 %v3892, %v3940
        %v3989 = vadd.f32 %v3893, %v3941
        %v3990 = vadd.f32 %v3894, %v3942
        %v3991 = vadd.f32 %v3895, %v3943
        %v3992 = vadd.f32 %v3896, %v3944
        %v3993 = vadd.f32 %v3897, %v3945
        %v3994 = vadd.f32 %v3898, %v3946
        %v3995 = vadd.f32 %v3899, %v3947
        %v3996 = vadd.f32 %v3900, %v3948
        %v3997 = vadd.f32 %v3901, %v3949
        %v3998 = vadd.f32 %v3902, %v3950
        %v3999 = vadd.f32 %v3903, %v3951
        %v4000 = vadd.f32 %v3904, %v3952
        %v4001 = vadd.f32 %v3905, %v3953
        %v4002 = vadd.f32 %v3906, %v3954
        %v4003 = vadd.f32 %v3907, %v3955
        %v4004 = vadd.f32 %v3908, %v3956
        %v4005 = vadd.f32 %v3909, %v3957
        %v4006 = vadd.f32 %v3910, %v3958
        %v4007 = vadd.f32 %v3911, %v3959
        %v4008 = vadd.f32 %v3912, %v3960
        %v4009 = vadd.f32 %v3913, %v3961
        %v4010 = vadd.f32 %v3914, %v3962
        %v4011 = vadd.f32 %v3915, %v3963
        %v4012 = vadd.f32 %v3916, %v3964
        %v4013 = vadd.f32 %v3917, %v3965
        %v4014 = vadd.f32 %v3918, %v3966
        %v4015 = vadd.f32 %v3919, %v3967
        %v4016 = vadd.f32 %v3920, %v3968
        %v4017 = vadd.f32 %v3921, %v3969
        %v4018 = vadd.f32 %v3922, %v3970
        %v4019 = vmax.f32 %v3971, 0.0
        %v4020 = vmax.f32 %v3972, 0.0
        %v4021 = vmax.f32 %v3973, 0.0
        %v4022 = vmax.f32 %v3974, 0.0
        %v4023 = vmax.f32 %v3975, 0.0
        %v4024 = vmax.f32 %v3976, 0.0
        %v4025 = vmax.f32 %v3977, 0.0
        %v4026 = vmax.f32 %v3978, 0.0
        %v4027 = vmax.f32 %v3979, 0.0
        %v4028 = vmax.f32 %v3980, 0.0
        %v4029 = vmax.f32 %v3981, 0.0
        %v4030 = vmax.f32 %v3982, 0.0
        %v4031 = vmax.f32 %v3983, 0.0
        %v4032 = vmax.f32 %v3984, 0.0
        %v4033 = vmax.f32 %v3985, 0.0
        %v4034 = vmax.f32 %v3986, 0.0
        %v4035 = vmax.f32 %v3987, 0.0
        %v4036 = vmax.f32 %v3988, 0.0
        %v4037 = vmax.f32 %v3989, 0.0
        %v4038 = vmax.f32 %v3990, 0.0
        %v4039 = vmax.f32 %v3991, 0.0
        %v4040 = vmax.f32 %v3992, 0.0
        %v4041 = vmax.f32 %v3993, 0.0
        %v4042 = vmax.f32 %v3994, 0.0
        %v4043 = vmax.f32 %v3995, 0.0
        %v4044 = vmax.f32 %v3996, 0.0
        %v4045 = vmax.f32 %v3997, 0.0
        %v4046 = vmax.f32 %v3998, 0.0
        %v4047 = vmax.f32 %v3999, 0.0
        %v4048 = vmax.f32 %v4000, 0.0
        %v4049 = vmax.f32 %v4001, 0.0
        %v4050 = vmax.f32 %v4002, 0.0
        %v4051 = vmax.f32 %v4003, 0.0
        %v4052 = vmax.f32 %v4004, 0.0
        %v4053 = vmax.f32 %v4005, 0.0
        %v4054 = vmax.f32 %v4006, 0.0
        %v4055 = vmax.f32 %v4007, 0.0
        %v4056 = vmax.f32 %v4008, 0.0
        %v4057 = vmax.f32 %v4009, 0.0
        %v4058 = vmax.f32 %v4010, 0.0
        %v4059 = vmax.f32 %v4011, 0.0
        %v4060 = vmax.f32 %v4012, 0.0
        %v4061 = vmax.f32 %v4013, 0.0
        %v4062 = vmax.f32 %v4014, 0.0
        %v4063 = vmax.f32 %v4015, 0.0
        %v4064 = vmax.f32 %v4016, 0.0
        %v4065 = vmax.f32 %v4017, 0.0
        %v4066 = vmax.f32 %v4018, 0.0
        %v4067 = vpack.c.bf16 %v4019, %v4019
        %v4068 = vpack.c.bf16 %v4020, %v4020
        %v4069 = vpack.c.bf16 %v4021, %v4021
        %v4070 = vpack.c.bf16 %v4022, %v4022
        %v4071 = vpack.c.bf16 %v4023, %v4023
        %v4072 = vpack.c.bf16 %v4024, %v4024
        %v4073 = vpack.c.bf16 %v4025, %v4025
        %v4074 = vpack.c.bf16 %v4026, %v4026
        %v4075 = vpack.c.bf16 %v4027, %v4027
        %v4076 = vpack.c.bf16 %v4028, %v4028
        %v4077 = vpack.c.bf16 %v4029, %v4029
        %v4078 = vpack.c.bf16 %v4030, %v4030
        %v4079 = vpack.c.bf16 %v4031, %v4031
        %v4080 = vpack.c.bf16 %v4032, %v4032
        %v4081 = vpack.c.bf16 %v4033, %v4033
        %v4082 = vpack.c.bf16 %v4034, %v4034
        %v4083 = vpack.c.bf16 %v4035, %v4035
        %v4084 = vpack.c.bf16 %v4036, %v4036
        %v4085 = vpack.c.bf16 %v4037, %v4037
        %v4086 = vpack.c.bf16 %v4038, %v4038
        %v4087 = vpack.c.bf16 %v4039, %v4039
        %v4088 = vpack.c.bf16 %v4040, %v4040
        %v4089 = vpack.c.bf16 %v4041, %v4041
        %v4090 = vpack.c.bf16 %v4042, %v4042
        %v4091 = vpack.c.bf16 %v4043, %v4043
        %v4092 = vpack.c.bf16 %v4044, %v4044
        %v4093 = vpack.c.bf16 %v4045, %v4045
        %v4094 = vpack.c.bf16 %v4046, %v4046
        %v4095 = vpack.c.bf16 %v4047, %v4047
        %v4096 = vpack.c.bf16 %v4048, %v4048
        %v4097 = vpack.c.bf16 %v4049, %v4049
        %v4098 = vpack.c.bf16 %v4050, %v4050
        %v4099 = vpack.c.bf16 %v4051, %v4051
        %v4100 = vpack.c.bf16 %v4052, %v4052
        %v4101 = vpack.c.bf16 %v4053, %v4053
        %v4102 = vpack.c.bf16 %v4054, %v4054
        %v4103 = vpack.c.bf16 %v4055, %v4055
        %v4104 = vpack.c.bf16 %v4056, %v4056
        %v4105 = vpack.c.bf16 %v4057, %v4057
        %v4106 = vpack.c.bf16 %v4058, %v4058
        %v4107 = vpack.c.bf16 %v4059, %v4059
        %v4108 = vpack.c.bf16 %v4060, %v4060
        %v4109 = vpack.c.bf16 %v4061, %v4061
        %v4110 = vpack.c.bf16 %v4062, %v4062
        %v4111 = vpack.c.bf16 %v4063, %v4063
        %v4112 = vpack.c.bf16 %v4064, %v4064
        %v4113 = vpack.c.bf16 %v4065, %v4065
        %v4114 = vpack.c.bf16 %v4066, %v4066
        %s4115 = ssub.s32 %s374, 1
        %v4116 = vstv %s4115
        %v4117 = vadd.s32 %v4116, 1
        %v4118 = vadd.s32 %v4116, 2
        %v4119 = vadd.s32 %v4116, 3
        %v4120 = vadd.s32 %v4116, 4
        %v4121 = vadd.s32 %v4116, 5
        %vm4122 = vcmp.ge.s32.totalorder %v4116, 0
        %vm4123 = vcmp.ge.s32.totalorder %v4117, 0
        %vm4124 = vcmp.ge.s32.totalorder %v4118, 0
        %vm4125 = vcmp.ge.s32.totalorder %v4119, 0
        %vm4126 = vcmp.ge.s32.totalorder %v4120, 0
        %vm4127 = vcmp.ge.s32.totalorder %v4121, 0
        %vm4128 = vcmp.lt.s32.totalorder %v4116, 8
        %vm4129 = vcmp.lt.s32.totalorder %v4117, 8
        %vm4130 = vcmp.lt.s32.totalorder %v4118, 8
        %vm4131 = vcmp.lt.s32.totalorder %v4119, 8
        %vm4132 = vcmp.lt.s32.totalorder %v4120, 8
        %vm4133 = vcmp.lt.s32.totalorder %v4121, 8
        %vm4134 = vmand %vm4122, %vm4128
        %vm4135 = vmand %vm4123, %vm4129
        %vm4136 = vmand %vm4124, %vm4130
        %vm4137 = vmand %vm4125, %vm4131
        %vm4138 = vmand %vm4126, %vm4132
        %vm4139 = vmand %vm4127, %vm4133
        %v4140 = vsel %vm4134, 1, 0
        %v4141 = vsel %vm4135, 1, 0
        %v4142 = vsel %vm4136, 1, 0
        %v4143 = vsel %vm4137, 1, 0
        %v4144 = vsel %vm4138, 1, 0
        %v4145 = vsel %vm4139, 1, 0
        %vm4146 = vcmp.eq.s32.totalorder %v4140, 1
        %vm4147 = vcmp.eq.s32.totalorder %v4141, 1
        %vm4148 = vcmp.eq.s32.totalorder %v4142, 1
        %vm4149 = vcmp.eq.s32.totalorder %v4143, 1
        %vm4150 = vcmp.eq.s32.totalorder %v4144, 1
        %vm4151 = vcmp.eq.s32.totalorder %v4145, 1
        %v4152 = vsel %vm4146, %v4067, 0
        %v4153 = vsel %vm4146, %v4068, 0
        %v4154 = vsel %vm4146, %v4069, 0
        %v4155 = vsel %vm4146, %v4070, 0
        %v4156 = vsel %vm4146, %v4071, 0
        %v4157 = vsel %vm4146, %v4072, 0
        %v4158 = vsel %vm4146, %v4073, 0
        %v4159 = vsel %vm4146, %v4074, 0
        %v4160 = vsel %vm4147, %v4075, 0
        %v4161 = vsel %vm4147, %v4076, 0
        %v4162 = vsel %vm4147, %v4077, 0
        %v4163 = vsel %vm4147, %v4078, 0
        %v4164 = vsel %vm4147, %v4079, 0
        %v4165 = vsel %vm4147, %v4080, 0
        %v4166 = vsel %vm4147, %v4081, 0
        %v4167 = vsel %vm4147, %v4082, 0
        %v4168 = vsel %vm4148, %v4083, 0
        %v4169 = vsel %vm4148, %v4084, 0
        %v4170 = vsel %vm4148, %v4085, 0
        %v4171 = vsel %vm4148, %v4086, 0
        %v4172 = vsel %vm4148, %v4087, 0
        %v4173 = vsel %vm4148, %v4088, 0
        %v4174 = vsel %vm4148, %v4089, 0
        %v4175 = vsel %vm4148, %v4090, 0
        %v4176 = vsel %vm4149, %v4091, 0
        %v4177 = vsel %vm4149, %v4092, 0
        %v4178 = vsel %vm4149, %v4093, 0
        %v4179 = vsel %vm4149, %v4094, 0
        %v4180 = vsel %vm4149, %v4095, 0
        %v4181 = vsel %vm4149, %v4096, 0
        %v4182 = vsel %vm4149, %v4097, 0
        %v4183 = vsel %vm4149, %v4098, 0
        %v4184 = vsel %vm4150, %v4099, 0
        %v4185 = vsel %vm4150, %v4100, 0
        %v4186 = vsel %vm4150, %v4101, 0
        %v4187 = vsel %vm4150, %v4102, 0
        %v4188 = vsel %vm4150, %v4103, 0
        %v4189 = vsel %vm4150, %v4104, 0
        %v4190 = vsel %vm4150, %v4105, 0
        %v4191 = vsel %vm4150, %v4106, 0
        %v4192 = vsel %vm4151, %v4107, 0
        %v4193 = vsel %vm4151, %v4108, 0
        %v4194 = vsel %vm4151, %v4109, 0
        %v4195 = vsel %vm4151, %v4110, 0
        %v4196 = vsel %vm4151, %v4111, 0
        %v4197 = vsel %vm4151, %v4112, 0
        %v4198 = vsel %vm4151, %v4113, 0
        %v4199 = vsel %vm4151, %v4114, 0
        %v4200 = vunpack.c.l.bf16 %v4160
        %v4201 = vunpack.c.l.bf16 %v4161
        %v4202 = vunpack.c.l.bf16 %v4162
        %v4203 = vunpack.c.l.bf16 %v4163
        %v4204 = vunpack.c.l.bf16 %v4164
        %v4205 = vunpack.c.l.bf16 %v4165
        %v4206 = vunpack.c.l.bf16 %v4166
        %v4207 = vunpack.c.l.bf16 %v4167
        %v4208 = vunpack.c.l.bf16 %v4168
        %v4209 = vunpack.c.l.bf16 %v4169
        %v4210 = vunpack.c.l.bf16 %v4170
        %v4211 = vunpack.c.l.bf16 %v4171
        %v4212 = vunpack.c.l.bf16 %v4172
        %v4213 = vunpack.c.l.bf16 %v4173
        %v4214 = vunpack.c.l.bf16 %v4174
        %v4215 = vunpack.c.l.bf16 %v4175
        %v4216 = vunpack.c.l.bf16 %v4176
        %v4217 = vunpack.c.l.bf16 %v4177
        %v4218 = vunpack.c.l.bf16 %v4178
        %v4219 = vunpack.c.l.bf16 %v4179
        %v4220 = vunpack.c.l.bf16 %v4180
        %v4221 = vunpack.c.l.bf16 %v4181
        %v4222 = vunpack.c.l.bf16 %v4182
        %v4223 = vunpack.c.l.bf16 %v4183
        %v4224 = vunpack.c.l.bf16 %v4184
        %v4225 = vunpack.c.l.bf16 %v4185
        %v4226 = vunpack.c.l.bf16 %v4186
        %v4227 = vunpack.c.l.bf16 %v4187
        %v4228 = vunpack.c.l.bf16 %v4188
        %v4229 = vunpack.c.l.bf16 %v4189
        %v4230 = vunpack.c.l.bf16 %v4190
        %v4231 = vunpack.c.l.bf16 %v4191
        %v4232 = vld [vmem:[#allocation10] sm:$0xf]
        %v4233 = vld [vmem:[#allocation10 + $0x4] sm:$0xf]
        %v4234 = vld [vmem:[#allocation10 + $0x8] sm:$0xf]
        %v4235 = vld [vmem:[#allocation10 + $0xc] sm:$0xf]
        %v4236 = vld [vmem:[#allocation10 + $0x10] sm:$0xf]
        %v4237 = vld [vmem:[#allocation10 + $0x14] sm:$0xf]
        %v4238 = vld [vmem:[#allocation10 + $0x18] sm:$0xf]
        %v4239 = vld [vmem:[#allocation10 + $0x1c] sm:$0xf]
        %v4240 = vld [vmem:[#allocation10 + $0x20] sm:$0xf]
        %v4241 = vld [vmem:[#allocation10 + $0x24] sm:$0xf]
        %v4242 = vld [vmem:[#allocation10 + $0x28] sm:$0xf]
        %v4243 = vld [vmem:[#allocation10 + $0x2c] sm:$0xf]
        %v4244 = vld [vmem:[#allocation10 + $0x30] sm:$0xf]
        %v4245 = vld [vmem:[#allocation10 + $0x34] sm:$0xf]
        %v4246 = vld [vmem:[#allocation10 + $0x38] sm:$0xf]
        %v4247 = vld [vmem:[#allocation10 + $0x3c] sm:$0xf]
        %v4248 = vld [vmem:[#allocation10 + $0x40] sm:$0xf]
        %v4249 = vld [vmem:[#allocation10 + $0x44] sm:$0xf]
        %v4250 = vld [vmem:[#allocation10 + $0x48] sm:$0xf]
        %v4251 = vld [vmem:[#allocation10 + $0x4c] sm:$0xf]
        %v4252 = vld [vmem:[#allocation10 + $0x50] sm:$0xf]
        %v4253 = vld [vmem:[#allocation10 + $0x54] sm:$0xf]
        %v4254 = vld [vmem:[#allocation10 + $0x58] sm:$0xf]
        %v4255 = vld [vmem:[#allocation10 + $0x5c] sm:$0xf]
        %v4256 = vld [vmem:[#allocation10 + $0x60] sm:$0xf]
        %v4257 = vld [vmem:[#allocation10 + $0x64] sm:$0xf]
        %v4258 = vld [vmem:[#allocation10 + $0x68] sm:$0xf]
        %v4259 = vld [vmem:[#allocation10 + $0x6c] sm:$0xf]
        %v4260 = vld [vmem:[#allocation10 + $0x70] sm:$0xf]
        %v4261 = vld [vmem:[#allocation10 + $0x74] sm:$0xf]
        %v4262 = vld [vmem:[#allocation10 + $0x78] sm:$0xf]
        %v4263 = vld [vmem:[#allocation10 + $0x7c] sm:$0xf]
        %v4264 = vld [vmem:[#allocation10 + $0x80] sm:$0xf]
        %v4265 = vld [vmem:[#allocation10 + $0x84] sm:$0xf]
        %v4266 = vld [vmem:[#allocation10 + $0x88] sm:$0xf]
        %v4267 = vld [vmem:[#allocation10 + $0x8c] sm:$0xf]
        %v4268 = vld [vmem:[#allocation10 + $0x90] sm:$0xf]
        %v4269 = vld [vmem:[#allocation10 + $0x94] sm:$0xf]
        %v4270 = vld [vmem:[#allocation10 + $0x98] sm:$0xf]
        %v4271 = vld [vmem:[#allocation10 + $0x9c] sm:$0xf]
        %v4272 = vld [vmem:[#allocation10 + $0xa0] sm:$0xf]
        %v4273 = vld [vmem:[#allocation10 + $0xa4] sm:$0xf]
        %v4274 = vld [vmem:[#allocation10 + $0xa8] sm:$0xf]
        %v4275 = vld [vmem:[#allocation10 + $0xac] sm:$0xf]
        %v4276 = vld [vmem:[#allocation10 + $0xb0] sm:$0xf]
        %v4277 = vld [vmem:[#allocation10 + $0xb4] sm:$0xf]
        %v4278 = vld [vmem:[#allocation10 + $0xb8] sm:$0xf]
        %v4279 = vld [vmem:[#allocation10 + $0xbc] sm:$0xf]
        %v4328 = vunpack.c.l.b16 %v4152
        %v4329 = vunpack.c.l.b16 %v4160
        %v4330 = vunpack.c.l.b16 %v4168
        %v4331 = vunpack.c.l.b16 %v4153
        %v4332 = vunpack.c.l.b16 %v4161
        %v4333 = vunpack.c.l.b16 %v4169
        %v4334 = vunpack.c.l.b16 %v4154
        %v4335 = vunpack.c.l.b16 %v4162
        %v4336 = vunpack.c.l.b16 %v4170
        %v4337 = vunpack.c.l.b16 %v4155
        %v4338 = vunpack.c.l.b16 %v4163
        %v4339 = vunpack.c.l.b16 %v4171
        %v4340 = vunpack.c.l.b16 %v4156
        %v4341 = vunpack.c.l.b16 %v4164
        %v4342 = vunpack.c.l.b16 %v4172
        %v4343 = vunpack.c.l.b16 %v4157
        %v4344 = vunpack.c.l.b16 %v4165
        %v4345 = vunpack.c.l.b16 %v4173
        %v4346 = vunpack.c.l.b16 %v4158
        %v4347 = vunpack.c.l.b16 %v4166
        %v4348 = vunpack.c.l.b16 %v4174
        %v4349 = vunpack.c.l.b16 %v4159
        %v4350 = vunpack.c.l.b16 %v4167
        %v4351 = vunpack.c.l.b16 %v4175
        %v4352 = vunpack.c.l.b16 %v4176
        %v4353 = vunpack.c.l.b16 %v4177
        %v4354 = vunpack.c.l.b16 %v4178
        %v4355 = vunpack.c.l.b16 %v4179
        %v4356 = vunpack.c.l.b16 %v4180
        %v4357 = vunpack.c.l.b16 %v4181
        %v4358 = vunpack.c.l.b16 %v4182
        %v4359 = vunpack.c.l.b16 %v4183
        %v4360 = vunpack.c.l.b16 %v4184
        %v4361 = vunpack.c.l.b16 %v4185
        %v4362 = vunpack.c.l.b16 %v4186
        %v4363 = vunpack.c.l.b16 %v4187
        %v4364 = vunpack.c.l.b16 %v4188
        %v4365 = vunpack.c.l.b16 %v4189
        %v4366 = vunpack.c.l.b16 %v4190
        %v4367 = vunpack.c.l.b16 %v4191
        %v4368 = vunpack.c.l.b16 %v4192
        %v4369 = vunpack.c.l.b16 %v4193
        %v4370 = vunpack.c.l.b16 %v4194
        %v4371 = vunpack.c.l.b16 %v4195
        %v4372 = vunpack.c.l.b16 %v4196
        %v4373 = vunpack.c.l.b16 %v4197
        %v4374 = vunpack.c.l.b16 %v4198
        %v4375 = vunpack.c.l.b16 %v4199
        %v4376 = vpack.c.b16 %v4331, %v4328
        %v4377 = vpack.c.b16 %v4332, %v4329
        %v4378 = vpack.c.b16 %v4333, %v4330
        %v4379 = vpack.c.b16 %v4337, %v4334
        %v4380 = vpack.c.b16 %v4338, %v4335
        %v4381 = vpack.c.b16 %v4339, %v4336
        %v4382 = vpack.c.b16 %v4343, %v4340
        %v4383 = vpack.c.b16 %v4344, %v4341
        %v4384 = vpack.c.b16 %v4345, %v4342
        %v4385 = vpack.c.b16 %v4349, %v4346
        %v4386 = vpack.c.b16 %v4350, %v4347
        %v4387 = vpack.c.b16 %v4351, %v4348
        %v4388 = vpack.c.b16 %v4353, %v4352
        %v4389 = vpack.c.b16 %v4355, %v4354
        %v4390 = vpack.c.b16 %v4357, %v4356
        %v4391 = vpack.c.b16 %v4359, %v4358
        %v4392 = vpack.c.b16 %v4361, %v4360
        %v4393 = vpack.c.b16 %v4363, %v4362
        %v4394 = vpack.c.b16 %v4365, %v4364
        %v4395 = vpack.c.b16 %v4367, %v4366
        %v4396 = vpack.c.b16 %v4369, %v4368
        %v4397 = vpack.c.b16 %v4371, %v4370
        %v4398 = vpack.c.b16 %v4373, %v4372
        %v4399 = vpack.c.b16 %v4375, %v4374
        %v4472 = vunpack.c.l.b16 %v4232
        %v4473 = vunpack.c.l.b16 %v4233
        %v4474 = vunpack.c.l.b16 %v4234
        %v4475 = vunpack.c.l.b16 %v4235
        %v4476 = vunpack.c.l.b16 %v4236
        %v4477 = vunpack.c.l.b16 %v4237
        %v4478 = vunpack.c.l.b16 %v4238
        %v4479 = vunpack.c.l.b16 %v4239
        %v4480 = vunpack.c.l.b16 %v4240
        %v4481 = vunpack.c.l.b16 %v4241
        %v4482 = vunpack.c.l.b16 %v4242
        %v4483 = vunpack.c.l.b16 %v4243
        %v4484 = vunpack.c.l.b16 %v4244
        %v4485 = vunpack.c.l.b16 %v4245
        %v4486 = vunpack.c.l.b16 %v4246
        %v4487 = vunpack.c.l.b16 %v4247
        %v4488 = vunpack.c.l.b16 %v4248
        %v4489 = vunpack.c.l.b16 %v4249
        %v4490 = vunpack.c.l.b16 %v4250
        %v4491 = vunpack.c.l.b16 %v4251
        %v4492 = vunpack.c.l.b16 %v4252
        %v4493 = vunpack.c.l.b16 %v4253
        %v4494 = vunpack.c.l.b16 %v4254
        %v4495 = vunpack.c.l.b16 %v4255
        %v4496 = vunpack.c.l.b16 %v4256
        %v4497 = vunpack.c.l.b16 %v4257
        %v4498 = vunpack.c.l.b16 %v4258
        %v4499 = vunpack.c.l.b16 %v4259
        %v4500 = vunpack.c.l.b16 %v4260
        %v4501 = vunpack.c.l.b16 %v4261
        %v4502 = vunpack.c.l.b16 %v4262
        %v4503 = vunpack.c.l.b16 %v4263
        %v4504 = vunpack.c.l.b16 %v4264
        %v4505 = vunpack.c.l.b16 %v4265
        %v4506 = vunpack.c.l.b16 %v4266
        %v4507 = vunpack.c.l.b16 %v4267
        %v4508 = vunpack.c.l.b16 %v4268
        %v4509 = vunpack.c.l.b16 %v4269
        %v4510 = vunpack.c.l.b16 %v4270
        %v4511 = vunpack.c.l.b16 %v4271
        %v4512 = vunpack.c.l.b16 %v4272
        %v4513 = vunpack.c.l.b16 %v4273
        %v4514 = vunpack.c.l.b16 %v4274
        %v4515 = vunpack.c.l.b16 %v4275
        %v4516 = vunpack.c.l.b16 %v4276
        %v4517 = vunpack.c.l.b16 %v4277
        %v4518 = vunpack.c.l.b16 %v4278
        %v4519 = vunpack.c.l.b16 %v4279
        %v4520 = vpack.c.b16 %v4473, %v4472
        %v4521 = vpack.c.b16 %v4475, %v4474
        %v4522 = vpack.c.b16 %v4477, %v4476
        %v4523 = vpack.c.b16 %v4479, %v4478
        %v4524 = vpack.c.b16 %v4481, %v4480
        %v4525 = vpack.c.b16 %v4483, %v4482
        %v4526 = vpack.c.b16 %v4485, %v4484
        %v4527 = vpack.c.b16 %v4487, %v4486
        %v4528 = vpack.c.b16 %v4489, %v4488
        %v4529 = vpack.c.b16 %v4491, %v4490
        %v4530 = vpack.c.b16 %v4493, %v4492
        %v4531 = vpack.c.b16 %v4495, %v4494
        %v4532 = vpack.c.b16 %v4497, %v4496
        %v4533 = vpack.c.b16 %v4499, %v4498
        %v4534 = vpack.c.b16 %v4501, %v4500
        %v4535 = vpack.c.b16 %v4503, %v4502
        %v4536 = vpack.c.b16 %v4505, %v4504
        %v4537 = vpack.c.b16 %v4507, %v4506
        %v4538 = vpack.c.b16 %v4509, %v4508
        %v4539 = vpack.c.b16 %v4511, %v4510
        %v4540 = vpack.c.b16 %v4513, %v4512
        %v4541 = vpack.c.b16 %v4515, %v4514
        %v4542 = vpack.c.b16 %v4517, %v4516
        %v4543 = vpack.c.b16 %v4519, %v4518
        %4568 = vmatprep.subr.bf16.mxu0 0
        %4569 = vmatpush1.bf16.msra.mxu0 %v4520
        %4570 = vmatprep.subr.bf16.mxu0 0
        %4571 = vmatpush1.bf16.msra.mxu0 %v4521
        %4572 = vmatprep.subr.bf16.mxu0 0
        %4573 = vmatpush1.bf16.msra.mxu0 %v4522
        %4574 = vmatprep.subr.bf16.mxu0 0
        %4575 = vmatpush1.bf16.msra.mxu0 %v4523
        %4576 = vmatprep.subr.bf16.mxu0 0
        %4577 = vmatpush1.bf16.msra.mxu0 %v4524
        %4578 = vmatprep.subr.bf16.mxu0 0
        %4579 = vmatpush1.bf16.msra.mxu0 %v4525
        %4580 = vmatprep.subr.bf16.mxu0 0
        %4581 = vmatpush1.bf16.msra.mxu0 %v4526
        %4582 = vmatprep.subr.bf16.mxu0 0
        %4583 = vmatpush1.bf16.msra.mxu0 %v4527
        %4584 = vmatprep.subr.bf16.mxu0 0
        %4585 = vmatpush1.bf16.msra.mxu0 %v4528
        %4586 = vmatprep.subr.bf16.mxu0 0
        %4587 = vmatpush1.bf16.msra.mxu0 %v4529
        %4588 = vmatprep.subr.bf16.mxu0 0
        %4589 = vmatpush1.bf16.msra.mxu0 %v4530
        %4590 = vmatprep.subr.bf16.mxu0 0
        %4591 = vmatpush1.bf16.msra.mxu0 %v4531
        %4592 = vmatprep.subr.bf16.mxu0 0
        %4593 = vmatpush1.bf16.msra.mxu0 %v4532
        %4594 = vmatprep.subr.bf16.mxu0 0
        %4595 = vmatpush1.bf16.msra.mxu0 %v4533
        %4596 = vmatprep.subr.bf16.mxu0 0
        %4597 = vmatpush1.bf16.msra.mxu0 %v4534
        %4598 = vmatprep.subr.bf16.mxu0 0
        %4599 = vmatpush1.bf16.msra.mxu0 %v4535
        %4600 = vmatprep.mubr.bf16.mxu0 %v4377
        %4601 = vmatmul.mubr.bf16.gmra.mrb[0].mxu0 %v4376
        %v4602 = vpop.f32.mrb[0].mxu0
        %v4603 = vadd.f32 0.0, %v4602
        %v4604 = vpop.f32.mrb[0].mxu0
        %v4605 = vpop.f32.mrb[0].mxu0
        %v4606 = vadd.f32 0.0, %v4605
        %v4607 = vpop.f32.mrb[0].mxu0
        %4608 = vmatprep.mubr.bf16.mxu0 %v4380
        %4609 = vmatmul.mubr.bf16.gmra.mrb[0].mxu0 %v4379
        %v4610 = vpop.f32.mrb[0].mxu0
        %v4611 = vadd.f32 0.0, %v4610
        %v4612 = vpop.f32.mrb[0].mxu0
        %v4613 = vpop.f32.mrb[0].mxu0
        %v4614 = vadd.f32 0.0, %v4613
        %v4615 = vpop.f32.mrb[0].mxu0
        %4616 = vmatprep.mubr.bf16.mxu0 %v4383
        %4617 = vmatmul.mubr.bf16.gmra.mrb[0].mxu0 %v4382
        %v4618 = vpop.f32.mrb[0].mxu0
        %v4619 = vadd.f32 0.0, %v4618
        %v4620 = vpop.f32.mrb[0].mxu0
        %v4621 = vpop.f32.mrb[0].mxu0
        %v4622 = vadd.f32 0.0, %v4621
        %v4623 = vpop.f32.mrb[0].mxu0
        %4624 = vmatprep.mubr.bf16.mxu0 %v4386
        %4625 = vmatmul.mubr.bf16.gmra.mrb[0].mxu0 %v4385
        %v4626 = vpop.f32.mrb[0].mxu0
        %v4627 = vadd.f32 0.0, %v4626
        %v4628 = vpop.f32.mrb[0].mxu0
        %v4629 = vpop.f32.mrb[0].mxu0
        %v4630 = vadd.f32 0.0, %v4629
        %v4631 = vpop.f32.mrb[0].mxu0
        %4632 = vmatprep.mubr.bf16.mxu0 %v4378
        %4633 = vmatmul.mubr.bf16.gmra.mrb[0].mxu0 %v4377
        %v4634 = vpop.f32.mrb[0].mxu0
        %v4635 = vadd.f32 0.0, %v4634
        %v4636 = vpop.f32.mrb[0].mxu0
        %v4637 = vpop.f32.mrb[0].mxu0
        %v4638 = vadd.f32 0.0, %v4637
        %v4639 = vpop.f32.mrb[0].mxu0
        %4640 = vmatprep.mubr.bf16.mxu0 %v4381
        %4641 = vmatmul.mubr.bf16.gmra.mrb[0].mxu0 %v4380
        %v4642 = vpop.f32.mrb[0].mxu0
        %v4643 = vadd.f32 0.0, %v4642
        %v4644 = vpop.f32.mrb[0].mxu0
        %v4645 = vpop.f32.mrb[0].mxu0
        %v4646 = vadd.f32 0.0, %v4645
        %v4647 = vpop.f32.mrb[0].mxu0
        %4648 = vmatprep.mubr.bf16.mxu0 %v4384
        %4649 = vmatmul.mubr.bf16.gmra.mrb[0].mxu0 %v4383
        %v4650 = vpop.f32.mrb[0].mxu0
        %v4651 = vadd.f32 0.0, %v4650
        %v4652 = vpop.f32.mrb[0].mxu0
        %v4653 = vpop.f32.mrb[0].mxu0
        %v4654 = vadd.f32 0.0, %v4653
        %v4655 = vpop.f32.mrb[0].mxu0
        %4656 = vmatprep.mubr.bf16.mxu0 %v4387
        %4657 = vmatmul.mubr.bf16.gmra.mrb[0].mxu0 %v4386
        %v4658 = vpop.f32.mrb[0].mxu0
        %v4659 = vadd.f32 0.0, %v4658
        %v4660 = vpop.f32.mrb[0].mxu0
        %v4661 = vpop.f32.mrb[0].mxu0
        %v4662 = vadd.f32 0.0, %v4661
        %v4663 = vpop.f32.mrb[0].mxu0
        %4664 = vmatprep.mubr.bf16.mxu0 %v4388
        %4665 = vmatmul.mubr.bf16.gmra.mrb[0].mxu0 %v4378
        %v4666 = vpop.f32.mrb[0].mxu0
        %v4667 = vadd.f32 0.0, %v4666
        %v4668 = vpop.f32.mrb[0].mxu0
        %v4669 = vpop.f32.mrb[0].mxu0
        %v4670 = vadd.f32 0.0, %v4669
        %v4671 = vpop.f32.mrb[0].mxu0
        %4672 = vmatprep.mubr.bf16.mxu0 %v4389
        %4673 = vmatmul.mubr.bf16.gmra.mrb[0].mxu0 %v4381
        %v4674 = vpop.f32.mrb[0].mxu0
        %v4675 = vadd.f32 0.0, %v4674
        %v4676 = vpop.f32.mrb[0].mxu0
        %v4677 = vpop.f32.mrb[0].mxu0
        %v4678 = vadd.f32 0.0, %v4677
        %v4679 = vpop.f32.mrb[0].mxu0
        %4680 = vmatprep.mubr.bf16.mxu0 %v4390
        %4681 = vmatmul.mubr.bf16.gmra.mrb[0].mxu0 %v4384
        %v4682 = vpop.f32.mrb[0].mxu0
        %v4683 = vadd.f32 0.0, %v4682
        %v4684 = vpop.f32.mrb[0].mxu0
        %v4685 = vpop.f32.mrb[0].mxu0
        %v4686 = vadd.f32 0.0, %v4685
        %v4687 = vpop.f32.mrb[0].mxu0
        %4688 = vmatprep.mubr.bf16.mxu0 %v4391
        %4689 = vmatmul.mubr.bf16.gmra.mrb[0].mxu0 %v4387
        %v4690 = vpop.f32.mrb[0].mxu0
        %v4691 = vadd.f32 0.0, %v4690
        %v4692 = vpop.f32.mrb[0].mxu0
        %v4693 = vpop.f32.mrb[0].mxu0
        %v4694 = vadd.f32 0.0, %v4693
        %v4695 = vpop.f32.mrb[0].mxu0
        %4696 = vmatprep.mubr.bf16.mxu0 %v4392
        %4697 = vmatmul.mubr.bf16.gmra.mrb[0].mxu0 %v4388
        %v4698 = vpop.f32.mrb[0].mxu0
        %v4699 = vadd.f32 0.0, %v4698
        %v4700 = vpop.f32.mrb[0].mxu0
        %v4701 = vpop.f32.mrb[0].mxu0
        %v4702 = vadd.f32 0.0, %v4701
        %v4703 = vpop.f32.mrb[0].mxu0
        %4704 = vmatprep.mubr.bf16.mxu0 %v4393
        %4705 = vmatmul.mubr.bf16.gmra.mrb[0].mxu0 %v4389
        %v4706 = vpop.f32.mrb[0].mxu0
        %v4707 = vadd.f32 0.0, %v4706
        %v4708 = vpop.f32.mrb[0].mxu0
        %v4709 = vpop.f32.mrb[0].mxu0
        %v4710 = vadd.f32 0.0, %v4709
        %v4711 = vpop.f32.mrb[0].mxu0
        %4712 = vmatprep.mubr.bf16.mxu0 %v4394
        %4713 = vmatmul.mubr.bf16.gmra.mrb[0].mxu0 %v4390
        %v4714 = vpop.f32.mrb[0].mxu0
        %v4715 = vadd.f32 0.0, %v4714
        %v4716 = vpop.f32.mrb[0].mxu0
        %v4717 = vpop.f32.mrb[0].mxu0
        %v4718 = vadd.f32 0.0, %v4717
        %v4719 = vpop.f32.mrb[0].mxu0
        %4720 = vmatprep.mubr.bf16.mxu0 %v4395
        %4721 = vmatmul.mubr.bf16.gmra.mrb[0].mxu0 %v4391
        %v4722 = vpop.f32.mrb[0].mxu0
        %v4723 = vadd.f32 0.0, %v4722
        %v4724 = vpop.f32.mrb[0].mxu0
        %v4725 = vpop.f32.mrb[0].mxu0
        %v4726 = vadd.f32 0.0, %v4725
        %v4727 = vpop.f32.mrb[0].mxu0
        %4728 = vdwg.mxu0
        %4729 = vmatprep.subr.bf16.mxu0 0
        %4730 = vmatpush1.bf16.msra.mxu0 %v4536
        %4731 = vmatprep.subr.bf16.mxu0 0
        %4732 = vmatpush1.bf16.msra.mxu0 %v4537
        %4733 = vmatprep.subr.bf16.mxu0 0
        %4734 = vmatpush1.bf16.msra.mxu0 %v4538
        %4735 = vmatprep.subr.bf16.mxu0 0
        %4736 = vmatpush1.bf16.msra.mxu0 %v4539
        %4737 = vmatprep.subr.bf16.mxu0 0
        %4738 = vmatpush1.bf16.msra.mxu0 %v4540
        %4739 = vmatprep.subr.bf16.mxu0 0
        %4740 = vmatpush1.bf16.msra.mxu0 %v4541
        %4741 = vmatprep.subr.bf16.mxu0 0
        %4742 = vmatpush1.bf16.msra.mxu0 %v4542
        %4743 = vmatprep.subr.bf16.mxu0 0
        %4744 = vmatpush1.bf16.msra.mxu0 %v4543
        %4745 = vmatprep.subr.bf16.mxu0 0
        %4746 = vmatpush1.bf16.msra.mxu0 0
        %4747 = vmatprep.subr.bf16.mxu0 0
        %4748 = vmatpush1.bf16.msra.mxu0 0
        %4749 = vmatprep.subr.bf16.mxu0 0
        %4750 = vmatpush1.bf16.msra.mxu0 0
        %4751 = vmatprep.subr.bf16.mxu0 0
        %4752 = vmatpush1.bf16.msra.mxu0 0
        %4753 = vmatprep.subr.bf16.mxu0 0
        %4754 = vmatpush1.bf16.msra.mxu0 0
        %4755 = vmatprep.subr.bf16.mxu0 0
        %4756 = vmatpush1.bf16.msra.mxu0 0
        %4757 = vmatprep.subr.bf16.mxu0 0
        %4758 = vmatpush1.bf16.msra.mxu0 0
        %4759 = vmatprep.subr.bf16.mxu0 0
        %4760 = vmatpush1.bf16.msra.mxu0 0
        %4761 = vmatprep.mubr.bf16.mxu0 0
        %4762 = vmatmul.mubr.bf16.gmra.mrb[0].mxu0 %v4378
        %v4763 = vpop.f32.mrb[0].mxu0
        %v4764 = vadd.f32 %v4603, %v4763
        %v4765 = vpop.f32.mrb[0].mxu0
        %v4766 = vpop.f32.mrb[0].mxu0
        %v4767 = vadd.f32 %v4606, %v4766
        %v4768 = vpop.f32.mrb[0].mxu0
        %4769 = vmatprep.mubr.bf16.mxu0 0
        %4770 = vmatmul.mubr.bf16.gmra.mrb[0].mxu0 %v4381
        %v4771 = vpop.f32.mrb[0].mxu0
        %v4772 = vadd.f32 %v4611, %v4771
        %v4773 = vpop.f32.mrb[0].mxu0
        %v4774 = vpop.f32.mrb[0].mxu0
        %v4775 = vadd.f32 %v4614, %v4774
        %v4776 = vpop.f32.mrb[0].mxu0
        %4777 = vmatprep.mubr.bf16.mxu0 0
        %4778 = vmatmul.mubr.bf16.gmra.mrb[0].mxu0 %v4384
        %v4779 = vpop.f32.mrb[0].mxu0
        %v4780 = vadd.f32 %v4619, %v4779
        %v4781 = vpop.f32.mrb[0].mxu0
        %v4782 = vpop.f32.mrb[0].mxu0
        %v4783 = vadd.f32 %v4622, %v4782
        %v4784 = vpop.f32.mrb[0].mxu0
        %4785 = vmatprep.mubr.bf16.mxu0 0
        %4786 = vmatmul.mubr.bf16.gmra.mrb[0].mxu0 %v4387
        %v4787 = vpop.f32.mrb[0].mxu0
        %v4788 = vadd.f32 %v4627, %v4787
        %v4789 = vpop.f32.mrb[0].mxu0
        %v4790 = vpop.f32.mrb[0].mxu0
        %v4791 = vadd.f32 %v4630, %v4790
        %v4792 = vpop.f32.mrb[0].mxu0
        %4793 = vmatprep.mubr.bf16.mxu0 0
        %4794 = vmatmul.mubr.bf16.gmra.mrb[0].mxu0 %v4388
        %v4795 = vpop.f32.mrb[0].mxu0
        %v4796 = vadd.f32 %v4635, %v4795
        %v4797 = vpop.f32.mrb[0].mxu0
        %v4798 = vpop.f32.mrb[0].mxu0
        %v4799 = vadd.f32 %v4638, %v4798
        %v4800 = vpop.f32.mrb[0].mxu0
        %4801 = vmatprep.mubr.bf16.mxu0 0
        %4802 = vmatmul.mubr.bf16.gmra.mrb[0].mxu0 %v4389
        %v4803 = vpop.f32.mrb[0].mxu0
        %v4804 = vadd.f32 %v4643, %v4803
        %v4805 = vpop.f32.mrb[0].mxu0
        %v4806 = vpop.f32.mrb[0].mxu0
        %v4807 = vadd.f32 %v4646, %v4806
        %v4808 = vpop.f32.mrb[0].mxu0
        %4809 = vmatprep.mubr.bf16.mxu0 0
        %4810 = vmatmul.mubr.bf16.gmra.mrb[0].mxu0 %v4390
        %v4811 = vpop.f32.mrb[0].mxu0
        %v4812 = vadd.f32 %v4651, %v4811
        %v4813 = vpop.f32.mrb[0].mxu0
        %v4814 = vpop.f32.mrb[0].mxu0
        %v4815 = vadd.f32 %v4654, %v4814
        %v4816 = vpop.f32.mrb[0].mxu0
        %4817 = vmatprep.mubr.bf16.mxu0 0
        %4818 = vmatmul.mubr.bf16.gmra.mrb[0].mxu0 %v4391
        %v4819 = vpop.f32.mrb[0].mxu0
        %v4820 = vadd.f32 %v4659, %v4819
        %v4821 = vpop.f32.mrb[0].mxu0
        %v4822 = vpop.f32.mrb[0].mxu0
        %v4823 = vadd.f32 %v4662, %v4822
        %v4824 = vpop.f32.mrb[0].mxu0
        %4825 = vmatprep.mubr.bf16.mxu0 0
        %4826 = vmatmul.mubr.bf16.gmra.mrb[0].mxu0 %v4392
        %v4827 = vpop.f32.mrb[0].mxu0
        %v4828 = vadd.f32 %v4667, %v4827
        %v4829 = vpop.f32.mrb[0].mxu0
        %v4830 = vpop.f32.mrb[0].mxu0
        %v4831 = vadd.f32 %v4670, %v4830
        %v4832 = vpop.f32.mrb[0].mxu0
        %4833 = vmatprep.mubr.bf16.mxu0 0
        %4834 = vmatmul.mubr.bf16.gmra.mrb[0].mxu0 %v4393
        %v4835 = vpop.f32.mrb[0].mxu0
        %v4836 = vadd.f32 %v4675, %v4835
        %v4837 = vpop.f32.mrb[0].mxu0
        %v4838 = vpop.f32.mrb[0].mxu0
        %v4839 = vadd.f32 %v4678, %v4838
        %v4840 = vpop.f32.mrb[0].mxu0
        %4841 = vmatprep.mubr.bf16.mxu0 0
        %4842 = vmatmul.mubr.bf16.gmra.mrb[0].mxu0 %v4394
        %v4843 = vpop.f32.mrb[0].mxu0
        %v4844 = vadd.f32 %v4683, %v4843
        %v4845 = vpop.f32.mrb[0].mxu0
        %v4846 = vpop.f32.mrb[0].mxu0
        %v4847 = vadd.f32 %v4686, %v4846
        %v4848 = vpop.f32.mrb[0].mxu0
        %4849 = vmatprep.mubr.bf16.mxu0 0
        %4850 = vmatmul.mubr.bf16.gmra.mrb[0].mxu0 %v4395
        %v4851 = vpop.f32.mrb[0].mxu0
        %v4852 = vadd.f32 %v4691, %v4851
        %v4853 = vpop.f32.mrb[0].mxu0
        %v4854 = vpop.f32.mrb[0].mxu0
        %v4855 = vadd.f32 %v4694, %v4854
        %v4856 = vpop.f32.mrb[0].mxu0
        %4857 = vmatprep.mubr.bf16.mxu0 0
        %4858 = vmatmul.mubr.bf16.gmra.mrb[0].mxu0 %v4396
        %v4859 = vpop.f32.mrb[0].mxu0
        %v4860 = vadd.f32 %v4699, %v4859
        %v4861 = vpop.f32.mrb[0].mxu0
        %v4862 = vpop.f32.mrb[0].mxu0
        %v4863 = vadd.f32 %v4702, %v4862
        %v4864 = vpop.f32.mrb[0].mxu0
        %4865 = vmatprep.mubr.bf16.mxu0 0
        %4866 = vmatmul.mubr.bf16.gmra.mrb[0].mxu0 %v4397
        %v4867 = vpop.f32.mrb[0].mxu0
        %v4868 = vadd.f32 %v4707, %v4867
        %v4869 = vpop.f32.mrb[0].mxu0
        %v4870 = vpop.f32.mrb[0].mxu0
        %v4871 = vadd.f32 %v4710, %v4870
        %v4872 = vpop.f32.mrb[0].mxu0
        %4873 = vmatprep.mubr.bf16.mxu0 0
        %4874 = vmatmul.mubr.bf16.gmra.mrb[0].mxu0 %v4398
        %v4875 = vpop.f32.mrb[0].mxu0
        %v4876 = vadd.f32 %v4715, %v4875
        %v4877 = vpop.f32.mrb[0].mxu0
        %v4878 = vpop.f32.mrb[0].mxu0
        %v4879 = vadd.f32 %v4718, %v4878
        %v4880 = vpop.f32.mrb[0].mxu0
        %4881 = vmatprep.mubr.bf16.mxu0 0
        %4882 = vmatmul.mubr.bf16.gmra.mrb[0].mxu0 %v4399
        %v4883 = vpop.f32.mrb[0].mxu0
        %v4884 = vadd.f32 %v4723, %v4883
        %v4885 = vpop.f32.mrb[0].mxu0
        %v4886 = vpop.f32.mrb[0].mxu0
        %v4887 = vadd.f32 %v4726, %v4886
        %v4888 = vpop.f32.mrb[0].mxu0
        %4889 = vdwg.mxu0
        %v4890 = vld [vmem:[%s7] sm:$0x1]
        %v4892 = vlaneseq
        %v4893 = vshrl.u32 %v4892, 7
        %v4894 = vsub.s32 0, %v4893
        %v4895 = vrot.slane %v4890, %v4894
        %v4897 = vadd.f32 %v4764, %v4895
        %v4898 = vadd.f32 %v4767, %v4895
        %v4899 = vadd.f32 %v4772, %v4895
        %v4900 = vadd.f32 %v4775, %v4895
        %v4901 = vadd.f32 %v4780, %v4895
        %v4902 = vadd.f32 %v4783, %v4895
        %v4903 = vadd.f32 %v4788, %v4895
        %v4904 = vadd.f32 %v4791, %v4895
        %v4905 = vadd.f32 %v4796, %v4895
        %v4906 = vadd.f32 %v4799, %v4895
        %v4907 = vadd.f32 %v4804, %v4895
        %v4908 = vadd.f32 %v4807, %v4895
        %v4909 = vadd.f32 %v4812, %v4895
        %v4910 = vadd.f32 %v4815, %v4895
        %v4911 = vadd.f32 %v4820, %v4895
        %v4912 = vadd.f32 %v4823, %v4895
        %v4913 = vadd.f32 %v4828, %v4895
        %v4914 = vadd.f32 %v4831, %v4895
        %v4915 = vadd.f32 %v4836, %v4895
        %v4916 = vadd.f32 %v4839, %v4895
        %v4917 = vadd.f32 %v4844, %v4895
        %v4918 = vadd.f32 %v4847, %v4895
        %v4919 = vadd.f32 %v4852, %v4895
        %v4920 = vadd.f32 %v4855, %v4895
        %v4921 = vadd.f32 %v4860, %v4895
        %v4922 = vadd.f32 %v4863, %v4895
        %v4923 = vadd.f32 %v4868, %v4895
        %v4924 = vadd.f32 %v4871, %v4895
        %v4925 = vadd.f32 %v4876, %v4895
        %v4926 = vadd.f32 %v4879, %v4895
        %v4927 = vadd.f32 %v4884, %v4895
        %v4928 = vadd.f32 %v4887, %v4895
        %v4929 = vadd.f32 %v4897, %v4200
        %v4930 = vadd.f32 %v4898, %v4201
        %v4931 = vadd.f32 %v4899, %v4202
        %v4932 = vadd.f32 %v4900, %v4203
        %v4933 = vadd.f32 %v4901, %v4204
        %v4934 = vadd.f32 %v4902, %v4205
        %v4935 = vadd.f32 %v4903, %v4206
        %v4936 = vadd.f32 %v4904, %v4207
        %v4937 = vadd.f32 %v4905, %v4208
        %v4938 = vadd.f32 %v4906, %v4209
        %v4939 = vadd.f32 %v4907, %v4210
        %v4940 = vadd.f32 %v4908, %v4211
        %v4941 = vadd.f32 %v4909, %v4212
        %v4942 = vadd.f32 %v4910, %v4213
        %v4943 = vadd.f32 %v4911, %v4214
        %v4944 = vadd.f32 %v4912, %v4215
        %v4945 = vadd.f32 %v4913, %v4216
        %v4946 = vadd.f32 %v4914, %v4217
        %v4947 = vadd.f32 %v4915, %v4218
        %v4948 = vadd.f32 %v4916, %v4219
        %v4949 = vadd.f32 %v4917, %v4220
        %v4950 = vadd.f32 %v4918, %v4221
        %v4951 = vadd.f32 %v4919, %v4222
        %v4952 = vadd.f32 %v4920, %v4223
        %v4953 = vadd.f32 %v4921, %v4224
        %v4954 = vadd.f32 %v4922, %v4225
        %v4955 = vadd.f32 %v4923, %v4226
        %v4956 = vadd.f32 %v4924, %v4227
        %v4957 = vadd.f32 %v4925, %v4228
        %v4958 = vadd.f32 %v4926, %v4229
        %v4959 = vadd.f32 %v4927, %v4230
        %v4960 = vadd.f32 %v4928, %v4231
        %v4961 = vadd.f32 %v4929, %v3931
        %v4962 = vadd.f32 %v4930, %v3932
        %v4963 = vadd.f32 %v4931, %v3933
        %v4964 = vadd.f32 %v4932, %v3934
        %v4965 = vadd.f32 %v4933, %v3935
        %v4966 = vadd.f32 %v4934, %v3936
        %v4967 = vadd.f32 %v4935, %v3937
        %v4968 = vadd.f32 %v4936, %v3938
        %v4969 = vadd.f32 %v4937, %v3939
        %v4970 = vadd.f32 %v4938, %v3940
        %v4971 = vadd.f32 %v4939, %v3941
        %v4972 = vadd.f32 %v4940, %v3942
        %v4973 = vadd.f32 %v4941, %v3943
        %v4974 = vadd.f32 %v4942, %v3944
        %v4975 = vadd.f32 %v4943, %v3945
        %v4976 = vadd.f32 %v4944, %v3946
        %v4977 = vadd.f32 %v4945, %v3947
        %v4978 = vadd.f32 %v4946, %v3948
        %v4979 = vadd.f32 %v4947, %v3949
        %v4980 = vadd.f32 %v4948, %v3950
        %v4981 = vadd.f32 %v4949, %v3951
        %v4982 = vadd.f32 %v4950, %v3952
        %v4983 = vadd.f32 %v4951, %v3953
        %v4984 = vadd.f32 %v4952, %v3954
        %v4985 = vadd.f32 %v4953, %v3955
        %v4986 = vadd.f32 %v4954, %v3956
        %v4987 = vadd.f32 %v4955, %v3957
        %v4988 = vadd.f32 %v4956, %v3958
        %v4989 = vadd.f32 %v4957, %v3959
        %v4990 = vadd.f32 %v4958, %v3960
        %v4991 = vadd.f32 %v4959, %v3961
        %v4992 = vadd.f32 %v4960, %v3962
        %v4993 = vmax.f32 %v4961, 0.0
        %v4994 = vmax.f32 %v4962, 0.0
        %v4995 = vmax.f32 %v4963, 0.0
        %v4996 = vmax.f32 %v4964, 0.0
        %v4997 = vmax.f32 %v4965, 0.0
        %v4998 = vmax.f32 %v4966, 0.0
        %v4999 = vmax.f32 %v4967, 0.0
        %v5000 = vmax.f32 %v4968, 0.0
        %v5001 = vmax.f32 %v4969, 0.0
        %v5002 = vmax.f32 %v4970, 0.0
        %v5003 = vmax.f32 %v4971, 0.0
        %v5004 = vmax.f32 %v4972, 0.0
        %v5005 = vmax.f32 %v4973, 0.0
        %v5006 = vmax.f32 %v4974, 0.0
        %v5007 = vmax.f32 %v4975, 0.0
        %v5008 = vmax.f32 %v4976, 0.0
        %v5009 = vmax.f32 %v4977, 0.0
        %v5010 = vmax.f32 %v4978, 0.0
        %v5011 = vmax.f32 %v4979, 0.0
        %v5012 = vmax.f32 %v4980, 0.0
        %v5013 = vmax.f32 %v4981, 0.0
        %v5014 = vmax.f32 %v4982, 0.0
        %v5015 = vmax.f32 %v4983, 0.0
        %v5016 = vmax.f32 %v4984, 0.0
        %v5017 = vmax.f32 %v4985, 0.0
        %v5018 = vmax.f32 %v4986, 0.0
        %v5019 = vmax.f32 %v4987, 0.0
        %v5020 = vmax.f32 %v4988, 0.0
        %v5021 = vmax.f32 %v4989, 0.0
        %v5022 = vmax.f32 %v4990, 0.0
        %v5023 = vmax.f32 %v4991, 0.0
        %v5024 = vmax.f32 %v4992, 0.0
        %v5025 = vpack.c.bf16 %v4993, %v4993
        %v5026 = vpack.c.bf16 %v4994, %v4994
        %v5027 = vpack.c.bf16 %v4995, %v4995
        %v5028 = vpack.c.bf16 %v4996, %v4996
        %v5029 = vpack.c.bf16 %v4997, %v4997
        %v5030 = vpack.c.bf16 %v4998, %v4998
        %v5031 = vpack.c.bf16 %v4999, %v4999
        %v5032 = vpack.c.bf16 %v5000, %v5000
        %v5033 = vpack.c.bf16 %v5001, %v5001
        %v5034 = vpack.c.bf16 %v5002, %v5002
        %v5035 = vpack.c.bf16 %v5003, %v5003
        %v5036 = vpack.c.bf16 %v5004, %v5004
        %v5037 = vpack.c.bf16 %v5005, %v5005
        %v5038 = vpack.c.bf16 %v5006, %v5006
        %v5039 = vpack.c.bf16 %v5007, %v5007
        %v5040 = vpack.c.bf16 %v5008, %v5008
        %v5041 = vpack.c.bf16 %v5009, %v5009
        %v5042 = vpack.c.bf16 %v5010, %v5010
        %v5043 = vpack.c.bf16 %v5011, %v5011
        %v5044 = vpack.c.bf16 %v5012, %v5012
        %v5045 = vpack.c.bf16 %v5013, %v5013
        %v5046 = vpack.c.bf16 %v5014, %v5014
        %v5047 = vpack.c.bf16 %v5015, %v5015
        %v5048 = vpack.c.bf16 %v5016, %v5016
        %v5049 = vpack.c.bf16 %v5017, %v5017
        %v5050 = vpack.c.bf16 %v5018, %v5018
        %v5051 = vpack.c.bf16 %v5019, %v5019
        %v5052 = vpack.c.bf16 %v5020, %v5020
        %v5053 = vpack.c.bf16 %v5021, %v5021
        %v5054 = vpack.c.bf16 %v5022, %v5022
        %v5055 = vpack.c.bf16 %v5023, %v5023
        %v5056 = vpack.c.bf16 %v5024, %v5024
        %v5057 = vld [vmem:[#allocation12] sm:$0xf]
        %v5058 = vld [vmem:[#allocation12 + $0x4] sm:$0xf]
        %v5059 = vld [vmem:[#allocation12 + $0x8] sm:$0xf]
        %v5060 = vld [vmem:[#allocation12 + $0xc] sm:$0xf]
        %v5061 = vld [vmem:[#allocation12 + $0x10] sm:$0xf]
        %v5062 = vld [vmem:[#allocation12 + $0x14] sm:$0xf]
        %v5063 = vld [vmem:[#allocation12 + $0x18] sm:$0xf]
        %v5064 = vld [vmem:[#allocation12 + $0x1c] sm:$0xf]
        %v5065 = vld [vmem:[#allocation12 + $0x20] sm:$0xf]
        %v5066 = vld [vmem:[#allocation12 + $0x24] sm:$0xf]
        %v5067 = vld [vmem:[#allocation12 + $0x28] sm:$0xf]
        %v5068 = vld [vmem:[#allocation12 + $0x2c] sm:$0xf]
        %v5069 = vld [vmem:[#allocation12 + $0x30] sm:$0xf]
        %v5070 = vld [vmem:[#allocation12 + $0x34] sm:$0xf]
        %v5071 = vld [vmem:[#allocation12 + $0x38] sm:$0xf]
        %v5072 = vld [vmem:[#allocation12 + $0x3c] sm:$0xf]
        %v5105 = vunpack.c.l.b16 %v5025
        %v5106 = vunpack.c.l.b16 %v5026
        %v5107 = vunpack.c.l.b16 %v5027
        %v5108 = vunpack.c.l.b16 %v5028
        %v5109 = vunpack.c.l.b16 %v5029
        %v5110 = vunpack.c.l.b16 %v5030
        %v5111 = vunpack.c.l.b16 %v5031
        %v5112 = vunpack.c.l.b16 %v5032
        %v5113 = vunpack.c.l.b16 %v5033
        %v5114 = vunpack.c.l.b16 %v5034
        %v5115 = vunpack.c.l.b16 %v5035
        %v5116 = vunpack.c.l.b16 %v5036
        %v5117 = vunpack.c.l.b16 %v5037
        %v5118 = vunpack.c.l.b16 %v5038
        %v5119 = vunpack.c.l.b16 %v5039
        %v5120 = vunpack.c.l.b16 %v5040
        %v5121 = vunpack.c.l.b16 %v5041
        %v5122 = vunpack.c.l.b16 %v5042
        %v5123 = vunpack.c.l.b16 %v5043
        %v5124 = vunpack.c.l.b16 %v5044
        %v5125 = vunpack.c.l.b16 %v5045
        %v5126 = vunpack.c.l.b16 %v5046
        %v5127 = vunpack.c.l.b16 %v5047
        %v5128 = vunpack.c.l.b16 %v5048
        %v5129 = vunpack.c.l.b16 %v5049
        %v5130 = vunpack.c.l.b16 %v5050
        %v5131 = vunpack.c.l.b16 %v5051
        %v5132 = vunpack.c.l.b16 %v5052
        %v5133 = vunpack.c.l.b16 %v5053
        %v5134 = vunpack.c.l.b16 %v5054
        %v5135 = vunpack.c.l.b16 %v5055
        %v5136 = vunpack.c.l.b16 %v5056
        %v5137 = vpack.c.b16 %v5106, %v5105
        %v5138 = vpack.c.b16 %v5108, %v5107
        %v5139 = vpack.c.b16 %v5110, %v5109
        %v5140 = vpack.c.b16 %v5112, %v5111
        %v5141 = vpack.c.b16 %v5114, %v5113
        %v5142 = vpack.c.b16 %v5116, %v5115
        %v5143 = vpack.c.b16 %v5118, %v5117
        %v5144 = vpack.c.b16 %v5120, %v5119
        %v5145 = vpack.c.b16 %v5122, %v5121
        %v5146 = vpack.c.b16 %v5124, %v5123
        %v5147 = vpack.c.b16 %v5126, %v5125
        %v5148 = vpack.c.b16 %v5128, %v5127
        %v5149 = vpack.c.b16 %v5130, %v5129
        %v5150 = vpack.c.b16 %v5132, %v5131
        %v5151 = vpack.c.b16 %v5134, %v5133
        %v5152 = vpack.c.b16 %v5136, %v5135
        %v5185 = vunpack.c.l.b16 %v5057
        %v5186 = vunpack.c.l.b16 %v5058
        %v5187 = vunpack.c.l.b16 %v5059
        %v5188 = vunpack.c.l.b16 %v5060
        %v5189 = vunpack.c.l.b16 %v5061
        %v5190 = vunpack.c.l.b16 %v5062
        %v5191 = vunpack.c.l.b16 %v5063
        %v5192 = vunpack.c.l.b16 %v5064
        %v5193 = vunpack.c.l.b16 %v5065
        %v5194 = vunpack.c.l.b16 %v5066
        %v5195 = vunpack.c.l.b16 %v5067
        %v5196 = vunpack.c.l.b16 %v5068
        %v5197 = vunpack.c.l.b16 %v5069
        %v5198 = vunpack.c.l.b16 %v5070
        %v5199 = vunpack.c.l.b16 %v5071
        %v5200 = vunpack.c.l.b16 %v5072
        %v5201 = vpack.c.b16 %v5186, %v5185
        %v5202 = vpack.c.b16 %v5188, %v5187
        %v5203 = vpack.c.b16 %v5190, %v5189
        %v5204 = vpack.c.b16 %v5192, %v5191
        %v5205 = vpack.c.b16 %v5194, %v5193
        %v5206 = vpack.c.b16 %v5196, %v5195
        %v5207 = vpack.c.b16 %v5198, %v5197
        %v5208 = vpack.c.b16 %v5200, %v5199
        %5217 = vmatprep.subr.bf16.mxu0 0
        %5218 = vmatpush1.bf16.msra.mxu0 %v5201
        %5219 = vmatprep.subr.bf16.mxu0 0
        %5220 = vmatpush1.bf16.msra.mxu0 %v5202
        %5221 = vmatprep.subr.bf16.mxu0 0
        %5222 = vmatpush1.bf16.msra.mxu0 %v5203
        %5223 = vmatprep.subr.bf16.mxu0 0
        %5224 = vmatpush1.bf16.msra.mxu0 %v5204
        %5225 = vmatprep.subr.bf16.mxu0 0
        %5226 = vmatpush1.bf16.msra.mxu0 %v5205
        %5227 = vmatprep.subr.bf16.mxu0 0
        %5228 = vmatpush1.bf16.msra.mxu0 %v5206
        %5229 = vmatprep.subr.bf16.mxu0 0
        %5230 = vmatpush1.bf16.msra.mxu0 %v5207
        %5231 = vmatprep.subr.bf16.mxu0 0
        %5232 = vmatpush1.bf16.msra.mxu0 %v5208
        %5233 = vmatprep.subr.bf16.mxu0 0
        %5234 = vmatpush1.bf16.msra.mxu0 0
        %5235 = vmatprep.subr.bf16.mxu0 0
        %5236 = vmatpush1.bf16.msra.mxu0 0
        %5237 = vmatprep.subr.bf16.mxu0 0
        %5238 = vmatpush1.bf16.msra.mxu0 0
        %5239 = vmatprep.subr.bf16.mxu0 0
        %5240 = vmatpush1.bf16.msra.mxu0 0
        %5241 = vmatprep.subr.bf16.mxu0 0
        %5242 = vmatpush1.bf16.msra.mxu0 0
        %5243 = vmatprep.subr.bf16.mxu0 0
        %5244 = vmatpush1.bf16.msra.mxu0 0
        %5245 = vmatprep.subr.bf16.mxu0 0
        %5246 = vmatpush1.bf16.msra.mxu0 0
        %5247 = vmatprep.subr.bf16.mxu0 0
        %5248 = vmatpush1.bf16.msra.mxu0 0
        %5249 = vmatprep.mubr.bf16.mxu0 0
        %5250 = vmatmul.mubr.bf16.gmra.mrb[0].mxu0 %v5137
        %v5251 = vpop.f32.mrb[0].mxu0
        %v5252 = vadd.f32 0.0, %v5251
        %v5253 = vpop.f32.mrb[0].mxu0
        %v5254 = vpop.f32.mrb[0].mxu0
        %v5255 = vadd.f32 0.0, %v5254
        %v5256 = vpop.f32.mrb[0].mxu0
        %5257 = vmatprep.mubr.bf16.mxu0 0
        %5258 = vmatmul.mubr.bf16.gmra.mrb[0].mxu0 %v5138
        %v5259 = vpop.f32.mrb[0].mxu0
        %v5260 = vadd.f32 0.0, %v5259
        %v5261 = vpop.f32.mrb[0].mxu0
        %v5262 = vpop.f32.mrb[0].mxu0
        %v5263 = vadd.f32 0.0, %v5262
        %v5264 = vpop.f32.mrb[0].mxu0
        %5265 = vmatprep.mubr.bf16.mxu0 0
        %5266 = vmatmul.mubr.bf16.gmra.mrb[0].mxu0 %v5139
        %v5267 = vpop.f32.mrb[0].mxu0
        %v5268 = vadd.f32 0.0, %v5267
        %v5269 = vpop.f32.mrb[0].mxu0
        %v5270 = vpop.f32.mrb[0].mxu0
        %v5271 = vadd.f32 0.0, %v5270
        %v5272 = vpop.f32.mrb[0].mxu0
        %5273 = vmatprep.mubr.bf16.mxu0 0
        %5274 = vmatmul.mubr.bf16.gmra.mrb[0].mxu0 %v5140
        %v5275 = vpop.f32.mrb[0].mxu0
        %v5276 = vadd.f32 0.0, %v5275
        %v5277 = vpop.f32.mrb[0].mxu0
        %v5278 = vpop.f32.mrb[0].mxu0
        %v5279 = vadd.f32 0.0, %v5278
        %v5280 = vpop.f32.mrb[0].mxu0
        %5281 = vmatprep.mubr.bf16.mxu0 0
        %5282 = vmatmul.mubr.bf16.gmra.mrb[0].mxu0 %v5141
        %v5283 = vpop.f32.mrb[0].mxu0
        %v5284 = vadd.f32 0.0, %v5283
        %v5285 = vpop.f32.mrb[0].mxu0
        %v5286 = vpop.f32.mrb[0].mxu0
        %v5287 = vadd.f32 0.0, %v5286
        %v5288 = vpop.f32.mrb[0].mxu0
        %5289 = vmatprep.mubr.bf16.mxu0 0
        %5290 = vmatmul.mubr.bf16.gmra.mrb[0].mxu0 %v5142
        %v5291 = vpop.f32.mrb[0].mxu0
        %v5292 = vadd.f32 0.0, %v5291
        %v5293 = vpop.f32.mrb[0].mxu0
        %v5294 = vpop.f32.mrb[0].mxu0
        %v5295 = vadd.f32 0.0, %v5294
        %v5296 = vpop.f32.mrb[0].mxu0
        %5297 = vmatprep.mubr.bf16.mxu0 0
        %5298 = vmatmul.mubr.bf16.gmra.mrb[0].mxu0 %v5143
        %v5299 = vpop.f32.mrb[0].mxu0
        %v5300 = vadd.f32 0.0, %v5299
        %v5301 = vpop.f32.mrb[0].mxu0
        %v5302 = vpop.f32.mrb[0].mxu0
        %v5303 = vadd.f32 0.0, %v5302
        %v5304 = vpop.f32.mrb[0].mxu0
        %5305 = vmatprep.mubr.bf16.mxu0 0
        %5306 = vmatmul.mubr.bf16.gmra.mrb[0].mxu0 %v5144
        %v5307 = vpop.f32.mrb[0].mxu0
        %v5308 = vadd.f32 0.0, %v5307
        %v5309 = vpop.f32.mrb[0].mxu0
        %v5310 = vpop.f32.mrb[0].mxu0
        %v5311 = vadd.f32 0.0, %v5310
        %v5312 = vpop.f32.mrb[0].mxu0
        %5313 = vmatprep.mubr.bf16.mxu0 0
        %5314 = vmatmul.mubr.bf16.gmra.mrb[0].mxu0 %v5145
        %v5315 = vpop.f32.mrb[0].mxu0
        %v5316 = vadd.f32 0.0, %v5315
        %v5317 = vpop.f32.mrb[0].mxu0
        %v5318 = vpop.f32.mrb[0].mxu0
        %v5319 = vadd.f32 0.0, %v5318
        %v5320 = vpop.f32.mrb[0].mxu0
        %5321 = vmatprep.mubr.bf16.mxu0 0
        %5322 = vmatmul.mubr.bf16.gmra.mrb[0].mxu0 %v5146
        %v5323 = vpop.f32.mrb[0].mxu0
        %v5324 = vadd.f32 0.0, %v5323
        %v5325 = vpop.f32.mrb[0].mxu0
        %v5326 = vpop.f32.mrb[0].mxu0
        %v5327 = vadd.f32 0.0, %v5326
        %v5328 = vpop.f32.mrb[0].mxu0
        %5329 = vmatprep.mubr.bf16.mxu0 0
        %5330 = vmatmul.mubr.bf16.gmra.mrb[0].mxu0 %v5147
        %v5331 = vpop.f32.mrb[0].mxu0
        %v5332 = vadd.f32 0.0, %v5331
        %v5333 = vpop.f32.mrb[0].mxu0
        %v5334 = vpop.f32.mrb[0].mxu0
        %v5335 = vadd.f32 0.0, %v5334
        %v5336 = vpop.f32.mrb[0].mxu0
        %5337 = vmatprep.mubr.bf16.mxu0 0
        %5338 = vmatmul.mubr.bf16.gmra.mrb[0].mxu0 %v5148
        %v5339 = vpop.f32.mrb[0].mxu0
        %v5340 = vadd.f32 0.0, %v5339
        %v5341 = vpop.f32.mrb[0].mxu0
        %v5342 = vpop.f32.mrb[0].mxu0
        %v5343 = vadd.f32 0.0, %v5342
        %v5344 = vpop.f32.mrb[0].mxu0
        %5345 = vmatprep.mubr.bf16.mxu0 0
        %5346 = vmatmul.mubr.bf16.gmra.mrb[0].mxu0 %v5149
        %v5347 = vpop.f32.mrb[0].mxu0
        %v5348 = vadd.f32 0.0, %v5347
        %v5349 = vpop.f32.mrb[0].mxu0
        %v5350 = vpop.f32.mrb[0].mxu0
        %v5351 = vadd.f32 0.0, %v5350
        %v5352 = vpop.f32.mrb[0].mxu0
        %5353 = vmatprep.mubr.bf16.mxu0 0
        %5354 = vmatmul.mubr.bf16.gmra.mrb[0].mxu0 %v5150
        %v5355 = vpop.f32.mrb[0].mxu0
        %v5356 = vadd.f32 0.0, %v5355
        %v5357 = vpop.f32.mrb[0].mxu0
        %v5358 = vpop.f32.mrb[0].mxu0
        %v5359 = vadd.f32 0.0, %v5358
        %v5360 = vpop.f32.mrb[0].mxu0
        %5361 = vmatprep.mubr.bf16.mxu0 0
        %5362 = vmatmul.mubr.bf16.gmra.mrb[0].mxu0 %v5151
        %v5363 = vpop.f32.mrb[0].mxu0
        %v5364 = vadd.f32 0.0, %v5363
        %v5365 = vpop.f32.mrb[0].mxu0
        %v5366 = vpop.f32.mrb[0].mxu0
        %v5367 = vadd.f32 0.0, %v5366
        %v5368 = vpop.f32.mrb[0].mxu0
        %5369 = vmatprep.mubr.bf16.mxu0 0
        %5370 = vmatmul.mubr.bf16.gmra.mrb[0].mxu0 %v5152
        %v5371 = vpop.f32.mrb[0].mxu0
        %v5372 = vadd.f32 0.0, %v5371
        %v5373 = vpop.f32.mrb[0].mxu0
        %v5374 = vpop.f32.mrb[0].mxu0
        %v5375 = vadd.f32 0.0, %v5374
        %v5376 = vpop.f32.mrb[0].mxu0
        %5377 = vdwg.mxu0
        %v5378 = vadd.f32 %v5252, %v404
        %v5379 = vadd.f32 %v5255, %v405
        %v5380 = vadd.f32 %v5260, %v406
        %v5381 = vadd.f32 %v5263, %v407
        %v5382 = vadd.f32 %v5268, %v408
        %v5383 = vadd.f32 %v5271, %v409
        %v5384 = vadd.f32 %v5276, %v410
        %v5385 = vadd.f32 %v5279, %v411
        %v5386 = vadd.f32 %v5284, %v412
        %v5387 = vadd.f32 %v5287, %v413
        %v5388 = vadd.f32 %v5292, %v414
        %v5389 = vadd.f32 %v5295, %v415
        %v5390 = vadd.f32 %v5300, %v416
        %v5391 = vadd.f32 %v5303, %v417
        %v5392 = vadd.f32 %v5308, %v418
        %v5393 = vadd.f32 %v5311, %v419
        %v5394 = vadd.f32 %v5316, %v420
        %v5395 = vadd.f32 %v5319, %v421
        %v5396 = vadd.f32 %v5324, %v422
        %v5397 = vadd.f32 %v5327, %v423
        %v5398 = vadd.f32 %v5332, %v424
        %v5399 = vadd.f32 %v5335, %v425
        %v5400 = vadd.f32 %v5340, %v426
        %v5401 = vadd.f32 %v5343, %v427
        %v5402 = vadd.f32 %v5348, %v428
        %v5403 = vadd.f32 %v5351, %v429
        %v5404 = vadd.f32 %v5356, %v430
        %v5405 = vadd.f32 %v5359, %v431
        %v5406 = vadd.f32 %v5364, %v432
        %v5407 = vadd.f32 %v5367, %v433
        %v5408 = vadd.f32 %v5372, %v434
        %v5409 = vadd.f32 %v5375, %v435
        %v5410 = vmax.f32 %v5378, 0.0
        %v5411 = vmax.f32 %v5379, 0.0
        %v5412 = vmax.f32 %v5380, 0.0
        %v5413 = vmax.f32 %v5381, 0.0
        %v5414 = vmax.f32 %v5382, 0.0
        %v5415 = vmax.f32 %v5383, 0.0
        %v5416 = vmax.f32 %v5384, 0.0
        %v5417 = vmax.f32 %v5385, 0.0
        %v5418 = vmax.f32 %v5386, 0.0
        %v5419 = vmax.f32 %v5387, 0.0
        %v5420 = vmax.f32 %v5388, 0.0
        %v5421 = vmax.f32 %v5389, 0.0
        %v5422 = vmax.f32 %v5390, 0.0
        %v5423 = vmax.f32 %v5391, 0.0
        %v5424 = vmax.f32 %v5392, 0.0
        %v5425 = vmax.f32 %v5393, 0.0
        %v5426 = vmax.f32 %v5394, 0.0
        %v5427 = vmax.f32 %v5395, 0.0
        %v5428 = vmax.f32 %v5396, 0.0
        %v5429 = vmax.f32 %v5397, 0.0
        %v5430 = vmax.f32 %v5398, 0.0
        %v5431 = vmax.f32 %v5399, 0.0
        %v5432 = vmax.f32 %v5400, 0.0
        %v5433 = vmax.f32 %v5401, 0.0
        %v5434 = vmax.f32 %v5402, 0.0
        %v5435 = vmax.f32 %v5403, 0.0
        %v5436 = vmax.f32 %v5404, 0.0
        %v5437 = vmax.f32 %v5405, 0.0
        %v5438 = vmax.f32 %v5406, 0.0
        %v5439 = vmax.f32 %v5407, 0.0
        %v5440 = vmax.f32 %v5408, 0.0
        %v5441 = vmax.f32 %v5409, 0.0
        %5442 = vst [vmem:[%s371] sm:$0xff] %v5410
        %5443 = vst [vmem:[%s371 + $0x8] sm:$0xff] %v5411
        %5444 = vst [vmem:[%s371 + $0x10] sm:$0xff] %v5412
        %5445 = vst [vmem:[%s371 + $0x18] sm:$0xff] %v5413
        %5446 = vst [vmem:[%s371 + $0x20] sm:$0xff] %v5414
        %5447 = vst [vmem:[%s371 + $0x28] sm:$0xff] %v5415
        %5448 = vst [vmem:[%s371 + $0x30] sm:$0xff] %v5416
        %5449 = vst [vmem:[%s371 + $0x38] sm:$0xff] %v5417
        %5450 = vst [vmem:[%s371 + $0x40] sm:$0xff] %v5418
        %5451 = vst [vmem:[%s371 + $0x48] sm:$0xff] %v5419
        %5452 = vst [vmem:[%s371 + $0x50] sm:$0xff] %v5420
        %5453 = vst [vmem:[%s371 + $0x58] sm:$0xff] %v5421
        %5454 = vst [vmem:[%s371 + $0x60] sm:$0xff] %v5422
        %5455 = vst [vmem:[%s371 + $0x68] sm:$0xff] %v5423
        %5456 = vst [vmem:[%s371 + $0x70] sm:$0xff] %v5424
        %5457 = vst [vmem:[%s371 + $0x78] sm:$0xff] %v5425
        %5458 = vst [vmem:[%s371 + $0x80] sm:$0xff] %v5426
        %5459 = vst [vmem:[%s371 + $0x88] sm:$0xff] %v5427
        %5460 = vst [vmem:[%s371 + $0x90] sm:$0xff] %v5428
        %5461 = vst [vmem:[%s371 + $0x98] sm:$0xff] %v5429
        %5462 = vst [vmem:[%s371 + $0xa0] sm:$0xff] %v5430
        %5463 = vst [vmem:[%s371 + $0xa8] sm:$0xff] %v5431
        %5464 = vst [vmem:[%s371 + $0xb0] sm:$0xff] %v5432
        %5465 = vst [vmem:[%s371 + $0xb8] sm:$0xff] %v5433
        %5466 = vst [vmem:[%s371 + $0xc0] sm:$0xff] %v5434
        %5467 = vst [vmem:[%s371 + $0xc8] sm:$0xff] %v5435
        %5468 = vst [vmem:[%s371 + $0xd0] sm:$0xff] %v5436
        %5469 = vst [vmem:[%s371 + $0xd8] sm:$0xff] %v5437
        %5470 = vst [vmem:[%s371 + $0xe0] sm:$0xff] %v5438
        %5471 = vst [vmem:[%s371 + $0xe8] sm:$0xff] %v5439
        %5472 = vst [vmem:[%s371 + $0xf0] sm:$0xff] %v5440
        %5473 = vst [vmem:[%s371 + $0xf8] sm:$0xff] %v5441
        %s5474 = sand.u32 %s216, 1
        %s5475 = scalar_lea.sflag [#allocation6], %s5474
        %s5476 = sand.u32 %s216, 1
        %s5477 = smul.addr %s5476, 256
        %s5478 = scalar_lea.vmem [#allocation13], %s5477
        // Predicated region
        $region77: #{tpu_custom_call.1} parent=51 // pred_check
          %p5479 = pneg %p226
        $region78: #{tpu_custom_call.1} parent=51 // pred_check_branch
          %5481 = sbr.rel (%p5479) target = $region80
        $region79: #{tpu_custom_call.1} parent=51 // pred_region
          %s5482 = smul.u32 4, %s31
          %s5484 = ssub.s32 4096, 4096
          %5485 = vsyncadd %s5475, %s5484
          %s5486 = smul.addr %s5482, 8
          %s5487 = smul.addr %s30, 64
          %s5488 = sadd.s32 %s5486, %s5487
          %s5489 = smul.addr %s5488, 128
          %s5490 = scalar_lea.hbm %s9, %s5489
          %s5491 = sshll.u32 %s5478, 4
          %s5492 = int_to_ptr.vmem [resolvable:$true] %s5491
          %5497 = dma.vmem_to_hbm [thread:$0]  %s5492, 4096, %s5490, %s5475, 128, 128, 8
        $region80: #{tpu_custom_call.1} parent=51 // pred_fallthru
          _
      $region52: #{tpu_custom_call.1} parent=5 // pred_fallthru
        _
      %p5498 = scmp.le.s32.totalorder 2, %s21
      // Predicated region
      $region81: #{tpu_custom_call.1} parent=5 // pred_check
        %p5499 = pneg %p5498
      $region82: #{tpu_custom_call.1} parent=5 // pred_check_branch
        %5501 = sbr.rel (%p5499) target = $region84
      $region83: #{tpu_custom_call.1} parent=5 // pred_region
        %s5502 = ssub.s32 %s21, 2
        // Predicated region
        $region85: #{tpu_custom_call.1} parent=83 // pred_check
          %p5503 = pneg %p232
        $region86: #{tpu_custom_call.1} parent=83 // pred_check_branch
          %5505 = sbr.rel (%p5503) target = $region88
        $region87: #{tpu_custom_call.1} parent=83 // pred_region
          %s5506 = sand.u32 %s217, 1
          %s5507 = scalar_lea.sflag [#allocation6], %s5506
          %s5508 = sand.u32 %s217, 1
          %s5509 = smul.addr %s5508, 256
          %s5510 = scalar_lea.vmem [#allocation13], %s5509
          %5511 = dma.done %s5507, 4096
        $region88: #{tpu_custom_call.1} parent=83 // pred_fallthru
          _
      $region84: #{tpu_custom_call.1} parent=5 // pred_fallthru
        _
    $region6: #{tpu_custom_call.1} parent=1 // loop_footer
      %s25 = sadd.s32 1, %s21
    $region7: #{tpu_custom_call.1} parent=1 // loop_footer_branch
      %20 = sbr.rel target = $region3
    $region8: #{tpu_custom_call.1} parent=1 // loop_exit
      _
    %5512 = vsyncpa [#allocation5], 1
    %s5513 = scalar_lea.sflag [#allocation5], 1
    %5514 = vsyncpa %s5513, 1
    %5515 = vsyncpa [#allocation8], 1
    %5516 = vsyncpa [#allocation11], 1
    %5517 = vsyncpa [#allocation6], 1
    %s5518 = scalar_lea.sflag [#allocation6], 1
    %5519 = vsyncpa %s5518, 1
  %5520 = vsyncmov [#allocation3]
  %s5521 = vpop.sfrf %5520
  %p5522 = scmp.eq.s32.totalorder %s5521, 0
  %p5523 = pneg %p5522
  %5525 = shalt.err (%p5523)

</llo_original>
